<compile_context>
chip_gen: v6e
topology: v6e:2x2x1
jax: 0.10.0
libtpu: 0.0.40
codegen_flags: <defaults>
</compile_context>

<pallas_src>
import jax
import jax.numpy as jnp
from jax.experimental import pallas as pl
from jax.experimental.pallas import tpu as pltpu

LN_EPS = 1e-5


def _round_up(a, b):
    return (a + b - 1) // b * b


def _vmem_capacity_bytes():
    """Physical per-TensorCore VMEM; conservative fallback if the query fails."""
    try:
        return int(pltpu.get_tpu_info().vmem_capacity_bytes)
    except Exception:
        return 64 << 20  # v7x per-TC size; safe lower bound for v5e/v6e too


def _gelu_dtype_for_backend():
    """bf16 VPU/EUP exists on v6e/v7x; v5e and older stay in f32."""
    try:
        kind = jax.devices()[0].device_kind.lower()
    except Exception:
        return jnp.float32
    if ("v6" in kind) or ("v7" in kind):
        return jnp.bfloat16
    return jnp.float32


def _vmem_bytes(tile_rows, dim, hidden, x_itemsize, gelu_itemsize):
    """Rough per-TensorCore VMEM footprint for one pipelined row tile."""
    act_io = 2 * 2 * tile_rows * dim * x_itemsize          # x + out tiles, double-buffered
    weights = 2 * 2 * dim * hidden * 2                      # w1 + w2 (bf16), 2 buffers each
    small = 2 * (3 * dim + hidden) * 4                      # gamma/beta/b2 + b1
    live = (tile_rows * hidden * (4 + gelu_itemsize)        # fc1 f32 acc + bias/GELU copy
            + tile_rows * dim * (4 + 2 + 4))                # LN f32 + bf16 MXU operand + fc2 acc
    return act_io + weights + small + live


def _mlp_block_kernel(x_ref, gamma_ref, beta_ref, w1_ref, b1_ref, w2_ref,
                      b2_ref, o_ref):
    # ---- LayerNorm in f32 ----
    x = x_ref[...].astype(jnp.float32)
    mean = jnp.mean(x, axis=-1, keepdims=True)
    cent = x - mean
    var = jnp.mean(cent * cent, axis=-1, keepdims=True)
    xn = cent * jax.lax.rsqrt(var + LN_EPS)
    xn = xn * gamma_ref[...].astype(jnp.float32) + beta_ref[...].astype(jnp.float32)

    # ---- fc1 (bf16 operands, f32 accumulation on the MXU) ----
    h = jnp.dot(xn.astype(w1_ref.dtype), w1_ref[...],
                preferred_element_type=jnp.float32)

    # ---- bias + GELU (tanh approximation -> EUP slot, not a VALU erf poly) ----
    # The elementwise dtype (bf16 on v6e/v7x, f32 on v5e) is carried by b1's dtype.
    h = h.astype(b1_ref.dtype) + b1_ref[...]
    h = jax.nn.gelu(h, approximate=True)

    # ---- fc2 + residual + bias ----
    y = jnp.dot(h.astype(w2_ref.dtype), w2_ref[...],
                preferred_element_type=jnp.float32)
    o_ref[...] = (x + y + b2_ref[...].astype(jnp.float32)).astype(o_ref.dtype)


def mlp_block_forward(xtuple, params, *, tile_rows=1024, gelu_dtype=None):
    """Pallas implementation of MlpBlock.forward (out_dim=None, drop=0, drop_path=0)."""
    x, nx, ny = xtuple
    B, N, dim = x.shape
    gamma, beta, w1, b1, w2, b2 = params
    hidden = w1.shape[1]

    if gelu_dtype is None:
        gelu_dtype = _gelu_dtype_for_backend()

    # MXU operands in bf16 (f32 accumulation in-kernel); LN params / fc2 bias in f32.
    w1 = w1.astype(jnp.bfloat16)
    w2 = w2.astype(jnp.bfloat16)
    gamma = gamma.reshape(1, dim).astype(jnp.float32)
    beta = beta.reshape(1, dim).astype(jnp.float32)
    b1 = b1.reshape(1, hidden).astype(gelu_dtype)   # consumed at GELU precision
    b2 = b2.reshape(1, dim).astype(jnp.float32)

    rows = B * N
    x2d = x.reshape(rows, dim)

    # Per-generation VMEM budget: ~78% of physical per-TC VMEM (~50 MiB on v7x,
    # ~100 MiB on v5e/v6e).  Shrink the row tile until the footprint fits.
    budget = max(int(0.78 * _vmem_capacity_bytes()), 16 << 20)
    gelu_itemsize = jnp.dtype(gelu_dtype).itemsize
    x_itemsize = x.dtype.itemsize

    tile_rows = max(8, _round_up(min(tile_rows, rows), 8))
    while (tile_rows > 8 and
           _vmem_bytes(tile_rows, dim, hidden, x_itemsize, gelu_itemsize) > budget):
        tile_rows = max(8, _round_up(tile_rows // 2, 8))
    # TODO(synk): if w1+w2 alone exceed the VMEM budget (very large dim*hidden),
    # fall back to a hidden-tiled reduction grid instead of resident weights.

    prows = _round_up(rows, tile_rows)
    if prows != rows:
        x2d = jnp.pad(x2d, ((0, prows - rows), (0, 0)))

    grid = (prows // tile_rows,)

    out2d = pl.pallas_call(
        _mlp_block_kernel,
        out_shape=jax.ShapeDtypeStruct((prows, dim), x.dtype),
        grid_spec=pltpu.PrefetchScalarGridSpec(
            num_scalar_prefetch=0,
            grid=grid,
            in_specs=[
                pl.BlockSpec((tile_rows, dim), lambda i: (i, 0)),   # x row tile
                pl.BlockSpec((1, dim), lambda i: (0, 0)),           # LN gamma (resident)
                pl.BlockSpec((1, dim), lambda i: (0, 0)),           # LN beta (resident)
                pl.BlockSpec((dim, hidden), lambda i: (0, 0)),      # full w1 (resident)
                pl.BlockSpec((1, hidden), lambda i: (0, 0)),        # b1 (resident)
                pl.BlockSpec((hidden, dim), lambda i: (0, 0)),      # full w2 (resident)
                pl.BlockSpec((1, dim), lambda i: (0, 0)),           # b2 (resident)
            ],
            out_specs=pl.BlockSpec((tile_rows, dim), lambda i: (i, 0)),
        ),
        compiler_params=pltpu.CompilerParams(
            dimension_semantics=("parallel",),
            vmem_limit_bytes=int(budget)),
    )(x2d, gamma, beta, w1, b1, w2, b2)

    if prows != rows:
        out2d = out2d[:rows]
    return (out2d.reshape(B, N, dim), nx, ny)


def init_params(key, dim, mlp_ratio=4.0, dtype=jnp.float32):
    """Deterministic parameter init matching MlpBlock(dim) shapes."""
    hidden = int(dim * mlp_ratio)
    k1, k2, k3, k4 = jax.random.split(key, 4)
    gamma = jnp.ones((1, dim), dtype)               # LayerNorm weight
    beta = jnp.zeros((1, dim), dtype)               # LayerNorm bias
    # nn.Linear default init ~ U(-1/sqrt(fan_in), 1/sqrt(fan_in)); stored [in, out]
    w1 = jax.random.uniform(k1, (dim, hidden), dtype,
                            -1.0 / dim ** 0.5, 1.0 / dim ** 0.5)
    b1 = jax.random.uniform(k2, (1, hidden), dtype,
                            -1.0 / dim ** 0.5, 1.0 / dim ** 0.5)
    w2 = jax.random.uniform(k3, (hidden, dim), dtype,
                            -1.0 / hidden ** 0.5, 1.0 / hidden ** 0.5)
    b2 = jax.random.uniform(k4, (1, dim), dtype,
                            -1.0 / hidden ** 0.5, 1.0 / hidden ** 0.5)
    return gamma, beta, w1, b1, w2, b2


def _reference(x, params):
    """Pure-JAX MlpBlock.forward reference (exact-erf GELU, f32)."""
    gamma, beta, w1, b1, w2, b2 = params
    mean = jnp.mean(x, axis=-1, keepdims=True)
    var = jnp.mean((x - mean) ** 2, axis=-1, keepdims=True)
    xn = (x - mean) / jnp.sqrt(var + LN_EPS) * gamma[0] + beta[0]
    h = jax.nn.gelu(xn @ w1 + b1[0], approximate=False)
    return x + (h @ w2 + b2[0])


if __name__ == "__main__":
    key = jax.random.PRNGKey(0)
    kx, kp = jax.random.split(key)

    # Lane-dense demo shape: dim is a multiple of 128, tokens laid out as (B, N, dim).
    B, dim = 2, 128
    nx, ny = 16, 16
    N = nx * ny                                         # 256 tokens
    x = jax.random.normal(kx, (B, N, dim), jnp.float32)
    params = init_params(kp, dim, mlp_ratio=4.0)        # hidden = 512

    out, onx, ony = mlp_block_forward((x, nx, ny), params)
    out = jax.block_until_ready(out)

    ref = _reference(x, params)
    assert out.shape == x.shape and onx == nx and ony == ny
    # bf16 MXU operands + tanh-approximate GELU -> looser tolerance than pure f32/erf.
    assert jnp.max(jnp.abs(out - ref)) < 5e-2, "mismatch vs reference"

    print("KERNEL_OK")
</pallas_src>

<mosaic_0001>
module attributes {stable_mosaic.version = 11 : i64} {
  func.func @_mlp_block_kernel(%arg0: i32, %arg1: memref<512x128xf32, #tpu.memory_space<vmem>>, %arg2: memref<1x128xf32, #tpu.memory_space<vmem>>, %arg3: memref<1x128xf32, #tpu.memory_space<vmem>>, %arg4: memref<128x512xbf16, #tpu.memory_space<vmem>>, %arg5: memref<1x512xf32, #tpu.memory_space<vmem>>, %arg6: memref<512x128xbf16, #tpu.memory_space<vmem>>, %arg7: memref<1x128xf32, #tpu.memory_space<vmem>>, %arg8: memref<512x128xf32, #tpu.memory_space<vmem>>) attributes {dimension_semantics = [#tpu.dimension_semantics<parallel>], iteration_bounds = array<i64: 1>, scalar_prefetch = 0 : i64, scratch_operands = 0 : i64, tpu.core_type = #tpu.core_type<tc>, window_params = [{transform_indices = @transform_0, window_bounds = array<i64: 512, 128>}, {pipeline_mode = #tpu.pipeline_mode<synchronous>, transform_indices = @transform_1, window_bounds = array<i64: 1, 128>}, {pipeline_mode = #tpu.pipeline_mode<synchronous>, transform_indices = @transform_2, window_bounds = array<i64: 1, 128>}, {pipeline_mode = #tpu.pipeline_mode<synchronous>, transform_indices = @transform_3, window_bounds = array<i64: 128, 512>}, {pipeline_mode = #tpu.pipeline_mode<synchronous>, transform_indices = @transform_4, window_bounds = array<i64: 1, 512>}, {pipeline_mode = #tpu.pipeline_mode<synchronous>, transform_indices = @transform_5, window_bounds = array<i64: 512, 128>}, {pipeline_mode = #tpu.pipeline_mode<synchronous>, transform_indices = @transform_6, window_bounds = array<i64: 1, 128>}, {transform_indices = @transform_7, window_bounds = array<i64: 512, 128>}]} {
    %c0 = arith.constant 0 : index
    %c0_0 = arith.constant 0 : index
    %0 = vector.load %arg1[%c0, %c0_0] : memref<512x128xf32, #tpu.memory_space<vmem>>, vector<512x128xf32>
    %cst = arith.constant dense<0.000000e+00> : vector<512xf32>
    %1 = vector.multi_reduction <add>, %0, %cst [1] : vector<512x128xf32> to vector<512xf32>
    %2 = vector.shape_cast %1 : vector<512xf32> to vector<512x1xf32>
    %cst_1 = arith.constant 1.280000e+02 : f32
    %3 = vector.broadcast %cst_1 : f32 to vector<512x1xf32>
    %4 = arith.divf %2, %3 : vector<512x1xf32>
    %5 = vector.broadcast %4 : vector<512x1xf32> to vector<512x128xf32>
    %6 = arith.subf %0, %5 : vector<512x128xf32>
    %7 = arith.mulf %6, %6 : vector<512x128xf32>
    %cst_2 = arith.constant dense<0.000000e+00> : vector<512xf32>
    %8 = vector.multi_reduction <add>, %7, %cst_2 [1] : vector<512x128xf32> to vector<512xf32>
    %9 = vector.shape_cast %8 : vector<512xf32> to vector<512x1xf32>
    %cst_3 = arith.constant 1.280000e+02 : f32
    %10 = vector.broadcast %cst_3 : f32 to vector<512x1xf32>
    %11 = arith.divf %9, %10 : vector<512x1xf32>
    %cst_4 = arith.constant 9.99999974E-6 : f32
    %12 = vector.broadcast %cst_4 : f32 to vector<512x1xf32>
    %13 = arith.addf %11, %12 : vector<512x1xf32>
    %14 = math.rsqrt %13 : vector<512x1xf32>
    %15 = vector.broadcast %14 : vector<512x1xf32> to vector<512x128xf32>
    %16 = arith.mulf %6, %15 : vector<512x128xf32>
    %c0_5 = arith.constant 0 : index
    %c0_6 = arith.constant 0 : index
    %17 = vector.load %arg2[%c0_5, %c0_6] : memref<1x128xf32, #tpu.memory_space<vmem>>, vector<1x128xf32>
    %18 = vector.broadcast %17 : vector<1x128xf32> to vector<512x128xf32>
    %19 = arith.mulf %16, %18 : vector<512x128xf32>
    %c0_7 = arith.constant 0 : index
    %c0_8 = arith.constant 0 : index
    %20 = vector.load %arg3[%c0_7, %c0_8] : memref<1x128xf32, #tpu.memory_space<vmem>>, vector<1x128xf32>
    %21 = vector.broadcast %20 : vector<1x128xf32> to vector<512x128xf32>
    %22 = arith.addf %19, %21 : vector<512x128xf32>
    %23 = arith.truncf %22 : vector<512x128xf32> to vector<512x128xbf16>
    %c0_9 = arith.constant 0 : index
    %c0_10 = arith.constant 0 : index
    %24 = vector.load %arg4[%c0_9, %c0_10] : memref<128x512xbf16, #tpu.memory_space<vmem>>, vector<128x512xbf16>
    %cst_11 = arith.constant dense<0.000000e+00> : vector<512x512xf32>
    %25 = tpu.matmul %23, %24, %cst_11 {dimension_numbers = #tpu.dot_dimension_numbers<[1], [0], [0], [1], [0, 0, 1, 1], [], []>} : vector<512x128xbf16>, vector<128x512xbf16>, vector<512x512xf32> -> vector<512x512xf32>
    %c0_12 = arith.constant 0 : index
    %c0_13 = arith.constant 0 : index
    %26 = vector.load %arg5[%c0_12, %c0_13] : memref<1x512xf32, #tpu.memory_space<vmem>>, vector<1x512xf32>
    %27 = vector.broadcast %26 : vector<1x512xf32> to vector<512x512xf32>
    %28 = arith.addf %25, %27 : vector<512x512xf32>
    %29 = arith.mulf %28, %28 : vector<512x512xf32>
    %30 = arith.mulf %28, %29 : vector<512x512xf32>
    %cst_14 = arith.constant 4.471500e-02 : f32
    %31 = vector.broadcast %cst_14 : f32 to vector<512x512xf32>
    %32 = arith.mulf %31, %30 : vector<512x512xf32>
    %33 = arith.addf %28, %32 : vector<512x512xf32>
    %cst_15 = arith.constant 0.797884583 : f32
    %34 = vector.broadcast %cst_15 : f32 to vector<512x512xf32>
    %35 = arith.mulf %34, %33 : vector<512x512xf32>
    %36 = math.tanh %35 : vector<512x512xf32>
    %cst_16 = arith.constant 1.000000e+00 : f32
    %37 = vector.broadcast %cst_16 : f32 to vector<512x512xf32>
    %38 = arith.addf %37, %36 : vector<512x512xf32>
    %cst_17 = arith.constant 5.000000e-01 : f32
    %39 = vector.broadcast %cst_17 : f32 to vector<512x512xf32>
    %40 = arith.mulf %39, %38 : vector<512x512xf32>
    %41 = arith.mulf %28, %40 : vector<512x512xf32>
    %42 = arith.truncf %41 : vector<512x512xf32> to vector<512x512xbf16>
    %c0_18 = arith.constant 0 : index
    %c0_19 = arith.constant 0 : index
    %43 = vector.load %arg6[%c0_18, %c0_19] : memref<512x128xbf16, #tpu.memory_space<vmem>>, vector<512x128xbf16>
    %cst_20 = arith.constant dense<0.000000e+00> : vector<512x128xf32>
    %44 = tpu.matmul %42, %43, %cst_20 {dimension_numbers = #tpu.dot_dimension_numbers<[1], [0], [0], [1], [0, 0, 1, 1], [], []>} : vector<512x512xbf16>, vector<512x128xbf16>, vector<512x128xf32> -> vector<512x128xf32>
    %45 = arith.addf %0, %44 : vector<512x128xf32>
    %c0_21 = arith.constant 0 : index
    %c0_22 = arith.constant 0 : index
    %46 = vector.load %arg7[%c0_21, %c0_22] : memref<1x128xf32, #tpu.memory_space<vmem>>, vector<1x128xf32>
    %47 = vector.broadcast %46 : vector<1x128xf32> to vector<512x128xf32>
    %48 = arith.addf %45, %47 : vector<512x128xf32>
    %c0_23 = arith.constant 0 : index
    %c0_24 = arith.constant 0 : index
    %49 = vector.load %arg8[%c0_23, %c0_24] : memref<512x128xf32, #tpu.memory_space<vmem>>, vector<512x128xf32>
    tpu.vector_store %arg8[%c0_23, %c0_24], %48 {strides = array<i32>} : memref<512x128xf32, #tpu.memory_space<vmem>>, vector<512x128xf32>,
    return
  }
  func.func @transform_0(%arg0: i32) -> (i32, i32) {
    %c0_i32 = arith.constant 0 : i32
    %c0_i32_0 = arith.constant 0 : i32
    return %arg0, %c0_i32 : i32, i32
  }
  func.func @transform_1(%arg0: i32) -> (i32, i32) {
    %c0_i32 = arith.constant 0 : i32
    %c0_i32_0 = arith.constant 0 : i32
    %c0_i32_1 = arith.constant 0 : i32
    return %c0_i32, %c0_i32_0 : i32, i32
  }
  func.func @transform_2(%arg0: i32) -> (i32, i32) {
    %c0_i32 = arith.constant 0 : i32
    %c0_i32_0 = arith.constant 0 : i32
    %c0_i32_1 = arith.constant 0 : i32
    return %c0_i32, %c0_i32_0 : i32, i32
  }
  func.func @transform_3(%arg0: i32) -> (i32, i32) {
    %c0_i32 = arith.constant 0 : i32
    %c0_i32_0 = arith.constant 0 : i32
    %c0_i32_1 = arith.constant 0 : i32
    return %c0_i32, %c0_i32_0 : i32, i32
  }
  func.func @transform_4(%arg0: i32) -> (i32, i32) {
    %c0_i32 = arith.constant 0 : i32
    %c0_i32_0 = arith.constant 0 : i32
    %c0_i32_1 = arith.constant 0 : i32
    return %c0_i32, %c0_i32_0 : i32, i32
  }
  func.func @transform_5(%arg0: i32) -> (i32, i32) {
    %c0_i32 = arith.constant 0 : i32
    %c0_i32_0 = arith.constant 0 : i32
    %c0_i32_1 = arith.constant 0 : i32
    return %c0_i32, %c0_i32_0 : i32, i32
  }
  func.func @transform_6(%arg0: i32) -> (i32, i32) {
    %c0_i32 = arith.constant 0 : i32
    %c0_i32_0 = arith.constant 0 : i32
    %c0_i32_1 = arith.constant 0 : i32
    return %c0_i32, %c0_i32_0 : i32, i32
  }
  func.func @transform_7(%arg0: i32) -> (i32, i32) {
    %c0_i32 = arith.constant 0 : i32
    %c0_i32_0 = arith.constant 0 : i32
    return %arg0, %c0_i32 : i32, i32
  }
}

</mosaic_0001>

<llo_original>
// kernel: tpu_custom_call.1
$region0: #{tpu_custom_call.1}
  #allocation0 [shape = 'u32[]', space=smem, size = 0x4, offset = 0x4, fixed_abs, tag = 'smem constant byte address 0x4 - core index']
  #allocation1 [shape = 'u32[144,128]{1,0:T(1,128)}', space=vmem, size = 0x12000, scoped, tag = 'internal scratch']
  %s0 = inlined_call_operand.hbm [shape: f32[512,128], index: 0, kind: input, shape index: {}]
  %s1 = inlined_call_operand.vmem [shape: f32[1,128], index: 1, kind: input, shape index: {}]
  %s2 = inlined_call_operand.vmem [shape: f32[1,128], index: 2, kind: input, shape index: {}]
  %s3 = inlined_call_operand.hbm [shape: bf16[128,512], index: 3, kind: input, shape index: {}]
  %s4 = inlined_call_operand.vmem [shape: f32[1,512], index: 4, kind: input, shape index: {}]
  %s5 = inlined_call_operand.hbm [shape: bf16[512,128], index: 5, kind: input, shape index: {}]
  %s6 = inlined_call_operand.vmem [shape: f32[1,128], index: 6, kind: input, shape index: {}]
  %s7 = inlined_call_operand.hbm [shape: f32[512,128], index: 7, kind: output, shape index: {}]
  %s8 = sld [smem:[#allocation0]]
  $region50: #{tpu_custom_call.1} parent=0
    _
  %s10 = ssub.s32 1, %s8
  %s11 = scalar_select 0, %s10, %s8
  $region1: #{tpu_custom_call.1} parent=0
    #allocation2 [shape = 'u8[262144]{0}', space=vmem, size = 0x40000, scoped, tag = 'input window, operand 0, single buffered']
    #allocation3 [shape = 's32[1]{0}', space=sflag, size = 0x4, scoped, tag = 'scoped memory for tpu_custom_call.1']
    #allocation4 [shape = 's32[1]{0}', space=sflag, size = 0x4, scoped, tag = 'scoped memory for tpu_custom_call.1']
    #allocation5 [shape = 'u8[131072]{0}', space=vmem, size = 0x20000, scoped, tag = 'input window, operand 3, single buffered']
    #allocation6 [shape = 's32[1]{0}', space=sflag, size = 0x4, scoped, tag = 'scoped memory for tpu_custom_call.1']
    #allocation7 [shape = 'u8[131072]{0}', space=vmem, size = 0x20000, scoped, tag = 'input window, operand 5, single buffered']
    #allocation8 [shape = 'u8[262144]{0}', space=vmem, size = 0x40000, scoped, tag = 'output window, operand 0, single buffered']
    %12 = vsyncpa [#allocation3], 0
    %13 = vsyncpa [#allocation6], 0
    %14 = vsyncpa [#allocation4], 0
    // Predicated region
    $region2: #{tpu_custom_call.1} parent=1 // pred_check
      _
    $region3: #{tpu_custom_call.1} parent=1 // pred_check_branch
      %16 = sbr.rel (0) target = $region5
    $region4: #{tpu_custom_call.1} parent=1 // pred_region
      %s18 = ssub.s32 8192, 8192
      %19 = vsyncadd [#allocation3], %s18
      %s20 = sshll.u32 [#allocation2], 4
      %s21 = int_to_ptr.vmem [resolvable:$true] %s20
      %26 = dma.hbm_to_vmem [thread:$0]  %s0, 8192, %s21, [#allocation3], 128, 128, 8
    $region5: #{tpu_custom_call.1} parent=1 // pred_fallthru
      _
    // Predicated region
    $region6: #{tpu_custom_call.1} parent=1 // pred_check
      _
    $region7: #{tpu_custom_call.1} parent=1 // pred_check_branch
      %28 = sbr.rel (0) target = $region9
    $region8: #{tpu_custom_call.1} parent=1 // pred_region
      _
    $region9: #{tpu_custom_call.1} parent=1 // pred_fallthru
      _
    // Predicated region
    $region10: #{tpu_custom_call.1} parent=1 // pred_check
      _
    $region11: #{tpu_custom_call.1} parent=1 // pred_check_branch
      %30 = sbr.rel (0) target = $region13
    $region12: #{tpu_custom_call.1} parent=1 // pred_region
      _
    $region13: #{tpu_custom_call.1} parent=1 // pred_fallthru
      _
    // Predicated region
    $region14: #{tpu_custom_call.1} parent=1 // pred_check
      _
    $region15: #{tpu_custom_call.1} parent=1 // pred_check_branch
      %32 = sbr.rel (0) target = $region17
    $region16: #{tpu_custom_call.1} parent=1 // pred_region
      %s34 = ssub.s32 4096, 4096
      %35 = vsyncadd [#allocation6], %s34
      %s36 = sshll.u32 [#allocation5], 4
      %s37 = int_to_ptr.vmem [resolvable:$true] %s36
      %42 = dma.hbm_to_vmem [thread:$0]  %s3, 4096, %s37, [#allocation6], 256, 256, 16
    $region17: #{tpu_custom_call.1} parent=1 // pred_fallthru
      _
    // Predicated region
    $region18: #{tpu_custom_call.1} parent=1 // pred_check
      _
    $region19: #{tpu_custom_call.1} parent=1 // pred_check_branch
      %44 = sbr.rel (0) target = $region21
    $region20: #{tpu_custom_call.1} parent=1 // pred_region
      _
    $region21: #{tpu_custom_call.1} parent=1 // pred_fallthru
      _
    // Predicated region
    $region22: #{tpu_custom_call.1} parent=1 // pred_check
      _
    $region23: #{tpu_custom_call.1} parent=1 // pred_check_branch
      %46 = sbr.rel (0) target = $region25
    $region24: #{tpu_custom_call.1} parent=1 // pred_region
      %s48 = ssub.s32 4096, 4096
      %49 = vsyncadd [#allocation6], %s48
      %s50 = sshll.u32 [#allocation7], 4
      %s51 = int_to_ptr.vmem [resolvable:$true] %s50
      %56 = dma.hbm_to_vmem [thread:$0]  %s5, 4096, %s51, [#allocation6], 64, 64, 4
    $region25: #{tpu_custom_call.1} parent=1 // pred_fallthru
      _
    // Predicated region
    $region26: #{tpu_custom_call.1} parent=1 // pred_check
      _
    $region27: #{tpu_custom_call.1} parent=1 // pred_check_branch
      %58 = sbr.rel (0) target = $region29
    $region28: #{tpu_custom_call.1} parent=1 // pred_region
      _
    $region29: #{tpu_custom_call.1} parent=1 // pred_fallthru
      _
    // Predicated region
    $region30: #{tpu_custom_call.1} parent=1 // pred_check
      _
    $region31: #{tpu_custom_call.1} parent=1 // pred_check_branch
      %60 = sbr.rel (0) target = $region33
    $region32: #{tpu_custom_call.1} parent=1 // pred_region
      %61 = dma.done [#allocation3], 8192
    $region33: #{tpu_custom_call.1} parent=1 // pred_fallthru
      _
    // Predicated region
    $region34: #{tpu_custom_call.1} parent=1 // pred_check
      _
    $region35: #{tpu_custom_call.1} parent=1 // pred_check_branch
      %63 = sbr.rel (0) target = $region37
    $region36: #{tpu_custom_call.1} parent=1 // pred_region
      %64 = dma.done [#allocation6], 4096
    $region37: #{tpu_custom_call.1} parent=1 // pred_fallthru
      _
    // Predicated region
    $region38: #{tpu_custom_call.1} parent=1 // pred_check
      _
    $region39: #{tpu_custom_call.1} parent=1 // pred_check_branch
      %66 = sbr.rel (0) target = $region41
    $region40: #{tpu_custom_call.1} parent=1 // pred_region
      %67 = dma.done [#allocation6], 4096
    $region41: #{tpu_custom_call.1} parent=1 // pred_fallthru
      _
    %v69 = vld [vmem:[#allocation2] sm:$0xff]
    %v70 = vld [vmem:[#allocation2 + $0x8] sm:$0xff]
    %v71 = vld [vmem:[#allocation2 + $0x10] sm:$0xff]
    %v72 = vld [vmem:[#allocation2 + $0x18] sm:$0xff]
    %v73 = vld [vmem:[#allocation2 + $0x20] sm:$0xff]
    %v74 = vld [vmem:[#allocation2 + $0x28] sm:$0xff]
    %v75 = vld [vmem:[#allocation2 + $0x30] sm:$0xff]
    %v76 = vld [vmem:[#allocation2 + $0x38] sm:$0xff]
    %v77 = vld [vmem:[#allocation2 + $0x40] sm:$0xff]
    %v78 = vld [vmem:[#allocation2 + $0x48] sm:$0xff]
    %v79 = vld [vmem:[#allocation2 + $0x50] sm:$0xff]
    %v80 = vld [vmem:[#allocation2 + $0x58] sm:$0xff]
    %v81 = vld [vmem:[#allocation2 + $0x60] sm:$0xff]
    %v82 = vld [vmem:[#allocation2 + $0x68] sm:$0xff]
    %v83 = vld [vmem:[#allocation2 + $0x70] sm:$0xff]
    %v84 = vld [vmem:[#allocation2 + $0x78] sm:$0xff]
    %v85 = vld [vmem:[#allocation2 + $0x80] sm:$0xff]
    %v86 = vld [vmem:[#allocation2 + $0x88] sm:$0xff]
    %v87 = vld [vmem:[#allocation2 + $0x90] sm:$0xff]
    %v88 = vld [vmem:[#allocation2 + $0x98] sm:$0xff]
    %v89 = vld [vmem:[#allocation2 + $0xa0] sm:$0xff]
    %v90 = vld [vmem:[#allocation2 + $0xa8] sm:$0xff]
    %v91 = vld [vmem:[#allocation2 + $0xb0] sm:$0xff]
    %v92 = vld [vmem:[#allocation2 + $0xb8] sm:$0xff]
    %v93 = vld [vmem:[#allocation2 + $0xc0] sm:$0xff]
    %v94 = vld [vmem:[#allocation2 + $0xc8] sm:$0xff]
    %v95 = vld [vmem:[#allocation2 + $0xd0] sm:$0xff]
    %v96 = vld [vmem:[#allocation2 + $0xd8] sm:$0xff]
    %v97 = vld [vmem:[#allocation2 + $0xe0] sm:$0xff]
    %v98 = vld [vmem:[#allocation2 + $0xe8] sm:$0xff]
    %v99 = vld [vmem:[#allocation2 + $0xf0] sm:$0xff]
    %v100 = vld [vmem:[#allocation2 + $0xf8] sm:$0xff]
    %v101 = vld [vmem:[#allocation2 + $0x100] sm:$0xff]
    %v102 = vld [vmem:[#allocation2 + $0x108] sm:$0xff]
    %v103 = vld [vmem:[#allocation2 + $0x110] sm:$0xff]
    %v104 = vld [vmem:[#allocation2 + $0x118] sm:$0xff]
    %v105 = vld [vmem:[#allocation2 + $0x120] sm:$0xff]
    %v106 = vld [vmem:[#allocation2 + $0x128] sm:$0xff]
    %v107 = vld [vmem:[#allocation2 + $0x130] sm:$0xff]
    %v108 = vld [vmem:[#allocation2 + $0x138] sm:$0xff]
    %v109 = vld [vmem:[#allocation2 + $0x140] sm:$0xff]
    %v110 = vld [vmem:[#allocation2 + $0x148] sm:$0xff]
    %v111 = vld [vmem:[#allocation2 + $0x150] sm:$0xff]
    %v112 = vld [vmem:[#allocation2 + $0x158] sm:$0xff]
    %v113 = vld [vmem:[#allocation2 + $0x160] sm:$0xff]
    %v114 = vld [vmem:[#allocation2 + $0x168] sm:$0xff]
    %v115 = vld [vmem:[#allocation2 + $0x170] sm:$0xff]
    %v116 = vld [vmem:[#allocation2 + $0x178] sm:$0xff]
    %v117 = vld [vmem:[#allocation2 + $0x180] sm:$0xff]
    %v118 = vld [vmem:[#allocation2 + $0x188] sm:$0xff]
    %v119 = vld [vmem:[#allocation2 + $0x190] sm:$0xff]
    %v120 = vld [vmem:[#allocation2 + $0x198] sm:$0xff]
    %v121 = vld [vmem:[#allocation2 + $0x1a0] sm:$0xff]
    %v122 = vld [vmem:[#allocation2 + $0x1a8] sm:$0xff]
    %v123 = vld [vmem:[#allocation2 + $0x1b0] sm:$0xff]
    %v124 = vld [vmem:[#allocation2 + $0x1b8] sm:$0xff]
    %v125 = vld [vmem:[#allocation2 + $0x1c0] sm:$0xff]
    %v126 = vld [vmem:[#allocation2 + $0x1c8] sm:$0xff]
    %v127 = vld [vmem:[#allocation2 + $0x1d0] sm:$0xff]
    %v128 = vld [vmem:[#allocation2 + $0x1d8] sm:$0xff]
    %v129 = vld [vmem:[#allocation2 + $0x1e0] sm:$0xff]
    %v130 = vld [vmem:[#allocation2 + $0x1e8] sm:$0xff]
    %v131 = vld [vmem:[#allocation2 + $0x1f0] sm:$0xff]
    %v132 = vld [vmem:[#allocation2 + $0x1f8] sm:$0xff]
    %133 = vadd.xlane.f32.xlu0 %v69
    %v134 = vpop.xlane.xlu0 %133
    %135 = vadd.xlane.f32.xlu0 %v70
    %v136 = vpop.xlane.xlu0 %135
    %137 = vadd.xlane.f32.xlu0 %v71
    %v138 = vpop.xlane.xlu0 %137
    %139 = vadd.xlane.f32.xlu0 %v72
    %v140 = vpop.xlane.xlu0 %139
    %141 = vadd.xlane.f32.xlu0 %v73
    %v142 = vpop.xlane.xlu0 %141
    %143 = vadd.xlane.f32.xlu0 %v74
    %v144 = vpop.xlane.xlu0 %143
    %145 = vadd.xlane.f32.xlu0 %v75
    %v146 = vpop.xlane.xlu0 %145
    %147 = vadd.xlane.f32.xlu0 %v76
    %v148 = vpop.xlane.xlu0 %147
    %149 = vadd.xlane.f32.xlu0 %v77
    %v150 = vpop.xlane.xlu0 %149
    %151 = vadd.xlane.f32.xlu0 %v78
    %v152 = vpop.xlane.xlu0 %151
    %153 = vadd.xlane.f32.xlu0 %v79
    %v154 = vpop.xlane.xlu0 %153
    %155 = vadd.xlane.f32.xlu0 %v80
    %v156 = vpop.xlane.xlu0 %155
    %157 = vadd.xlane.f32.xlu0 %v81
    %v158 = vpop.xlane.xlu0 %157
    %159 = vadd.xlane.f32.xlu0 %v82
    %v160 = vpop.xlane.xlu0 %159
    %161 = vadd.xlane.f32.xlu0 %v83
    %v162 = vpop.xlane.xlu0 %161
    %163 = vadd.xlane.f32.xlu0 %v84
    %v164 = vpop.xlane.xlu0 %163
    %165 = vadd.xlane.f32.xlu0 %v85
    %v166 = vpop.xlane.xlu0 %165
    %167 = vadd.xlane.f32.xlu0 %v86
    %v168 = vpop.xlane.xlu0 %167
    %169 = vadd.xlane.f32.xlu0 %v87
    %v170 = vpop.xlane.xlu0 %169
    %171 = vadd.xlane.f32.xlu0 %v88
    %v172 = vpop.xlane.xlu0 %171
    %173 = vadd.xlane.f32.xlu0 %v89
    %v174 = vpop.xlane.xlu0 %173
    %175 = vadd.xlane.f32.xlu0 %v90
    %v176 = vpop.xlane.xlu0 %175
    %177 = vadd.xlane.f32.xlu0 %v91
    %v178 = vpop.xlane.xlu0 %177
    %179 = vadd.xlane.f32.xlu0 %v92
    %v180 = vpop.xlane.xlu0 %179
    %181 = vadd.xlane.f32.xlu0 %v93
    %v182 = vpop.xlane.xlu0 %181
    %183 = vadd.xlane.f32.xlu0 %v94
    %v184 = vpop.xlane.xlu0 %183
    %185 = vadd.xlane.f32.xlu0 %v95
    %v186 = vpop.xlane.xlu0 %185
    %187 = vadd.xlane.f32.xlu0 %v96
    %v188 = vpop.xlane.xlu0 %187
    %189 = vadd.xlane.f32.xlu0 %v97
    %v190 = vpop.xlane.xlu0 %189
    %191 = vadd.xlane.f32.xlu0 %v98
    %v192 = vpop.xlane.xlu0 %191
    %193 = vadd.xlane.f32.xlu0 %v99
    %v194 = vpop.xlane.xlu0 %193
    %195 = vadd.xlane.f32.xlu0 %v100
    %v196 = vpop.xlane.xlu0 %195
    %197 = vadd.xlane.f32.xlu0 %v101
    %v198 = vpop.xlane.xlu0 %197
    %199 = vadd.xlane.f32.xlu0 %v102
    %v200 = vpop.xlane.xlu0 %199
    %201 = vadd.xlane.f32.xlu0 %v103
    %v202 = vpop.xlane.xlu0 %201
    %203 = vadd.xlane.f32.xlu0 %v104
    %v204 = vpop.xlane.xlu0 %203
    %205 = vadd.xlane.f32.xlu0 %v105
    %v206 = vpop.xlane.xlu0 %205
    %207 = vadd.xlane.f32.xlu0 %v106
    %v208 = vpop.xlane.xlu0 %207
    %209 = vadd.xlane.f32.xlu0 %v107
    %v210 = vpop.xlane.xlu0 %209
    %211 = vadd.xlane.f32.xlu0 %v108
    %v212 = vpop.xlane.xlu0 %211
    %213 = vadd.xlane.f32.xlu0 %v109
    %v214 = vpop.xlane.xlu0 %213
    %215 = vadd.xlane.f32.xlu0 %v110
    %v216 = vpop.xlane.xlu0 %215
    %217 = vadd.xlane.f32.xlu0 %v111
    %v218 = vpop.xlane.xlu0 %217
    %219 = vadd.xlane.f32.xlu0 %v112
    %v220 = vpop.xlane.xlu0 %219
    %221 = vadd.xlane.f32.xlu0 %v113
    %v222 = vpop.xlane.xlu0 %221
    %223 = vadd.xlane.f32.xlu0 %v114
    %v224 = vpop.xlane.xlu0 %223
    %225 = vadd.xlane.f32.xlu0 %v115
    %v226 = vpop.xlane.xlu0 %225
    %227 = vadd.xlane.f32.xlu0 %v116
    %v228 = vpop.xlane.xlu0 %227
    %229 = vadd.xlane.f32.xlu0 %v117
    %v230 = vpop.xlane.xlu0 %229
    %231 = vadd.xlane.f32.xlu0 %v118
    %v232 = vpop.xlane.xlu0 %231
    %233 = vadd.xlane.f32.xlu0 %v119
    %v234 = vpop.xlane.xlu0 %233
    %235 = vadd.xlane.f32.xlu0 %v120
    %v236 = vpop.xlane.xlu0 %235
    %237 = vadd.xlane.f32.xlu0 %v121
    %v238 = vpop.xlane.xlu0 %237
    %239 = vadd.xlane.f32.xlu0 %v122
    %v240 = vpop.xlane.xlu0 %239
    %241 = vadd.xlane.f32.xlu0 %v123
    %v242 = vpop.xlane.xlu0 %241
    %243 = vadd.xlane.f32.xlu0 %v124
    %v244 = vpop.xlane.xlu0 %243
    %245 = vadd.xlane.f32.xlu0 %v125
    %v246 = vpop.xlane.xlu0 %245
    %247 = vadd.xlane.f32.xlu0 %v126
    %v248 = vpop.xlane.xlu0 %247
    %249 = vadd.xlane.f32.xlu0 %v127
    %v250 = vpop.xlane.xlu0 %249
    %251 = vadd.xlane.f32.xlu0 %v128
    %v252 = vpop.xlane.xlu0 %251
    %253 = vadd.xlane.f32.xlu0 %v129
    %v254 = vpop.xlane.xlu0 %253
    %255 = vadd.xlane.f32.xlu0 %v130
    %v256 = vpop.xlane.xlu0 %255
    %257 = vadd.xlane.f32.xlu0 %v131
    %v258 = vpop.xlane.xlu0 %257
    %259 = vadd.xlane.f32.xlu0 %v132
    %v260 = vpop.xlane.xlu0 %259
    %v261 = vrcp.pop 128.0
    %v262 = vmul.f32 %v134, %v261
    %v263 = vmul.f32 %v136, %v261
    %v264 = vmul.f32 %v138, %v261
    %v265 = vmul.f32 %v140, %v261
    %v266 = vmul.f32 %v142, %v261
    %v267 = vmul.f32 %v144, %v261
    %v268 = vmul.f32 %v146, %v261
    %v269 = vmul.f32 %v148, %v261
    %v270 = vmul.f32 %v150, %v261
    %v271 = vmul.f32 %v152, %v261
    %v272 = vmul.f32 %v154, %v261
    %v273 = vmul.f32 %v156, %v261
    %v274 = vmul.f32 %v158, %v261
    %v275 = vmul.f32 %v160, %v261
    %v276 = vmul.f32 %v162, %v261
    %v277 = vmul.f32 %v164, %v261
    %v278 = vmul.f32 %v166, %v261
    %v279 = vmul.f32 %v168, %v261
    %v280 = vmul.f32 %v170, %v261
    %v281 = vmul.f32 %v172, %v261
    %v282 = vmul.f32 %v174, %v261
    %v283 = vmul.f32 %v176, %v261
    %v284 = vmul.f32 %v178, %v261
    %v285 = vmul.f32 %v180, %v261
    %v286 = vmul.f32 %v182, %v261
    %v287 = vmul.f32 %v184, %v261
    %v288 = vmul.f32 %v186, %v261
    %v289 = vmul.f32 %v188, %v261
    %v290 = vmul.f32 %v190, %v261
    %v291 = vmul.f32 %v192, %v261
    %v292 = vmul.f32 %v194, %v261
    %v293 = vmul.f32 %v196, %v261
    %v294 = vmul.f32 %v198, %v261
    %v295 = vmul.f32 %v200, %v261
    %v296 = vmul.f32 %v202, %v261
    %v297 = vmul.f32 %v204, %v261
    %v298 = vmul.f32 %v206, %v261
    %v299 = vmul.f32 %v208, %v261
    %v300 = vmul.f32 %v210, %v261
    %v301 = vmul.f32 %v212, %v261
    %v302 = vmul.f32 %v214, %v261
    %v303 = vmul.f32 %v216, %v261
    %v304 = vmul.f32 %v218, %v261
    %v305 = vmul.f32 %v220, %v261
    %v306 = vmul.f32 %v222, %v261
    %v307 = vmul.f32 %v224, %v261
    %v308 = vmul.f32 %v226, %v261
    %v309 = vmul.f32 %v228, %v261
    %v310 = vmul.f32 %v230, %v261
    %v311 = vmul.f32 %v232, %v261
    %v312 = vmul.f32 %v234, %v261
    %v313 = vmul.f32 %v236, %v261
    %v314 = vmul.f32 %v238, %v261
    %v315 = vmul.f32 %v240, %v261
    %v316 = vmul.f32 %v242, %v261
    %v317 = vmul.f32 %v244, %v261
    %v318 = vmul.f32 %v246, %v261
    %v319 = vmul.f32 %v248, %v261
    %v320 = vmul.f32 %v250, %v261
    %v321 = vmul.f32 %v252, %v261
    %v322 = vmul.f32 %v254, %v261
    %v323 = vmul.f32 %v256, %v261
    %v324 = vmul.f32 %v258, %v261
    %v325 = vmul.f32 %v260, %v261
    %v326 = vsub.f32 %v69, %v262
    %v327 = vsub.f32 %v70, %v263
    %v328 = vsub.f32 %v71, %v264
    %v329 = vsub.f32 %v72, %v265
    %v330 = vsub.f32 %v73, %v266
    %v331 = vsub.f32 %v74, %v267
    %v332 = vsub.f32 %v75, %v268
    %v333 = vsub.f32 %v76, %v269
    %v334 = vsub.f32 %v77, %v270
    %v335 = vsub.f32 %v78, %v271
    %v336 = vsub.f32 %v79, %v272
    %v337 = vsub.f32 %v80, %v273
    %v338 = vsub.f32 %v81, %v274
    %v339 = vsub.f32 %v82, %v275
    %v340 = vsub.f32 %v83, %v276
    %v341 = vsub.f32 %v84, %v277
    %v342 = vsub.f32 %v85, %v278
    %v343 = vsub.f32 %v86, %v279
    %v344 = vsub.f32 %v87, %v280
    %v345 = vsub.f32 %v88, %v281
    %v346 = vsub.f32 %v89, %v282
    %v347 = vsub.f32 %v90, %v283
    %v348 = vsub.f32 %v91, %v284
    %v349 = vsub.f32 %v92, %v285
    %v350 = vsub.f32 %v93, %v286
    %v351 = vsub.f32 %v94, %v287
    %v352 = vsub.f32 %v95, %v288
    %v353 = vsub.f32 %v96, %v289
    %v354 = vsub.f32 %v97, %v290
    %v355 = vsub.f32 %v98, %v291
    %v356 = vsub.f32 %v99, %v292
    %v357 = vsub.f32 %v100, %v293
    %v358 = vsub.f32 %v101, %v294
    %v359 = vsub.f32 %v102, %v295
    %v360 = vsub.f32 %v103, %v296
    %v361 = vsub.f32 %v104, %v297
    %v362 = vsub.f32 %v105, %v298
    %v363 = vsub.f32 %v106, %v299
    %v364 = vsub.f32 %v107, %v300
    %v365 = vsub.f32 %v108, %v301
    %v366 = vsub.f32 %v109, %v302
    %v367 = vsub.f32 %v110, %v303
    %v368 = vsub.f32 %v111, %v304
    %v369 = vsub.f32 %v112, %v305
    %v370 = vsub.f32 %v113, %v306
    %v371 = vsub.f32 %v114, %v307
    %v372 = vsub.f32 %v115, %v308
    %v373 = vsub.f32 %v116, %v309
    %v374 = vsub.f32 %v117, %v310
    %v375 = vsub.f32 %v118, %v311
    %v376 = vsub.f32 %v119, %v312
    %v377 = vsub.f32 %v120, %v313
    %v378 = vsub.f32 %v121, %v314
    %v379 = vsub.f32 %v122, %v315
    %v380 = vsub.f32 %v123, %v316
    %v381 = vsub.f32 %v124, %v317
    %v382 = vsub.f32 %v125, %v318
    %v383 = vsub.f32 %v126, %v319
    %v384 = vsub.f32 %v127, %v320
    %v385 = vsub.f32 %v128, %v321
    %v386 = vsub.f32 %v129, %v322
    %v387 = vsub.f32 %v130, %v323
    %v388 = vsub.f32 %v131, %v324
    %v389 = vsub.f32 %v132, %v325
    %v390 = vmul.f32 %v326, %v326
    %v391 = vmul.f32 %v327, %v327
    %v392 = vmul.f32 %v328, %v328
    %v393 = vmul.f32 %v329, %v329
    %v394 = vmul.f32 %v330, %v330
    %v395 = vmul.f32 %v331, %v331
    %v396 = vmul.f32 %v332, %v332
    %v397 = vmul.f32 %v333, %v333
    %v398 = vmul.f32 %v334, %v334
    %v399 = vmul.f32 %v335, %v335
    %v400 = vmul.f32 %v336, %v336
    %v401 = vmul.f32 %v337, %v337
    %v402 = vmul.f32 %v338, %v338
    %v403 = vmul.f32 %v339, %v339
    %v404 = vmul.f32 %v340, %v340
    %v405 = vmul.f32 %v341, %v341
    %v406 = vmul.f32 %v342, %v342
    %v407 = vmul.f32 %v343, %v343
    %v408 = vmul.f32 %v344, %v344
    %v409 = vmul.f32 %v345, %v345
    %v410 = vmul.f32 %v346, %v346
    %v411 = vmul.f32 %v347, %v347
    %v412 = vmul.f32 %v348, %v348
    %v413 = vmul.f32 %v349, %v349
    %v414 = vmul.f32 %v350, %v350
    %v415 = vmul.f32 %v351, %v351
    %v416 = vmul.f32 %v352, %v352
    %v417 = vmul.f32 %v353, %v353
    %v418 = vmul.f32 %v354, %v354
    %v419 = vmul.f32 %v355, %v355
    %v420 = vmul.f32 %v356, %v356
    %v421 = vmul.f32 %v357, %v357
    %v422 = vmul.f32 %v358, %v358
    %v423 = vmul.f32 %v359, %v359
    %v424 = vmul.f32 %v360, %v360
    %v425 = vmul.f32 %v361, %v361
    %v426 = vmul.f32 %v362, %v362
    %v427 = vmul.f32 %v363, %v363
    %v428 = vmul.f32 %v364, %v364
    %v429 = vmul.f32 %v365, %v365
    %v430 = vmul.f32 %v366, %v366
    %v431 = vmul.f32 %v367, %v367
    %v432 = vmul.f32 %v368, %v368
    %v433 = vmul.f32 %v369, %v369
    %v434 = vmul.f32 %v370, %v370
    %v435 = vmul.f32 %v371, %v371
    %v436 = vmul.f32 %v372, %v372
    %v437 = vmul.f32 %v373, %v373
    %v438 = vmul.f32 %v374, %v374
    %v439 = vmul.f32 %v375, %v375
    %v440 = vmul.f32 %v376, %v376
    %v441 = vmul.f32 %v377, %v377
    %v442 = vmul.f32 %v378, %v378
    %v443 = vmul.f32 %v379, %v379
    %v444 = vmul.f32 %v380, %v380
    %v445 = vmul.f32 %v381, %v381
    %v446 = vmul.f32 %v382, %v382
    %v447 = vmul.f32 %v383, %v383
    %v448 = vmul.f32 %v384, %v384
    %v449 = vmul.f32 %v385, %v385
    %v450 = vmul.f32 %v386, %v386
    %v451 = vmul.f32 %v387, %v387
    %v452 = vmul.f32 %v388, %v388
    %v453 = vmul.f32 %v389, %v389
    %454 = vadd.xlane.f32.xlu0 %v390
    %v455 = vpop.xlane.xlu0 %454
    %456 = vadd.xlane.f32.xlu0 %v391
    %v457 = vpop.xlane.xlu0 %456
    %458 = vadd.xlane.f32.xlu0 %v392
    %v459 = vpop.xlane.xlu0 %458
    %460 = vadd.xlane.f32.xlu0 %v393
    %v461 = vpop.xlane.xlu0 %460
    %462 = vadd.xlane.f32.xlu0 %v394
    %v463 = vpop.xlane.xlu0 %462
    %464 = vadd.xlane.f32.xlu0 %v395
    %v465 = vpop.xlane.xlu0 %464
    %466 = vadd.xlane.f32.xlu0 %v396
    %v467 = vpop.xlane.xlu0 %466
    %468 = vadd.xlane.f32.xlu0 %v397
    %v469 = vpop.xlane.xlu0 %468
    %470 = vadd.xlane.f32.xlu0 %v398
    %v471 = vpop.xlane.xlu0 %470
    %472 = vadd.xlane.f32.xlu0 %v399
    %v473 = vpop.xlane.xlu0 %472
    %474 = vadd.xlane.f32.xlu0 %v400
    %v475 = vpop.xlane.xlu0 %474
    %476 = vadd.xlane.f32.xlu0 %v401
    %v477 = vpop.xlane.xlu0 %476
    %478 = vadd.xlane.f32.xlu0 %v402
    %v479 = vpop.xlane.xlu0 %478
    %480 = vadd.xlane.f32.xlu0 %v403
    %v481 = vpop.xlane.xlu0 %480
    %482 = vadd.xlane.f32.xlu0 %v404
    %v483 = vpop.xlane.xlu0 %482
    %484 = vadd.xlane.f32.xlu0 %v405
    %v485 = vpop.xlane.xlu0 %484
    %486 = vadd.xlane.f32.xlu0 %v406
    %v487 = vpop.xlane.xlu0 %486
    %488 = vadd.xlane.f32.xlu0 %v407
    %v489 = vpop.xlane.xlu0 %488
    %490 = vadd.xlane.f32.xlu0 %v408
    %v491 = vpop.xlane.xlu0 %490
    %492 = vadd.xlane.f32.xlu0 %v409
    %v493 = vpop.xlane.xlu0 %492
    %494 = vadd.xlane.f32.xlu0 %v410
    %v495 = vpop.xlane.xlu0 %494
    %496 = vadd.xlane.f32.xlu0 %v411
    %v497 = vpop.xlane.xlu0 %496
    %498 = vadd.xlane.f32.xlu0 %v412
    %v499 = vpop.xlane.xlu0 %498
    %500 = vadd.xlane.f32.xlu0 %v413
    %v501 = vpop.xlane.xlu0 %500
    %502 = vadd.xlane.f32.xlu0 %v414
    %v503 = vpop.xlane.xlu0 %502
    %504 = vadd.xlane.f32.xlu0 %v415
    %v505 = vpop.xlane.xlu0 %504
    %506 = vadd.xlane.f32.xlu0 %v416
    %v507 = vpop.xlane.xlu0 %506
    %508 = vadd.xlane.f32.xlu0 %v417
    %v509 = vpop.xlane.xlu0 %508
    %510 = vadd.xlane.f32.xlu0 %v418
    %v511 = vpop.xlane.xlu0 %510
    %512 = vadd.xlane.f32.xlu0 %v419
    %v513 = vpop.xlane.xlu0 %512
    %514 = vadd.xlane.f32.xlu0 %v420
    %v515 = vpop.xlane.xlu0 %514
    %516 = vadd.xlane.f32.xlu0 %v421
    %v517 = vpop.xlane.xlu0 %516
    %518 = vadd.xlane.f32.xlu0 %v422
    %v519 = vpop.xlane.xlu0 %518
    %520 = vadd.xlane.f32.xlu0 %v423
    %v521 = vpop.xlane.xlu0 %520
    %522 = vadd.xlane.f32.xlu0 %v424
    %v523 = vpop.xlane.xlu0 %522
    %524 = vadd.xlane.f32.xlu0 %v425
    %v525 = vpop.xlane.xlu0 %524
    %526 = vadd.xlane.f32.xlu0 %v426
    %v527 = vpop.xlane.xlu0 %526
    %528 = vadd.xlane.f32.xlu0 %v427
    %v529 = vpop.xlane.xlu0 %528
    %530 = vadd.xlane.f32.xlu0 %v428
    %v531 = vpop.xlane.xlu0 %530
    %532 = vadd.xlane.f32.xlu0 %v429
    %v533 = vpop.xlane.xlu0 %532
    %534 = vadd.xlane.f32.xlu0 %v430
    %v535 = vpop.xlane.xlu0 %534
    %536 = vadd.xlane.f32.xlu0 %v431
    %v537 = vpop.xlane.xlu0 %536
    %538 = vadd.xlane.f32.xlu0 %v432
    %v539 = vpop.xlane.xlu0 %538
    %540 = vadd.xlane.f32.xlu0 %v433
    %v541 = vpop.xlane.xlu0 %540
    %542 = vadd.xlane.f32.xlu0 %v434
    %v543 = vpop.xlane.xlu0 %542
    %544 = vadd.xlane.f32.xlu0 %v435
    %v545 = vpop.xlane.xlu0 %544
    %546 = vadd.xlane.f32.xlu0 %v436
    %v547 = vpop.xlane.xlu0 %546
    %548 = vadd.xlane.f32.xlu0 %v437
    %v549 = vpop.xlane.xlu0 %548
    %550 = vadd.xlane.f32.xlu0 %v438
    %v551 = vpop.xlane.xlu0 %550
    %552 = vadd.xlane.f32.xlu0 %v439
    %v553 = vpop.xlane.xlu0 %552
    %554 = vadd.xlane.f32.xlu0 %v440
    %v555 = vpop.xlane.xlu0 %554
    %556 = vadd.xlane.f32.xlu0 %v441
    %v557 = vpop.xlane.xlu0 %556
    %558 = vadd.xlane.f32.xlu0 %v442
    %v559 = vpop.xlane.xlu0 %558
    %560 = vadd.xlane.f32.xlu0 %v443
    %v561 = vpop.xlane.xlu0 %560
    %562 = vadd.xlane.f32.xlu0 %v444
    %v563 = vpop.xlane.xlu0 %562
    %564 = vadd.xlane.f32.xlu0 %v445
    %v565 = vpop.xlane.xlu0 %564
    %566 = vadd.xlane.f32.xlu0 %v446
    %v567 = vpop.xlane.xlu0 %566
    %568 = vadd.xlane.f32.xlu0 %v447
    %v569 = vpop.xlane.xlu0 %568
    %570 = vadd.xlane.f32.xlu0 %v448
    %v571 = vpop.xlane.xlu0 %570
    %572 = vadd.xlane.f32.xlu0 %v449
    %v573 = vpop.xlane.xlu0 %572
    %574 = vadd.xlane.f32.xlu0 %v450
    %v575 = vpop.xlane.xlu0 %574
    %576 = vadd.xlane.f32.xlu0 %v451
    %v577 = vpop.xlane.xlu0 %576
    %578 = vadd.xlane.f32.xlu0 %v452
    %v579 = vpop.xlane.xlu0 %578
    %580 = vadd.xlane.f32.xlu0 %v453
    %v581 = vpop.xlane.xlu0 %580
    %v582 = vmul.f32 %v455, %v261
    %v583 = vmul.f32 %v457, %v261
    %v584 = vmul.f32 %v459, %v261
    %v585 = vmul.f32 %v461, %v261
    %v586 = vmul.f32 %v463, %v261
    %v587 = vmul.f32 %v465, %v261
    %v588 = vmul.f32 %v467, %v261
    %v589 = vmul.f32 %v469, %v261
    %v590 = vmul.f32 %v471, %v261
    %v591 = vmul.f32 %v473, %v261
    %v592 = vmul.f32 %v475, %v261
    %v593 = vmul.f32 %v477, %v261
    %v594 = vmul.f32 %v479, %v261
    %v595 = vmul.f32 %v481, %v261
    %v596 = vmul.f32 %v483, %v261
    %v597 = vmul.f32 %v485, %v261
    %v598 = vmul.f32 %v487, %v261
    %v599 = vmul.f32 %v489, %v261
    %v600 = vmul.f32 %v491, %v261
    %v601 = vmul.f32 %v493, %v261
    %v602 = vmul.f32 %v495, %v261
    %v603 = vmul.f32 %v497, %v261
    %v604 = vmul.f32 %v499, %v261
    %v605 = vmul.f32 %v501, %v261
    %v606 = vmul.f32 %v503, %v261
    %v607 = vmul.f32 %v505, %v261
    %v608 = vmul.f32 %v507, %v261
    %v609 = vmul.f32 %v509, %v261
    %v610 = vmul.f32 %v511, %v261
    %v611 = vmul.f32 %v513, %v261
    %v612 = vmul.f32 %v515, %v261
    %v613 = vmul.f32 %v517, %v261
    %v614 = vmul.f32 %v519, %v261
    %v615 = vmul.f32 %v521, %v261
    %v616 = vmul.f32 %v523, %v261
    %v617 = vmul.f32 %v525, %v261
    %v618 = vmul.f32 %v527, %v261
    %v619 = vmul.f32 %v529, %v261
    %v620 = vmul.f32 %v531, %v261
    %v621 = vmul.f32 %v533, %v261
    %v622 = vmul.f32 %v535, %v261
    %v623 = vmul.f32 %v537, %v261
    %v624 = vmul.f32 %v539, %v261
    %v625 = vmul.f32 %v541, %v261
    %v626 = vmul.f32 %v543, %v261
    %v627 = vmul.f32 %v545, %v261
    %v628 = vmul.f32 %v547, %v261
    %v629 = vmul.f32 %v549, %v261
    %v630 = vmul.f32 %v551, %v261
    %v631 = vmul.f32 %v553, %v261
    %v632 = vmul.f32 %v555, %v261
    %v633 = vmul.f32 %v557, %v261
    %v634 = vmul.f32 %v559, %v261
    %v635 = vmul.f32 %v561, %v261
    %v636 = vmul.f32 %v563, %v261
    %v637 = vmul.f32 %v565, %v261
    %v638 = vmul.f32 %v567, %v261
    %v639 = vmul.f32 %v569, %v261
    %v640 = vmul.f32 %v571, %v261
    %v641 = vmul.f32 %v573, %v261
    %v642 = vmul.f32 %v575, %v261
    %v643 = vmul.f32 %v577, %v261
    %v644 = vmul.f32 %v579, %v261
    %v645 = vmul.f32 %v581, %v261
    %v646 = vadd.f32 %v582, 1e-05
    %v647 = vadd.f32 %v583, 1e-05
    %v648 = vadd.f32 %v584, 1e-05
    %v649 = vadd.f32 %v585, 1e-05
    %v650 = vadd.f32 %v586, 1e-05
    %v651 = vadd.f32 %v587, 1e-05
    %v652 = vadd.f32 %v588, 1e-05
    %v653 = vadd.f32 %v589, 1e-05
    %v654 = vadd.f32 %v590, 1e-05
    %v655 = vadd.f32 %v591, 1e-05
    %v656 = vadd.f32 %v592, 1e-05
    %v657 = vadd.f32 %v593, 1e-05
    %v658 = vadd.f32 %v594, 1e-05
    %v659 = vadd.f32 %v595, 1e-05
    %v660 = vadd.f32 %v596, 1e-05
    %v661 = vadd.f32 %v597, 1e-05
    %v662 = vadd.f32 %v598, 1e-05
    %v663 = vadd.f32 %v599, 1e-05
    %v664 = vadd.f32 %v600, 1e-05
    %v665 = vadd.f32 %v601, 1e-05
    %v666 = vadd.f32 %v602, 1e-05
    %v667 = vadd.f32 %v603, 1e-05
    %v668 = vadd.f32 %v604, 1e-05
    %v669 = vadd.f32 %v605, 1e-05
    %v670 = vadd.f32 %v606, 1e-05
    %v671 = vadd.f32 %v607, 1e-05
    %v672 = vadd.f32 %v608, 1e-05
    %v673 = vadd.f32 %v609, 1e-05
    %v674 = vadd.f32 %v610, 1e-05
    %v675 = vadd.f32 %v611, 1e-05
    %v676 = vadd.f32 %v612, 1e-05
    %v677 = vadd.f32 %v613, 1e-05
    %v678 = vadd.f32 %v614, 1e-05
    %v679 = vadd.f32 %v615, 1e-05
    %v680 = vadd.f32 %v616, 1e-05
    %v681 = vadd.f32 %v617, 1e-05
    %v682 = vadd.f32 %v618, 1e-05
    %v683 = vadd.f32 %v619, 1e-05
    %v684 = vadd.f32 %v620, 1e-05
    %v685 = vadd.f32 %v621, 1e-05
    %v686 = vadd.f32 %v622, 1e-05
    %v687 = vadd.f32 %v623, 1e-05
    %v688 = vadd.f32 %v624, 1e-05
    %v689 = vadd.f32 %v625, 1e-05
    %v690 = vadd.f32 %v626, 1e-05
    %v691 = vadd.f32 %v627, 1e-05
    %v692 = vadd.f32 %v628, 1e-05
    %v693 = vadd.f32 %v629, 1e-05
    %v694 = vadd.f32 %v630, 1e-05
    %v695 = vadd.f32 %v631, 1e-05
    %v696 = vadd.f32 %v632, 1e-05
    %v697 = vadd.f32 %v633, 1e-05
    %v698 = vadd.f32 %v634, 1e-05
    %v699 = vadd.f32 %v635, 1e-05
    %v700 = vadd.f32 %v636, 1e-05
    %v701 = vadd.f32 %v637, 1e-05
    %v702 = vadd.f32 %v638, 1e-05
    %v703 = vadd.f32 %v639, 1e-05
    %v704 = vadd.f32 %v640, 1e-05
    %v705 = vadd.f32 %v641, 1e-05
    %v706 = vadd.f32 %v642, 1e-05
    %v707 = vadd.f32 %v643, 1e-05
    %v708 = vadd.f32 %v644, 1e-05
    %v709 = vadd.f32 %v645, 1e-05
    %v710 = vrsqrt.pop %v646
    %v711 = vrsqrt.pop %v647
    %v712 = vrsqrt.pop %v648
    %v713 = vrsqrt.pop %v649
    %v714 = vrsqrt.pop %v650
    %v715 = vrsqrt.pop %v651
    %v716 = vrsqrt.pop %v652
    %v717 = vrsqrt.pop %v653
    %v718 = vrsqrt.pop %v654
    %v719 = vrsqrt.pop %v655
    %v720 = vrsqrt.pop %v656
    %v721 = vrsqrt.pop %v657
    %v722 = vrsqrt.pop %v658
    %v723 = vrsqrt.pop %v659
    %v724 = vrsqrt.pop %v660
    %v725 = vrsqrt.pop %v661
    %v726 = vrsqrt.pop %v662
    %v727 = vrsqrt.pop %v663
    %v728 = vrsqrt.pop %v664
    %v729 = vrsqrt.pop %v665
    %v730 = vrsqrt.pop %v666
    %v731 = vrsqrt.pop %v667
    %v732 = vrsqrt.pop %v668
    %v733 = vrsqrt.pop %v669
    %v734 = vrsqrt.pop %v670
    %v735 = vrsqrt.pop %v671
    %v736 = vrsqrt.pop %v672
    %v737 = vrsqrt.pop %v673
    %v738 = vrsqrt.pop %v674
    %v739 = vrsqrt.pop %v675
    %v740 = vrsqrt.pop %v676
    %v741 = vrsqrt.pop %v677
    %v742 = vrsqrt.pop %v678
    %v743 = vrsqrt.pop %v679
    %v744 = vrsqrt.pop %v680
    %v745 = vrsqrt.pop %v681
    %v746 = vrsqrt.pop %v682
    %v747 = vrsqrt.pop %v683
    %v748 = vrsqrt.pop %v684
    %v749 = vrsqrt.pop %v685
    %v750 = vrsqrt.pop %v686
    %v751 = vrsqrt.pop %v687
    %v752 = vrsqrt.pop %v688
    %v753 = vrsqrt.pop %v689
    %v754 = vrsqrt.pop %v690
    %v755 = vrsqrt.pop %v691
    %v756 = vrsqrt.pop %v692
    %v757 = vrsqrt.pop %v693
    %v758 = vrsqrt.pop %v694
    %v759 = vrsqrt.pop %v695
    %v760 = vrsqrt.pop %v696
    %v761 = vrsqrt.pop %v697
    %v762 = vrsqrt.pop %v698
    %v763 = vrsqrt.pop %v699
    %v764 = vrsqrt.pop %v700
    %v765 = vrsqrt.pop %v701
    %v766 = vrsqrt.pop %v702
    %v767 = vrsqrt.pop %v703
    %v768 = vrsqrt.pop %v704
    %v769 = vrsqrt.pop %v705
    %v770 = vrsqrt.pop %v706
    %v771 = vrsqrt.pop %v707
    %v772 = vrsqrt.pop %v708
    %v773 = vrsqrt.pop %v709
    %v774 = vmul.f32 %v326, %v710
    %v775 = vmul.f32 %v327, %v711
    %v776 = vmul.f32 %v328, %v712
    %v777 = vmul.f32 %v329, %v713
    %v778 = vmul.f32 %v330, %v714
    %v779 = vmul.f32 %v331, %v715
    %v780 = vmul.f32 %v332, %v716
    %v781 = vmul.f32 %v333, %v717
    %v782 = vmul.f32 %v334, %v718
    %v783 = vmul.f32 %v335, %v719
    %v784 = vmul.f32 %v336, %v720
    %v785 = vmul.f32 %v337, %v721
    %v786 = vmul.f32 %v338, %v722
    %v787 = vmul.f32 %v339, %v723
    %v788 = vmul.f32 %v340, %v724
    %v789 = vmul.f32 %v341, %v725
    %v790 = vmul.f32 %v342, %v726
    %v791 = vmul.f32 %v343, %v727
    %v792 = vmul.f32 %v344, %v728
    %v793 = vmul.f32 %v345, %v729
    %v794 = vmul.f32 %v346, %v730
    %v795 = vmul.f32 %v347, %v731
    %v796 = vmul.f32 %v348, %v732
    %v797 = vmul.f32 %v349, %v733
    %v798 = vmul.f32 %v350, %v734
    %v799 = vmul.f32 %v351, %v735
    %v800 = vmul.f32 %v352, %v736
    %v801 = vmul.f32 %v353, %v737
    %v802 = vmul.f32 %v354, %v738
    %v803 = vmul.f32 %v355, %v739
    %v804 = vmul.f32 %v356, %v740
    %v805 = vmul.f32 %v357, %v741
    %v806 = vmul.f32 %v358, %v742
    %v807 = vmul.f32 %v359, %v743
    %v808 = vmul.f32 %v360, %v744
    %v809 = vmul.f32 %v361, %v745
    %v810 = vmul.f32 %v362, %v746
    %v811 = vmul.f32 %v363, %v747
    %v812 = vmul.f32 %v364, %v748
    %v813 = vmul.f32 %v365, %v749
    %v814 = vmul.f32 %v366, %v750
    %v815 = vmul.f32 %v367, %v751
    %v816 = vmul.f32 %v368, %v752
    %v817 = vmul.f32 %v369, %v753
    %v818 = vmul.f32 %v370, %v754
    %v819 = vmul.f32 %v371, %v755
    %v820 = vmul.f32 %v372, %v756
    %v821 = vmul.f32 %v373, %v757
    %v822 = vmul.f32 %v374, %v758
    %v823 = vmul.f32 %v375, %v759
    %v824 = vmul.f32 %v376, %v760
    %v825 = vmul.f32 %v377, %v761
    %v826 = vmul.f32 %v378, %v762
    %v827 = vmul.f32 %v379, %v763
    %v828 = vmul.f32 %v380, %v764
    %v829 = vmul.f32 %v381, %v765
    %v830 = vmul.f32 %v382, %v766
    %v831 = vmul.f32 %v383, %v767
    %v832 = vmul.f32 %v384, %v768
    %v833 = vmul.f32 %v385, %v769
    %v834 = vmul.f32 %v386, %v770
    %v835 = vmul.f32 %v387, %v771
    %v836 = vmul.f32 %v388, %v772
    %v837 = vmul.f32 %v389, %v773
    %v838 = vld [vmem:[%s1] sm:$0x1]
    %v840 = vlaneseq
    %v841 = vshrl.u32 %v840, 7
    %v842 = vsub.s32 0, %v841
    %v843 = vrot.slane %v838, %v842
    %v845 = vmul.f32 %v774, %v843
    %v846 = vmul.f32 %v775, %v843
    %v847 = vmul.f32 %v776, %v843
    %v848 = vmul.f32 %v777, %v843
    %v849 = vmul.f32 %v778, %v843
    %v850 = vmul.f32 %v779, %v843
    %v851 = vmul.f32 %v780, %v843
    %v852 = vmul.f32 %v781, %v843
    %v853 = vmul.f32 %v782, %v843
    %v854 = vmul.f32 %v783, %v843
    %v855 = vmul.f32 %v784, %v843
    %v856 = vmul.f32 %v785, %v843
    %v857 = vmul.f32 %v786, %v843
    %v858 = vmul.f32 %v787, %v843
    %v859 = vmul.f32 %v788, %v843
    %v860 = vmul.f32 %v789, %v843
    %v861 = vmul.f32 %v790, %v843
    %v862 = vmul.f32 %v791, %v843
    %v863 = vmul.f32 %v792, %v843
    %v864 = vmul.f32 %v793, %v843
    %v865 = vmul.f32 %v794, %v843
    %v866 = vmul.f32 %v795, %v843
    %v867 = vmul.f32 %v796, %v843
    %v868 = vmul.f32 %v797, %v843
    %v869 = vmul.f32 %v798, %v843
    %v870 = vmul.f32 %v799, %v843
    %v871 = vmul.f32 %v800, %v843
    %v872 = vmul.f32 %v801, %v843
    %v873 = vmul.f32 %v802, %v843
    %v874 = vmul.f32 %v803, %v843
    %v875 = vmul.f32 %v804, %v843
    %v876 = vmul.f32 %v805, %v843
    %v877 = vmul.f32 %v806, %v843
    %v878 = vmul.f32 %v807, %v843
    %v879 = vmul.f32 %v808, %v843
    %v880 = vmul.f32 %v809, %v843
    %v881 = vmul.f32 %v810, %v843
    %v882 = vmul.f32 %v811, %v843
    %v883 = vmul.f32 %v812, %v843
    %v884 = vmul.f32 %v813, %v843
    %v885 = vmul.f32 %v814, %v843
    %v886 = vmul.f32 %v815, %v843
    %v887 = vmul.f32 %v816, %v843
    %v888 = vmul.f32 %v817, %v843
    %v889 = vmul.f32 %v818, %v843
    %v890 = vmul.f32 %v819, %v843
    %v891 = vmul.f32 %v820, %v843
    %v892 = vmul.f32 %v821, %v843
    %v893 = vmul.f32 %v822, %v843
    %v894 = vmul.f32 %v823, %v843
    %v895 = vmul.f32 %v824, %v843
    %v896 = vmul.f32 %v825, %v843
    %v897 = vmul.f32 %v826, %v843
    %v898 = vmul.f32 %v827, %v843
    %v899 = vmul.f32 %v828, %v843
    %v900 = vmul.f32 %v829, %v843
    %v901 = vmul.f32 %v830, %v843
    %v902 = vmul.f32 %v831, %v843
    %v903 = vmul.f32 %v832, %v843
    %v904 = vmul.f32 %v833, %v843
    %v905 = vmul.f32 %v834, %v843
    %v906 = vmul.f32 %v835, %v843
    %v907 = vmul.f32 %v836, %v843
    %v908 = vmul.f32 %v837, %v843
    %v909 = vld [vmem:[%s2] sm:$0x1]
    %v911 = vlaneseq
    %v912 = vshrl.u32 %v911, 7
    %v913 = vsub.s32 0, %v912
    %v914 = vrot.slane %v909, %v913
    %v916 = vadd.f32 %v845, %v914
    %v917 = vadd.f32 %v846, %v914
    %v918 = vadd.f32 %v847, %v914
    %v919 = vadd.f32 %v848, %v914
    %v920 = vadd.f32 %v849, %v914
    %v921 = vadd.f32 %v850, %v914
    %v922 = vadd.f32 %v851, %v914
    %v923 = vadd.f32 %v852, %v914
    %v924 = vadd.f32 %v853, %v914
    %v925 = vadd.f32 %v854, %v914
    %v926 = vadd.f32 %v855, %v914
    %v927 = vadd.f32 %v856, %v914
    %v928 = vadd.f32 %v857, %v914
    %v929 = vadd.f32 %v858, %v914
    %v930 = vadd.f32 %v859, %v914
    %v931 = vadd.f32 %v860, %v914
    %v932 = vadd.f32 %v861, %v914
    %v933 = vadd.f32 %v862, %v914
    %v934 = vadd.f32 %v863, %v914
    %v935 = vadd.f32 %v864, %v914
    %v936 = vadd.f32 %v865, %v914
    %v937 = vadd.f32 %v866, %v914
    %v938 = vadd.f32 %v867, %v914
    %v939 = vadd.f32 %v868, %v914
    %v940 = vadd.f32 %v869, %v914
    %v941 = vadd.f32 %v870, %v914
    %v942 = vadd.f32 %v871, %v914
    %v943 = vadd.f32 %v872, %v914
    %v944 = vadd.f32 %v873, %v914
    %v945 = vadd.f32 %v874, %v914
    %v946 = vadd.f32 %v875, %v914
    %v947 = vadd.f32 %v876, %v914
    %v948 = vadd.f32 %v877, %v914
    %v949 = vadd.f32 %v878, %v914
    %v950 = vadd.f32 %v879, %v914
    %v951 = vadd.f32 %v880, %v914
    %v952 = vadd.f32 %v881, %v914
    %v953 = vadd.f32 %v882, %v914
    %v954 = vadd.f32 %v883, %v914
    %v955 = vadd.f32 %v884, %v914
    %v956 = vadd.f32 %v885, %v914
    %v957 = vadd.f32 %v886, %v914
    %v958 = vadd.f32 %v887, %v914
    %v959 = vadd.f32 %v888, %v914
    %v960 = vadd.f32 %v889, %v914
    %v961 = vadd.f32 %v890, %v914
    %v962 = vadd.f32 %v891, %v914
    %v963 = vadd.f32 %v892, %v914
    %v964 = vadd.f32 %v893, %v914
    %v965 = vadd.f32 %v894, %v914
    %v966 = vadd.f32 %v895, %v914
    %v967 = vadd.f32 %v896, %v914
    %v968 = vadd.f32 %v897, %v914
    %v969 = vadd.f32 %v898, %v914
    %v970 = vadd.f32 %v899, %v914
    %v971 = vadd.f32 %v900, %v914
    %v972 = vadd.f32 %v901, %v914
    %v973 = vadd.f32 %v902, %v914
    %v974 = vadd.f32 %v903, %v914
    %v975 = vadd.f32 %v904, %v914
    %v976 = vadd.f32 %v905, %v914
    %v977 = vadd.f32 %v906, %v914
    %v978 = vadd.f32 %v907, %v914
    %v979 = vadd.f32 %v908, %v914
    %v980 = vpack.c.bf16 %v917, %v916
    %v981 = vpack.c.bf16 %v919, %v918
    %v982 = vpack.c.bf16 %v921, %v920
    %v983 = vpack.c.bf16 %v923, %v922
    %v984 = vpack.c.bf16 %v925, %v924
    %v985 = vpack.c.bf16 %v927, %v926
    %v986 = vpack.c.bf16 %v929, %v928
    %v987 = vpack.c.bf16 %v931, %v930
    %v988 = vpack.c.bf16 %v933, %v932
    %v989 = vpack.c.bf16 %v935, %v934
    %v990 = vpack.c.bf16 %v937, %v936
    %v991 = vpack.c.bf16 %v939, %v938
    %v992 = vpack.c.bf16 %v941, %v940
    %v993 = vpack.c.bf16 %v943, %v942
    %v994 = vpack.c.bf16 %v945, %v944
    %v995 = vpack.c.bf16 %v947, %v946
    %v996 = vpack.c.bf16 %v949, %v948
    %v997 = vpack.c.bf16 %v951, %v950
    %v998 = vpack.c.bf16 %v953, %v952
    %v999 = vpack.c.bf16 %v955, %v954
    %v1000 = vpack.c.bf16 %v957, %v956
    %v1001 = vpack.c.bf16 %v959, %v958
    %v1002 = vpack.c.bf16 %v961, %v960
    %v1003 = vpack.c.bf16 %v963, %v962
    %v1004 = vpack.c.bf16 %v965, %v964
    %v1005 = vpack.c.bf16 %v967, %v966
    %v1006 = vpack.c.bf16 %v969, %v968
    %v1007 = vpack.c.bf16 %v971, %v970
    %v1008 = vpack.c.bf16 %v973, %v972
    %v1009 = vpack.c.bf16 %v975, %v974
    %v1010 = vpack.c.bf16 %v977, %v976
    %v1011 = vpack.c.bf16 %v979, %v978
    %v1012 = vld [vmem:[#allocation5] sm:$0xff]
    %v1013 = vld [vmem:[#allocation5 + $0x8] sm:$0xff]
    %v1014 = vld [vmem:[#allocation5 + $0x10] sm:$0xff]
    %v1015 = vld [vmem:[#allocation5 + $0x18] sm:$0xff]
    %v1016 = vld [vmem:[#allocation5 + $0x20] sm:$0xff]
    %v1017 = vld [vmem:[#allocation5 + $0x28] sm:$0xff]
    %v1018 = vld [vmem:[#allocation5 + $0x30] sm:$0xff]
    %v1019 = vld [vmem:[#allocation5 + $0x38] sm:$0xff]
    %v1020 = vld [vmem:[#allocation5 + $0x40] sm:$0xff]
    %v1021 = vld [vmem:[#allocation5 + $0x48] sm:$0xff]
    %v1022 = vld [vmem:[#allocation5 + $0x50] sm:$0xff]
    %v1023 = vld [vmem:[#allocation5 + $0x58] sm:$0xff]
    %v1024 = vld [vmem:[#allocation5 + $0x60] sm:$0xff]
    %v1025 = vld [vmem:[#allocation5 + $0x68] sm:$0xff]
    %v1026 = vld [vmem:[#allocation5 + $0x70] sm:$0xff]
    %v1027 = vld [vmem:[#allocation5 + $0x78] sm:$0xff]
    %v1028 = vld [vmem:[#allocation5 + $0x80] sm:$0xff]
    %v1029 = vld [vmem:[#allocation5 + $0x88] sm:$0xff]
    %v1030 = vld [vmem:[#allocation5 + $0x90] sm:$0xff]
    %v1031 = vld [vmem:[#allocation5 + $0x98] sm:$0xff]
    %v1032 = vld [vmem:[#allocation5 + $0xa0] sm:$0xff]
    %v1033 = vld [vmem:[#allocation5 + $0xa8] sm:$0xff]
    %v1034 = vld [vmem:[#allocation5 + $0xb0] sm:$0xff]
    %v1035 = vld [vmem:[#allocation5 + $0xb8] sm:$0xff]
    %v1036 = vld [vmem:[#allocation5 + $0xc0] sm:$0xff]
    %v1037 = vld [vmem:[#allocation5 + $0xc8] sm:$0xff]
    %v1038 = vld [vmem:[#allocation5 + $0xd0] sm:$0xff]
    %v1039 = vld [vmem:[#allocation5 + $0xd8] sm:$0xff]
    %v1040 = vld [vmem:[#allocation5 + $0xe0] sm:$0xff]
    %v1041 = vld [vmem:[#allocation5 + $0xe8] sm:$0xff]
    %v1042 = vld [vmem:[#allocation5 + $0xf0] sm:$0xff]
    %v1043 = vld [vmem:[#allocation5 + $0xf8] sm:$0xff]
    %v1044 = vld [vmem:[%s4] sm:$0xf]
    %v1046 = vlaneseq
    %v1047 = vshrl.u32 %v1046, 7
    %v1048 = vsub.s32 0, %v1047
    %v1049 = vrot.slane %v1044, %v1048
    %v1050 = vlaneseq
    %v1051 = vshrl.u32 %v1050, 7
    %v1052 = vsub.s32 1, %v1051
    %v1053 = vrot.slane %v1044, %v1052
    %v1054 = vlaneseq
    %v1055 = vshrl.u32 %v1054, 7
    %v1056 = vsub.s32 2, %v1055
    %v1057 = vrot.slane %v1044, %v1056
    %v1058 = vlaneseq
    %v1059 = vshrl.u32 %v1058, 7
    %v1060 = vsub.s32 3, %v1059
    %v1061 = vrot.slane %v1044, %v1060
    %v1098 = vunpack.c.l.b16 %v1012
    %v1099 = vunpack.c.h.b16 %v1012
    %v1100 = vunpack.c.l.b16 %v1013
    %v1101 = vunpack.c.h.b16 %v1013
    %v1102 = vunpack.c.l.b16 %v1014
    %v1103 = vunpack.c.h.b16 %v1014
    %v1104 = vunpack.c.l.b16 %v1015
    %v1105 = vunpack.c.h.b16 %v1015
    %v1106 = vunpack.c.l.b16 %v1016
    %v1107 = vunpack.c.h.b16 %v1016
    %v1108 = vunpack.c.l.b16 %v1017
    %v1109 = vunpack.c.h.b16 %v1017
    %v1110 = vunpack.c.l.b16 %v1018
    %v1111 = vunpack.c.h.b16 %v1018
    %v1112 = vunpack.c.l.b16 %v1019
    %v1113 = vunpack.c.h.b16 %v1019
    %v1114 = vunpack.c.l.b16 %v1020
    %v1115 = vunpack.c.h.b16 %v1020
    %v1116 = vunpack.c.l.b16 %v1021
    %v1117 = vunpack.c.h.b16 %v1021
    %v1118 = vunpack.c.l.b16 %v1022
    %v1119 = vunpack.c.h.b16 %v1022
    %v1120 = vunpack.c.l.b16 %v1023
    %v1121 = vunpack.c.h.b16 %v1023
    %v1122 = vunpack.c.l.b16 %v1024
    %v1123 = vunpack.c.h.b16 %v1024
    %v1124 = vunpack.c.l.b16 %v1025
    %v1125 = vunpack.c.h.b16 %v1025
    %v1126 = vunpack.c.l.b16 %v1026
    %v1127 = vunpack.c.h.b16 %v1026
    %v1128 = vunpack.c.l.b16 %v1027
    %v1129 = vunpack.c.h.b16 %v1027
    %v1130 = vunpack.c.l.b16 %v1028
    %v1131 = vunpack.c.h.b16 %v1028
    %v1132 = vunpack.c.l.b16 %v1029
    %v1133 = vunpack.c.h.b16 %v1029
    %v1134 = vunpack.c.l.b16 %v1030
    %v1135 = vunpack.c.h.b16 %v1030
    %v1136 = vunpack.c.l.b16 %v1031
    %v1137 = vunpack.c.h.b16 %v1031
    %v1138 = vunpack.c.l.b16 %v1032
    %v1139 = vunpack.c.h.b16 %v1032
    %v1140 = vunpack.c.l.b16 %v1033
    %v1141 = vunpack.c.h.b16 %v1033
    %v1142 = vunpack.c.l.b16 %v1034
    %v1143 = vunpack.c.h.b16 %v1034
    %v1144 = vunpack.c.l.b16 %v1035
    %v1145 = vunpack.c.h.b16 %v1035
    %v1146 = vunpack.c.l.b16 %v1036
    %v1147 = vunpack.c.h.b16 %v1036
    %v1148 = vunpack.c.l.b16 %v1037
    %v1149 = vunpack.c.h.b16 %v1037
    %v1150 = vunpack.c.l.b16 %v1038
    %v1151 = vunpack.c.h.b16 %v1038
    %v1152 = vunpack.c.l.b16 %v1039
    %v1153 = vunpack.c.h.b16 %v1039
    %v1154 = vunpack.c.l.b16 %v1040
    %v1155 = vunpack.c.h.b16 %v1040
    %v1156 = vunpack.c.l.b16 %v1041
    %v1157 = vunpack.c.h.b16 %v1041
    %v1158 = vunpack.c.l.b16 %v1042
    %v1159 = vunpack.c.h.b16 %v1042
    %v1160 = vunpack.c.l.b16 %v1043
    %v1161 = vunpack.c.h.b16 %v1043
    %v1162 = vpack.c.b16 %v1102, %v1098
    %v1163 = vpack.c.b16 %v1103, %v1099
    %v1164 = vpack.c.b16 %v1104, %v1100
    %v1165 = vpack.c.b16 %v1105, %v1101
    %v1166 = vpack.c.b16 %v1110, %v1106
    %v1167 = vpack.c.b16 %v1111, %v1107
    %v1168 = vpack.c.b16 %v1112, %v1108
    %v1169 = vpack.c.b16 %v1113, %v1109
    %v1170 = vpack.c.b16 %v1118, %v1114
    %v1171 = vpack.c.b16 %v1119, %v1115
    %v1172 = vpack.c.b16 %v1120, %v1116
    %v1173 = vpack.c.b16 %v1121, %v1117
    %v1174 = vpack.c.b16 %v1126, %v1122
    %v1175 = vpack.c.b16 %v1127, %v1123
    %v1176 = vpack.c.b16 %v1128, %v1124
    %v1177 = vpack.c.b16 %v1129, %v1125
    %v1178 = vpack.c.b16 %v1134, %v1130
    %v1179 = vpack.c.b16 %v1135, %v1131
    %v1180 = vpack.c.b16 %v1136, %v1132
    %v1181 = vpack.c.b16 %v1137, %v1133
    %v1182 = vpack.c.b16 %v1142, %v1138
    %v1183 = vpack.c.b16 %v1143, %v1139
    %v1184 = vpack.c.b16 %v1144, %v1140
    %v1185 = vpack.c.b16 %v1145, %v1141
    %v1186 = vpack.c.b16 %v1150, %v1146
    %v1187 = vpack.c.b16 %v1151, %v1147
    %v1188 = vpack.c.b16 %v1152, %v1148
    %v1189 = vpack.c.b16 %v1153, %v1149
    %v1190 = vpack.c.b16 %v1158, %v1154
    %v1191 = vpack.c.b16 %v1159, %v1155
    %v1192 = vpack.c.b16 %v1160, %v1156
    %v1193 = vpack.c.b16 %v1161, %v1157
    %1226 = vmatprep.subr.bf16.mxu0 %v1191
    %1227 = vmatpush1.bf16.msra.mxu0 %v1190
    %1228 = vmatprep.subr.bf16.mxu0 %v1187
    %1229 = vmatpush1.bf16.msra.mxu0 %v1186
    %1230 = vmatprep.subr.bf16.mxu0 %v1183
    %1231 = vmatpush1.bf16.msra.mxu0 %v1182
    %1232 = vmatprep.subr.bf16.mxu0 %v1179
    %1233 = vmatpush1.bf16.msra.mxu0 %v1178
    %1234 = vmatprep.subr.bf16.mxu0 %v1175
    %1235 = vmatpush1.bf16.msra.mxu0 %v1174
    %1236 = vmatprep.subr.bf16.mxu0 %v1171
    %1237 = vmatpush1.bf16.msra.mxu0 %v1170
    %1238 = vmatprep.subr.bf16.mxu0 %v1167
    %1239 = vmatpush1.bf16.msra.mxu0 %v1166
    %1240 = vmatprep.subr.bf16.mxu0 %v1163
    %1241 = vmatpush1.bf16.msra.mxu0 %v1162
    %1242 = vmatprep.subr.bf16.mxu0 0
    %1243 = vmatpush2.bf16.msra.mxu0 0
    %1244 = vmatprep.subr.bf16.mxu0 0
    %1245 = vmatpush2.bf16.msra.mxu0 0
    %1246 = vmatprep.subr.bf16.mxu0 0
    %1247 = vmatpush2.bf16.msra.mxu0 0
    %1248 = vmatprep.subr.bf16.mxu0 0
    %1249 = vmatpush2.bf16.msra.mxu0 0
    %1250 = vmatprep.subr.bf16.mxu0 0
    %1251 = vmatpush2.bf16.msra.mxu0 0
    %1252 = vmatprep.subr.bf16.mxu0 0
    %1253 = vmatpush2.bf16.msra.mxu0 0
    %1254 = vmatprep.subr.bf16.mxu0 0
    %1255 = vmatpush2.bf16.msra.mxu0 0
    %1256 = vmatprep.subr.bf16.mxu0 0
    %1257 = vmatpush2.bf16.msra.mxu0 0
    %1258 = vmatprep.mubr.bf16.mxu0 0
    %1259 = vmatmul.mubr.bf16.gmra.mxu0 %v980
    %v1260 = vpop.f32.mrf.mxu0
    %v1261 = vadd.f32 %v1049, %v1260
    %v1262 = vpop.f32.mrf.mxu0
    %v1263 = vadd.f32 %v1053, %v1262
    %v1264 = vpop.f32.mrf.mxu0
    %v1265 = vadd.f32 %v1049, %v1264
    %v1266 = vpop.f32.mrf.mxu0
    %v1267 = vadd.f32 %v1053, %v1266
    %1268 = vmatprep.mubr.bf16.mxu0 0
    %1269 = vmatmul.mubr.bf16.gmra.mxu0 %v981
    %v1270 = vpop.f32.mrf.mxu0
    %v1271 = vadd.f32 %v1049, %v1270
    %v1272 = vpop.f32.mrf.mxu0
    %v1273 = vadd.f32 %v1053, %v1272
    %v1274 = vpop.f32.mrf.mxu0
    %v1275 = vadd.f32 %v1049, %v1274
    %v1276 = vpop.f32.mrf.mxu0
    %v1277 = vadd.f32 %v1053, %v1276
    %1278 = vmatprep.mubr.bf16.mxu0 0
    %1279 = vmatmul.mubr.bf16.gmra.mxu0 %v982
    %v1280 = vpop.f32.mrf.mxu0
    %v1281 = vadd.f32 %v1049, %v1280
    %v1282 = vpop.f32.mrf.mxu0
    %v1283 = vadd.f32 %v1053, %v1282
    %v1284 = vpop.f32.mrf.mxu0
    %v1285 = vadd.f32 %v1049, %v1284
    %v1286 = vpop.f32.mrf.mxu0
    %v1287 = vadd.f32 %v1053, %v1286
    %1288 = vmatprep.mubr.bf16.mxu0 0
    %1289 = vmatmul.mubr.bf16.gmra.mxu0 %v983
    %v1290 = vpop.f32.mrf.mxu0
    %v1291 = vadd.f32 %v1049, %v1290
    %v1292 = vpop.f32.mrf.mxu0
    %v1293 = vadd.f32 %v1053, %v1292
    %v1294 = vpop.f32.mrf.mxu0
    %v1295 = vadd.f32 %v1049, %v1294
    %v1296 = vpop.f32.mrf.mxu0
    %v1297 = vadd.f32 %v1053, %v1296
    %1298 = vmatprep.mubr.bf16.mxu0 0
    %1299 = vmatmul.mubr.bf16.gmra.mxu0 %v984
    %v1300 = vpop.f32.mrf.mxu0
    %v1301 = vadd.f32 %v1049, %v1300
    %v1302 = vpop.f32.mrf.mxu0
    %v1303 = vadd.f32 %v1053, %v1302
    %v1304 = vpop.f32.mrf.mxu0
    %v1305 = vadd.f32 %v1049, %v1304
    %v1306 = vpop.f32.mrf.mxu0
    %v1307 = vadd.f32 %v1053, %v1306
    %1308 = vmatprep.mubr.bf16.mxu0 0
    %1309 = vmatmul.mubr.bf16.gmra.mxu0 %v985
    %v1310 = vpop.f32.mrf.mxu0
    %v1311 = vadd.f32 %v1049, %v1310
    %v1312 = vpop.f32.mrf.mxu0
    %v1313 = vadd.f32 %v1053, %v1312
    %v1314 = vpop.f32.mrf.mxu0
    %v1315 = vadd.f32 %v1049, %v1314
    %v1316 = vpop.f32.mrf.mxu0
    %v1317 = vadd.f32 %v1053, %v1316
    %1318 = vmatprep.mubr.bf16.mxu0 0
    %1319 = vmatmul.mubr.bf16.gmra.mxu0 %v986
    %v1320 = vpop.f32.mrf.mxu0
    %v1321 = vadd.f32 %v1049, %v1320
    %v1322 = vpop.f32.mrf.mxu0
    %v1323 = vadd.f32 %v1053, %v1322
    %v1324 = vpop.f32.mrf.mxu0
    %v1325 = vadd.f32 %v1049, %v1324
    %v1326 = vpop.f32.mrf.mxu0
    %v1327 = vadd.f32 %v1053, %v1326
    %1328 = vmatprep.mubr.bf16.mxu0 0
    %1329 = vmatmul.mubr.bf16.gmra.mxu0 %v987
    %v1330 = vpop.f32.mrf.mxu0
    %v1331 = vadd.f32 %v1049, %v1330
    %v1332 = vpop.f32.mrf.mxu0
    %v1333 = vadd.f32 %v1053, %v1332
    %v1334 = vpop.f32.mrf.mxu0
    %v1335 = vadd.f32 %v1049, %v1334
    %v1336 = vpop.f32.mrf.mxu0
    %v1337 = vadd.f32 %v1053, %v1336
    %1338 = vmatprep.mubr.bf16.mxu0 0
    %1339 = vmatmul.mubr.bf16.gmra.mxu0 %v988
    %v1340 = vpop.f32.mrf.mxu0
    %v1341 = vadd.f32 %v1049, %v1340
    %v1342 = vpop.f32.mrf.mxu0
    %v1343 = vadd.f32 %v1053, %v1342
    %v1344 = vpop.f32.mrf.mxu0
    %v1345 = vadd.f32 %v1049, %v1344
    %v1346 = vpop.f32.mrf.mxu0
    %v1347 = vadd.f32 %v1053, %v1346
    %1348 = vmatprep.mubr.bf16.mxu0 0
    %1349 = vmatmul.mubr.bf16.gmra.mxu0 %v989
    %v1350 = vpop.f32.mrf.mxu0
    %v1351 = vadd.f32 %v1049, %v1350
    %v1352 = vpop.f32.mrf.mxu0
    %v1353 = vadd.f32 %v1053, %v1352
    %v1354 = vpop.f32.mrf.mxu0
    %v1355 = vadd.f32 %v1049, %v1354
    %v1356 = vpop.f32.mrf.mxu0
    %v1357 = vadd.f32 %v1053, %v1356
    %1358 = vmatprep.mubr.bf16.mxu0 0
    %1359 = vmatmul.mubr.bf16.gmra.mxu0 %v990
    %v1360 = vpop.f32.mrf.mxu0
    %v1361 = vadd.f32 %v1049, %v1360
    %v1362 = vpop.f32.mrf.mxu0
    %v1363 = vadd.f32 %v1053, %v1362
    %v1364 = vpop.f32.mrf.mxu0
    %v1365 = vadd.f32 %v1049, %v1364
    %v1366 = vpop.f32.mrf.mxu0
    %v1367 = vadd.f32 %v1053, %v1366
    %1368 = vmatprep.mubr.bf16.mxu0 0
    %1369 = vmatmul.mubr.bf16.gmra.mxu0 %v991
    %v1370 = vpop.f32.mrf.mxu0
    %v1371 = vadd.f32 %v1049, %v1370
    %v1372 = vpop.f32.mrf.mxu0
    %v1373 = vadd.f32 %v1053, %v1372
    %v1374 = vpop.f32.mrf.mxu0
    %v1375 = vadd.f32 %v1049, %v1374
    %v1376 = vpop.f32.mrf.mxu0
    %v1377 = vadd.f32 %v1053, %v1376
    %1378 = vmatprep.mubr.bf16.mxu0 0
    %1379 = vmatmul.mubr.bf16.gmra.mxu0 %v992
    %v1380 = vpop.f32.mrf.mxu0
    %v1381 = vadd.f32 %v1049, %v1380
    %v1382 = vpop.f32.mrf.mxu0
    %v1383 = vadd.f32 %v1053, %v1382
    %v1384 = vpop.f32.mrf.mxu0
    %v1385 = vadd.f32 %v1049, %v1384
    %v1386 = vpop.f32.mrf.mxu0
    %v1387 = vadd.f32 %v1053, %v1386
    %1388 = vmatprep.mubr.bf16.mxu0 0
    %1389 = vmatmul.mubr.bf16.gmra.mxu0 %v993
    %v1390 = vpop.f32.mrf.mxu0
    %v1391 = vadd.f32 %v1049, %v1390
    %v1392 = vpop.f32.mrf.mxu0
    %v1393 = vadd.f32 %v1053, %v1392
    %v1394 = vpop.f32.mrf.mxu0
    %v1395 = vadd.f32 %v1049, %v1394
    %v1396 = vpop.f32.mrf.mxu0
    %v1397 = vadd.f32 %v1053, %v1396
    %1398 = vmatprep.mubr.bf16.mxu0 0
    %1399 = vmatmul.mubr.bf16.gmra.mxu0 %v994
    %v1400 = vpop.f32.mrf.mxu0
    %v1401 = vadd.f32 %v1049, %v1400
    %v1402 = vpop.f32.mrf.mxu0
    %v1403 = vadd.f32 %v1053, %v1402
    %v1404 = vpop.f32.mrf.mxu0
    %v1405 = vadd.f32 %v1049, %v1404
    %v1406 = vpop.f32.mrf.mxu0
    %v1407 = vadd.f32 %v1053, %v1406
    %1408 = vmatprep.mubr.bf16.mxu0 0
    %1409 = vmatmul.mubr.bf16.gmra.mxu0 %v995
    %v1410 = vpop.f32.mrf.mxu0
    %v1411 = vadd.f32 %v1049, %v1410
    %v1412 = vpop.f32.mrf.mxu0
    %v1413 = vadd.f32 %v1053, %v1412
    %v1414 = vpop.f32.mrf.mxu0
    %v1415 = vadd.f32 %v1049, %v1414
    %v1416 = vpop.f32.mrf.mxu0
    %v1417 = vadd.f32 %v1053, %v1416
    %1418 = vmatprep.mubr.bf16.mxu0 0
    %1419 = vmatmul.mubr.bf16.gmra.mxu0 %v996
    %v1420 = vpop.f32.mrf.mxu0
    %v1421 = vadd.f32 %v1049, %v1420
    %v1422 = vpop.f32.mrf.mxu0
    %v1423 = vadd.f32 %v1053, %v1422
    %v1424 = vpop.f32.mrf.mxu0
    %v1425 = vadd.f32 %v1049, %v1424
    %v1426 = vpop.f32.mrf.mxu0
    %v1427 = vadd.f32 %v1053, %v1426
    %1428 = vmatprep.mubr.bf16.mxu0 0
    %1429 = vmatmul.mubr.bf16.gmra.mxu0 %v997
    %v1430 = vpop.f32.mrf.mxu0
    %v1431 = vadd.f32 %v1049, %v1430
    %v1432 = vpop.f32.mrf.mxu0
    %v1433 = vadd.f32 %v1053, %v1432
    %v1434 = vpop.f32.mrf.mxu0
    %v1435 = vadd.f32 %v1049, %v1434
    %v1436 = vpop.f32.mrf.mxu0
    %v1437 = vadd.f32 %v1053, %v1436
    %1438 = vmatprep.mubr.bf16.mxu0 0
    %1439 = vmatmul.mubr.bf16.gmra.mxu0 %v998
    %v1440 = vpop.f32.mrf.mxu0
    %v1441 = vadd.f32 %v1049, %v1440
    %v1442 = vpop.f32.mrf.mxu0
    %v1443 = vadd.f32 %v1053, %v1442
    %v1444 = vpop.f32.mrf.mxu0
    %v1445 = vadd.f32 %v1049, %v1444
    %v1446 = vpop.f32.mrf.mxu0
    %v1447 = vadd.f32 %v1053, %v1446
    %1448 = vmatprep.mubr.bf16.mxu0 0
    %1449 = vmatmul.mubr.bf16.gmra.mxu0 %v999
    %v1450 = vpop.f32.mrf.mxu0
    %v1451 = vadd.f32 %v1049, %v1450
    %v1452 = vpop.f32.mrf.mxu0
    %v1453 = vadd.f32 %v1053, %v1452
    %v1454 = vpop.f32.mrf.mxu0
    %v1455 = vadd.f32 %v1049, %v1454
    %v1456 = vpop.f32.mrf.mxu0
    %v1457 = vadd.f32 %v1053, %v1456
    %1458 = vmatprep.mubr.bf16.mxu0 0
    %1459 = vmatmul.mubr.bf16.gmra.mxu0 %v1000
    %v1460 = vpop.f32.mrf.mxu0
    %v1461 = vadd.f32 %v1049, %v1460
    %v1462 = vpop.f32.mrf.mxu0
    %v1463 = vadd.f32 %v1053, %v1462
    %v1464 = vpop.f32.mrf.mxu0
    %v1465 = vadd.f32 %v1049, %v1464
    %v1466 = vpop.f32.mrf.mxu0
    %v1467 = vadd.f32 %v1053, %v1466
    %1468 = vmatprep.mubr.bf16.mxu0 0
    %1469 = vmatmul.mubr.bf16.gmra.mxu0 %v1001
    %v1470 = vpop.f32.mrf.mxu0
    %v1471 = vadd.f32 %v1049, %v1470
    %v1472 = vpop.f32.mrf.mxu0
    %v1473 = vadd.f32 %v1053, %v1472
    %v1474 = vpop.f32.mrf.mxu0
    %v1475 = vadd.f32 %v1049, %v1474
    %v1476 = vpop.f32.mrf.mxu0
    %v1477 = vadd.f32 %v1053, %v1476
    %1478 = vmatprep.mubr.bf16.mxu0 0
    %1479 = vmatmul.mubr.bf16.gmra.mxu0 %v1002
    %v1480 = vpop.f32.mrf.mxu0
    %v1481 = vadd.f32 %v1049, %v1480
    %v1482 = vpop.f32.mrf.mxu0
    %v1483 = vadd.f32 %v1053, %v1482
    %v1484 = vpop.f32.mrf.mxu0
    %v1485 = vadd.f32 %v1049, %v1484
    %v1486 = vpop.f32.mrf.mxu0
    %v1487 = vadd.f32 %v1053, %v1486
    %1488 = vmatprep.mubr.bf16.mxu0 0
    %1489 = vmatmul.mubr.bf16.gmra.mxu0 %v1003
    %v1490 = vpop.f32.mrf.mxu0
    %v1491 = vadd.f32 %v1049, %v1490
    %v1492 = vpop.f32.mrf.mxu0
    %v1493 = vadd.f32 %v1053, %v1492
    %v1494 = vpop.f32.mrf.mxu0
    %v1495 = vadd.f32 %v1049, %v1494
    %v1496 = vpop.f32.mrf.mxu0
    %v1497 = vadd.f32 %v1053, %v1496
    %1498 = vmatprep.mubr.bf16.mxu0 0
    %1499 = vmatmul.mubr.bf16.gmra.mxu0 %v1004
    %v1500 = vpop.f32.mrf.mxu0
    %v1501 = vadd.f32 %v1049, %v1500
    %v1502 = vpop.f32.mrf.mxu0
    %v1503 = vadd.f32 %v1053, %v1502
    %v1504 = vpop.f32.mrf.mxu0
    %v1505 = vadd.f32 %v1049, %v1504
    %v1506 = vpop.f32.mrf.mxu0
    %v1507 = vadd.f32 %v1053, %v1506
    %1508 = vmatprep.mubr.bf16.mxu0 0
    %1509 = vmatmul.mubr.bf16.gmra.mxu0 %v1005
    %v1510 = vpop.f32.mrf.mxu0
    %v1511 = vadd.f32 %v1049, %v1510
    %v1512 = vpop.f32.mrf.mxu0
    %v1513 = vadd.f32 %v1053, %v1512
    %v1514 = vpop.f32.mrf.mxu0
    %v1515 = vadd.f32 %v1049, %v1514
    %v1516 = vpop.f32.mrf.mxu0
    %v1517 = vadd.f32 %v1053, %v1516
    %1518 = vmatprep.mubr.bf16.mxu0 0
    %1519 = vmatmul.mubr.bf16.gmra.mxu0 %v1006
    %v1520 = vpop.f32.mrf.mxu0
    %v1521 = vadd.f32 %v1049, %v1520
    %v1522 = vpop.f32.mrf.mxu0
    %v1523 = vadd.f32 %v1053, %v1522
    %v1524 = vpop.f32.mrf.mxu0
    %v1525 = vadd.f32 %v1049, %v1524
    %v1526 = vpop.f32.mrf.mxu0
    %v1527 = vadd.f32 %v1053, %v1526
    %1528 = vmatprep.mubr.bf16.mxu0 0
    %1529 = vmatmul.mubr.bf16.gmra.mxu0 %v1007
    %v1530 = vpop.f32.mrf.mxu0
    %v1531 = vadd.f32 %v1049, %v1530
    %v1532 = vpop.f32.mrf.mxu0
    %v1533 = vadd.f32 %v1053, %v1532
    %v1534 = vpop.f32.mrf.mxu0
    %v1535 = vadd.f32 %v1049, %v1534
    %v1536 = vpop.f32.mrf.mxu0
    %v1537 = vadd.f32 %v1053, %v1536
    %1538 = vmatprep.mubr.bf16.mxu0 0
    %1539 = vmatmul.mubr.bf16.gmra.mxu0 %v1008
    %v1540 = vpop.f32.mrf.mxu0
    %v1541 = vadd.f32 %v1049, %v1540
    %v1542 = vpop.f32.mrf.mxu0
    %v1543 = vadd.f32 %v1053, %v1542
    %v1544 = vpop.f32.mrf.mxu0
    %v1545 = vadd.f32 %v1049, %v1544
    %v1546 = vpop.f32.mrf.mxu0
    %v1547 = vadd.f32 %v1053, %v1546
    %1548 = vmatprep.mubr.bf16.mxu0 0
    %1549 = vmatmul.mubr.bf16.gmra.mxu0 %v1009
    %v1550 = vpop.f32.mrf.mxu0
    %v1551 = vadd.f32 %v1049, %v1550
    %v1552 = vpop.f32.mrf.mxu0
    %v1553 = vadd.f32 %v1053, %v1552
    %v1554 = vpop.f32.mrf.mxu0
    %v1555 = vadd.f32 %v1049, %v1554
    %v1556 = vpop.f32.mrf.mxu0
    %v1557 = vadd.f32 %v1053, %v1556
    %1558 = vmatprep.mubr.bf16.mxu0 0
    %1559 = vmatmul.mubr.bf16.gmra.mxu0 %v1010
    %v1560 = vpop.f32.mrf.mxu0
    %v1561 = vadd.f32 %v1049, %v1560
    %v1562 = vpop.f32.mrf.mxu0
    %v1563 = vadd.f32 %v1053, %v1562
    %v1564 = vpop.f32.mrf.mxu0
    %v1565 = vadd.f32 %v1049, %v1564
    %v1566 = vpop.f32.mrf.mxu0
    %v1567 = vadd.f32 %v1053, %v1566
    %1568 = vmatprep.mubr.bf16.mxu0 0
    %1569 = vmatmul.mubr.bf16.gmra.mxu0 %v1011
    %v1570 = vpop.f32.mrf.mxu0
    %v1571 = vadd.f32 %v1049, %v1570
    %v1572 = vpop.f32.mrf.mxu0
    %v1573 = vadd.f32 %v1053, %v1572
    %v1574 = vpop.f32.mrf.mxu0
    %v1575 = vadd.f32 %v1049, %v1574
    %v1576 = vpop.f32.mrf.mxu0
    %v1577 = vadd.f32 %v1053, %v1576
    %1578 = vdwg.mxu0
    %1579 = vmatprep.subr.bf16.mxu0 %v1193
    %1580 = vmatpush1.bf16.msra.mxu0 %v1192
    %1581 = vmatprep.subr.bf16.mxu0 %v1189
    %1582 = vmatpush1.bf16.msra.mxu0 %v1188
    %1583 = vmatprep.subr.bf16.mxu0 %v1185
    %1584 = vmatpush1.bf16.msra.mxu0 %v1184
    %1585 = vmatprep.subr.bf16.mxu0 %v1181
    %1586 = vmatpush1.bf16.msra.mxu0 %v1180
    %1587 = vmatprep.subr.bf16.mxu0 %v1177
    %1588 = vmatpush1.bf16.msra.mxu0 %v1176
    %1589 = vmatprep.subr.bf16.mxu0 %v1173
    %1590 = vmatpush1.bf16.msra.mxu0 %v1172
    %1591 = vmatprep.subr.bf16.mxu0 %v1169
    %1592 = vmatpush1.bf16.msra.mxu0 %v1168
    %1593 = vmatprep.subr.bf16.mxu0 %v1165
    %1594 = vmatpush1.bf16.msra.mxu0 %v1164
    %1595 = vmatprep.subr.bf16.mxu0 0
    %1596 = vmatpush2.bf16.msra.mxu0 0
    %1597 = vmatprep.subr.bf16.mxu0 0
    %1598 = vmatpush2.bf16.msra.mxu0 0
    %1599 = vmatprep.subr.bf16.mxu0 0
    %1600 = vmatpush2.bf16.msra.mxu0 0
    %1601 = vmatprep.subr.bf16.mxu0 0
    %1602 = vmatpush2.bf16.msra.mxu0 0
    %1603 = vmatprep.subr.bf16.mxu0 0
    %1604 = vmatpush2.bf16.msra.mxu0 0
    %1605 = vmatprep.subr.bf16.mxu0 0
    %1606 = vmatpush2.bf16.msra.mxu0 0
    %1607 = vmatprep.subr.bf16.mxu0 0
    %1608 = vmatpush2.bf16.msra.mxu0 0
    %1609 = vmatprep.subr.bf16.mxu0 0
    %1610 = vmatpush2.bf16.msra.mxu0 0
    %1611 = vmatprep.mubr.bf16.mxu0 0
    %1612 = vmatmul.mubr.bf16.gmra.mxu0 %v980
    %v1613 = vpop.f32.mrf.mxu0
    %v1614 = vadd.f32 %v1057, %v1613
    %v1615 = vpop.f32.mrf.mxu0
    %v1616 = vadd.f32 %v1061, %v1615
    %v1617 = vpop.f32.mrf.mxu0
    %v1618 = vadd.f32 %v1057, %v1617
    %v1619 = vpop.f32.mrf.mxu0
    %v1620 = vadd.f32 %v1061, %v1619
    %1621 = vmatprep.mubr.bf16.mxu0 0
    %1622 = vmatmul.mubr.bf16.gmra.mxu0 %v981
    %v1623 = vpop.f32.mrf.mxu0
    %v1624 = vadd.f32 %v1057, %v1623
    %v1625 = vpop.f32.mrf.mxu0
    %v1626 = vadd.f32 %v1061, %v1625
    %v1627 = vpop.f32.mrf.mxu0
    %v1628 = vadd.f32 %v1057, %v1627
    %v1629 = vpop.f32.mrf.mxu0
    %v1630 = vadd.f32 %v1061, %v1629
    %1631 = vmatprep.mubr.bf16.mxu0 0
    %1632 = vmatmul.mubr.bf16.gmra.mxu0 %v982
    %v1633 = vpop.f32.mrf.mxu0
    %v1634 = vadd.f32 %v1057, %v1633
    %v1635 = vpop.f32.mrf.mxu0
    %v1636 = vadd.f32 %v1061, %v1635
    %v1637 = vpop.f32.mrf.mxu0
    %v1638 = vadd.f32 %v1057, %v1637
    %v1639 = vpop.f32.mrf.mxu0
    %v1640 = vadd.f32 %v1061, %v1639
    %1641 = vmatprep.mubr.bf16.mxu0 0
    %1642 = vmatmul.mubr.bf16.gmra.mxu0 %v983
    %v1643 = vpop.f32.mrf.mxu0
    %v1644 = vadd.f32 %v1057, %v1643
    %v1645 = vpop.f32.mrf.mxu0
    %v1646 = vadd.f32 %v1061, %v1645
    %v1647 = vpop.f32.mrf.mxu0
    %v1648 = vadd.f32 %v1057, %v1647
    %v1649 = vpop.f32.mrf.mxu0
    %v1650 = vadd.f32 %v1061, %v1649
    %1651 = vmatprep.mubr.bf16.mxu0 0
    %1652 = vmatmul.mubr.bf16.gmra.mxu0 %v984
    %v1653 = vpop.f32.mrf.mxu0
    %v1654 = vadd.f32 %v1057, %v1653
    %v1655 = vpop.f32.mrf.mxu0
    %v1656 = vadd.f32 %v1061, %v1655
    %v1657 = vpop.f32.mrf.mxu0
    %v1658 = vadd.f32 %v1057, %v1657
    %v1659 = vpop.f32.mrf.mxu0
    %v1660 = vadd.f32 %v1061, %v1659
    %1661 = vmatprep.mubr.bf16.mxu0 0
    %1662 = vmatmul.mubr.bf16.gmra.mxu0 %v985
    %v1663 = vpop.f32.mrf.mxu0
    %v1664 = vadd.f32 %v1057, %v1663
    %v1665 = vpop.f32.mrf.mxu0
    %v1666 = vadd.f32 %v1061, %v1665
    %v1667 = vpop.f32.mrf.mxu0
    %v1668 = vadd.f32 %v1057, %v1667
    %v1669 = vpop.f32.mrf.mxu0
    %v1670 = vadd.f32 %v1061, %v1669
    %1671 = vmatprep.mubr.bf16.mxu0 0
    %1672 = vmatmul.mubr.bf16.gmra.mxu0 %v986
    %v1673 = vpop.f32.mrf.mxu0
    %v1674 = vadd.f32 %v1057, %v1673
    %v1675 = vpop.f32.mrf.mxu0
    %v1676 = vadd.f32 %v1061, %v1675
    %v1677 = vpop.f32.mrf.mxu0
    %v1678 = vadd.f32 %v1057, %v1677
    %v1679 = vpop.f32.mrf.mxu0
    %v1680 = vadd.f32 %v1061, %v1679
    %1681 = vmatprep.mubr.bf16.mxu0 0
    %1682 = vmatmul.mubr.bf16.gmra.mxu0 %v987
    %v1683 = vpop.f32.mrf.mxu0
    %v1684 = vadd.f32 %v1057, %v1683
    %v1685 = vpop.f32.mrf.mxu0
    %v1686 = vadd.f32 %v1061, %v1685
    %v1687 = vpop.f32.mrf.mxu0
    %v1688 = vadd.f32 %v1057, %v1687
    %v1689 = vpop.f32.mrf.mxu0
    %v1690 = vadd.f32 %v1061, %v1689
    %1691 = vmatprep.mubr.bf16.mxu0 0
    %1692 = vmatmul.mubr.bf16.gmra.mxu0 %v988
    %v1693 = vpop.f32.mrf.mxu0
    %v1694 = vadd.f32 %v1057, %v1693
    %v1695 = vpop.f32.mrf.mxu0
    %v1696 = vadd.f32 %v1061, %v1695
    %v1697 = vpop.f32.mrf.mxu0
    %v1698 = vadd.f32 %v1057, %v1697
    %v1699 = vpop.f32.mrf.mxu0
    %v1700 = vadd.f32 %v1061, %v1699
    %1701 = vmatprep.mubr.bf16.mxu0 0
    %1702 = vmatmul.mubr.bf16.gmra.mxu0 %v989
    %v1703 = vpop.f32.mrf.mxu0
    %v1704 = vadd.f32 %v1057, %v1703
    %v1705 = vpop.f32.mrf.mxu0
    %v1706 = vadd.f32 %v1061, %v1705
    %v1707 = vpop.f32.mrf.mxu0
    %v1708 = vadd.f32 %v1057, %v1707
    %v1709 = vpop.f32.mrf.mxu0
    %v1710 = vadd.f32 %v1061, %v1709
    %1711 = vmatprep.mubr.bf16.mxu0 0
    %1712 = vmatmul.mubr.bf16.gmra.mxu0 %v990
    %v1713 = vpop.f32.mrf.mxu0
    %v1714 = vadd.f32 %v1057, %v1713
    %v1715 = vpop.f32.mrf.mxu0
    %v1716 = vadd.f32 %v1061, %v1715
    %v1717 = vpop.f32.mrf.mxu0
    %v1718 = vadd.f32 %v1057, %v1717
    %v1719 = vpop.f32.mrf.mxu0
    %v1720 = vadd.f32 %v1061, %v1719
    %1721 = vmatprep.mubr.bf16.mxu0 0
    %1722 = vmatmul.mubr.bf16.gmra.mxu0 %v991
    %v1723 = vpop.f32.mrf.mxu0
    %v1724 = vadd.f32 %v1057, %v1723
    %v1725 = vpop.f32.mrf.mxu0
    %v1726 = vadd.f32 %v1061, %v1725
    %v1727 = vpop.f32.mrf.mxu0
    %v1728 = vadd.f32 %v1057, %v1727
    %v1729 = vpop.f32.mrf.mxu0
    %v1730 = vadd.f32 %v1061, %v1729
    %1731 = vmatprep.mubr.bf16.mxu0 0
    %1732 = vmatmul.mubr.bf16.gmra.mxu0 %v992
    %v1733 = vpop.f32.mrf.mxu0
    %v1734 = vadd.f32 %v1057, %v1733
    %v1735 = vpop.f32.mrf.mxu0
    %v1736 = vadd.f32 %v1061, %v1735
    %v1737 = vpop.f32.mrf.mxu0
    %v1738 = vadd.f32 %v1057, %v1737
    %v1739 = vpop.f32.mrf.mxu0
    %v1740 = vadd.f32 %v1061, %v1739
    %1741 = vmatprep.mubr.bf16.mxu0 0
    %1742 = vmatmul.mubr.bf16.gmra.mxu0 %v993
    %v1743 = vpop.f32.mrf.mxu0
    %v1744 = vadd.f32 %v1057, %v1743
    %v1745 = vpop.f32.mrf.mxu0
    %v1746 = vadd.f32 %v1061, %v1745
    %v1747 = vpop.f32.mrf.mxu0
    %v1748 = vadd.f32 %v1057, %v1747
    %v1749 = vpop.f32.mrf.mxu0
    %v1750 = vadd.f32 %v1061, %v1749
    %1751 = vmatprep.mubr.bf16.mxu0 0
    %1752 = vmatmul.mubr.bf16.gmra.mxu0 %v994
    %v1753 = vpop.f32.mrf.mxu0
    %v1754 = vadd.f32 %v1057, %v1753
    %v1755 = vpop.f32.mrf.mxu0
    %v1756 = vadd.f32 %v1061, %v1755
    %v1757 = vpop.f32.mrf.mxu0
    %v1758 = vadd.f32 %v1057, %v1757
    %v1759 = vpop.f32.mrf.mxu0
    %v1760 = vadd.f32 %v1061, %v1759
    %1761 = vmatprep.mubr.bf16.mxu0 0
    %1762 = vmatmul.mubr.bf16.gmra.mxu0 %v995
    %v1763 = vpop.f32.mrf.mxu0
    %v1764 = vadd.f32 %v1057, %v1763
    %v1765 = vpop.f32.mrf.mxu0
    %v1766 = vadd.f32 %v1061, %v1765
    %v1767 = vpop.f32.mrf.mxu0
    %v1768 = vadd.f32 %v1057, %v1767
    %v1769 = vpop.f32.mrf.mxu0
    %v1770 = vadd.f32 %v1061, %v1769
    %1771 = vmatprep.mubr.bf16.mxu0 0
    %1772 = vmatmul.mubr.bf16.gmra.mxu0 %v996
    %v1773 = vpop.f32.mrf.mxu0
    %v1774 = vadd.f32 %v1057, %v1773
    %v1775 = vpop.f32.mrf.mxu0
    %v1776 = vadd.f32 %v1061, %v1775
    %v1777 = vpop.f32.mrf.mxu0
    %v1778 = vadd.f32 %v1057, %v1777
    %v1779 = vpop.f32.mrf.mxu0
    %v1780 = vadd.f32 %v1061, %v1779
    %1781 = vmatprep.mubr.bf16.mxu0 0
    %1782 = vmatmul.mubr.bf16.gmra.mxu0 %v997
    %v1783 = vpop.f32.mrf.mxu0
    %v1784 = vadd.f32 %v1057, %v1783
    %v1785 = vpop.f32.mrf.mxu0
    %v1786 = vadd.f32 %v1061, %v1785
    %v1787 = vpop.f32.mrf.mxu0
    %v1788 = vadd.f32 %v1057, %v1787
    %v1789 = vpop.f32.mrf.mxu0
    %v1790 = vadd.f32 %v1061, %v1789
    %1791 = vmatprep.mubr.bf16.mxu0 0
    %1792 = vmatmul.mubr.bf16.gmra.mxu0 %v998
    %v1793 = vpop.f32.mrf.mxu0
    %v1794 = vadd.f32 %v1057, %v1793
    %v1795 = vpop.f32.mrf.mxu0
    %v1796 = vadd.f32 %v1061, %v1795
    %v1797 = vpop.f32.mrf.mxu0
    %v1798 = vadd.f32 %v1057, %v1797
    %v1799 = vpop.f32.mrf.mxu0
    %v1800 = vadd.f32 %v1061, %v1799
    %1801 = vmatprep.mubr.bf16.mxu0 0
    %1802 = vmatmul.mubr.bf16.gmra.mxu0 %v999
    %v1803 = vpop.f32.mrf.mxu0
    %v1804 = vadd.f32 %v1057, %v1803
    %v1805 = vpop.f32.mrf.mxu0
    %v1806 = vadd.f32 %v1061, %v1805
    %v1807 = vpop.f32.mrf.mxu0
    %v1808 = vadd.f32 %v1057, %v1807
    %v1809 = vpop.f32.mrf.mxu0
    %v1810 = vadd.f32 %v1061, %v1809
    %1811 = vmatprep.mubr.bf16.mxu0 0
    %1812 = vmatmul.mubr.bf16.gmra.mxu0 %v1000
    %v1813 = vpop.f32.mrf.mxu0
    %v1814 = vadd.f32 %v1057, %v1813
    %v1815 = vpop.f32.mrf.mxu0
    %v1816 = vadd.f32 %v1061, %v1815
    %v1817 = vpop.f32.mrf.mxu0
    %v1818 = vadd.f32 %v1057, %v1817
    %v1819 = vpop.f32.mrf.mxu0
    %v1820 = vadd.f32 %v1061, %v1819
    %1821 = vmatprep.mubr.bf16.mxu0 0
    %1822 = vmatmul.mubr.bf16.gmra.mxu0 %v1001
    %v1823 = vpop.f32.mrf.mxu0
    %v1824 = vadd.f32 %v1057, %v1823
    %v1825 = vpop.f32.mrf.mxu0
    %v1826 = vadd.f32 %v1061, %v1825
    %v1827 = vpop.f32.mrf.mxu0
    %v1828 = vadd.f32 %v1057, %v1827
    %v1829 = vpop.f32.mrf.mxu0
    %v1830 = vadd.f32 %v1061, %v1829
    %1831 = vmatprep.mubr.bf16.mxu0 0
    %1832 = vmatmul.mubr.bf16.gmra.mxu0 %v1002
    %v1833 = vpop.f32.mrf.mxu0
    %v1834 = vadd.f32 %v1057, %v1833
    %v1835 = vpop.f32.mrf.mxu0
    %v1836 = vadd.f32 %v1061, %v1835
    %v1837 = vpop.f32.mrf.mxu0
    %v1838 = vadd.f32 %v1057, %v1837
    %v1839 = vpop.f32.mrf.mxu0
    %v1840 = vadd.f32 %v1061, %v1839
    %1841 = vmatprep.mubr.bf16.mxu0 0
    %1842 = vmatmul.mubr.bf16.gmra.mxu0 %v1003
    %v1843 = vpop.f32.mrf.mxu0
    %v1844 = vadd.f32 %v1057, %v1843
    %v1845 = vpop.f32.mrf.mxu0
    %v1846 = vadd.f32 %v1061, %v1845
    %v1847 = vpop.f32.mrf.mxu0
    %v1848 = vadd.f32 %v1057, %v1847
    %v1849 = vpop.f32.mrf.mxu0
    %v1850 = vadd.f32 %v1061, %v1849
    %1851 = vmatprep.mubr.bf16.mxu0 0
    %1852 = vmatmul.mubr.bf16.gmra.mxu0 %v1004
    %v1853 = vpop.f32.mrf.mxu0
    %v1854 = vadd.f32 %v1057, %v1853
    %v1855 = vpop.f32.mrf.mxu0
    %v1856 = vadd.f32 %v1061, %v1855
    %v1857 = vpop.f32.mrf.mxu0
    %v1858 = vadd.f32 %v1057, %v1857
    %v1859 = vpop.f32.mrf.mxu0
    %v1860 = vadd.f32 %v1061, %v1859
    %1861 = vmatprep.mubr.bf16.mxu0 0
    %1862 = vmatmul.mubr.bf16.gmra.mxu0 %v1005
    %v1863 = vpop.f32.mrf.mxu0
    %v1864 = vadd.f32 %v1057, %v1863
    %v1865 = vpop.f32.mrf.mxu0
    %v1866 = vadd.f32 %v1061, %v1865
    %v1867 = vpop.f32.mrf.mxu0
    %v1868 = vadd.f32 %v1057, %v1867
    %v1869 = vpop.f32.mrf.mxu0
    %v1870 = vadd.f32 %v1061, %v1869
    %1871 = vmatprep.mubr.bf16.mxu0 0
    %1872 = vmatmul.mubr.bf16.gmra.mxu0 %v1006
    %v1873 = vpop.f32.mrf.mxu0
    %v1874 = vadd.f32 %v1057, %v1873
    %v1875 = vpop.f32.mrf.mxu0
    %v1876 = vadd.f32 %v1061, %v1875
    %v1877 = vpop.f32.mrf.mxu0
    %v1878 = vadd.f32 %v1057, %v1877
    %v1879 = vpop.f32.mrf.mxu0
    %v1880 = vadd.f32 %v1061, %v1879
    %1881 = vmatprep.mubr.bf16.mxu0 0
    %1882 = vmatmul.mubr.bf16.gmra.mxu0 %v1007
    %v1883 = vpop.f32.mrf.mxu0
    %v1884 = vadd.f32 %v1057, %v1883
    %v1885 = vpop.f32.mrf.mxu0
    %v1886 = vadd.f32 %v1061, %v1885
    %v1887 = vpop.f32.mrf.mxu0
    %v1888 = vadd.f32 %v1057, %v1887
    %v1889 = vpop.f32.mrf.mxu0
    %v1890 = vadd.f32 %v1061, %v1889
    %1891 = vmatprep.mubr.bf16.mxu0 0
    %1892 = vmatmul.mubr.bf16.gmra.mxu0 %v1008
    %v1893 = vpop.f32.mrf.mxu0
    %v1894 = vadd.f32 %v1057, %v1893
    %v1895 = vpop.f32.mrf.mxu0
    %v1896 = vadd.f32 %v1061, %v1895
    %v1897 = vpop.f32.mrf.mxu0
    %v1898 = vadd.f32 %v1057, %v1897
    %v1899 = vpop.f32.mrf.mxu0
    %v1900 = vadd.f32 %v1061, %v1899
    %1901 = vmatprep.mubr.bf16.mxu0 0
    %1902 = vmatmul.mubr.bf16.gmra.mxu0 %v1009
    %v1903 = vpop.f32.mrf.mxu0
    %v1904 = vadd.f32 %v1057, %v1903
    %v1905 = vpop.f32.mrf.mxu0
    %v1906 = vadd.f32 %v1061, %v1905
    %v1907 = vpop.f32.mrf.mxu0
    %v1908 = vadd.f32 %v1057, %v1907
    %v1909 = vpop.f32.mrf.mxu0
    %v1910 = vadd.f32 %v1061, %v1909
    %1911 = vmatprep.mubr.bf16.mxu0 0
    %1912 = vmatmul.mubr.bf16.gmra.mxu0 %v1010
    %v1913 = vpop.f32.mrf.mxu0
    %v1914 = vadd.f32 %v1057, %v1913
    %v1915 = vpop.f32.mrf.mxu0
    %v1916 = vadd.f32 %v1061, %v1915
    %v1917 = vpop.f32.mrf.mxu0
    %v1918 = vadd.f32 %v1057, %v1917
    %v1919 = vpop.f32.mrf.mxu0
    %v1920 = vadd.f32 %v1061, %v1919
    %1921 = vmatprep.mubr.bf16.mxu0 0
    %1922 = vmatmul.mubr.bf16.gmra.mxu0 %v1011
    %v1923 = vpop.f32.mrf.mxu0
    %v1924 = vadd.f32 %v1057, %v1923
    %v1925 = vpop.f32.mrf.mxu0
    %v1926 = vadd.f32 %v1061, %v1925
    %v1927 = vpop.f32.mrf.mxu0
    %v1928 = vadd.f32 %v1057, %v1927
    %v1929 = vpop.f32.mrf.mxu0
    %v1930 = vadd.f32 %v1061, %v1929
    %1931 = vdwg.mxu0
    %v1932 = vmul.f32 %v1261, %v1261
    %v1933 = vmul.f32 %v1263, %v1263
    %v1934 = vmul.f32 %v1614, %v1614
    %v1935 = vmul.f32 %v1616, %v1616
    %v1936 = vmul.f32 %v1265, %v1265
    %v1937 = vmul.f32 %v1267, %v1267
    %v1938 = vmul.f32 %v1618, %v1618
    %v1939 = vmul.f32 %v1620, %v1620
    %v1940 = vmul.f32 %v1271, %v1271
    %v1941 = vmul.f32 %v1273, %v1273
    %v1942 = vmul.f32 %v1624, %v1624
    %v1943 = vmul.f32 %v1626, %v1626
    %v1944 = vmul.f32 %v1275, %v1275
    %v1945 = vmul.f32 %v1277, %v1277
    %v1946 = vmul.f32 %v1628, %v1628
    %v1947 = vmul.f32 %v1630, %v1630
    %v1948 = vmul.f32 %v1281, %v1281
    %v1949 = vmul.f32 %v1283, %v1283
    %v1950 = vmul.f32 %v1634, %v1634
    %v1951 = vmul.f32 %v1636, %v1636
    %v1952 = vmul.f32 %v1285, %v1285
    %v1953 = vmul.f32 %v1287, %v1287
    %v1954 = vmul.f32 %v1638, %v1638
    %v1955 = vmul.f32 %v1640, %v1640
    %v1956 = vmul.f32 %v1291, %v1291
    %v1957 = vmul.f32 %v1293, %v1293
    %v1958 = vmul.f32 %v1644, %v1644
    %v1959 = vmul.f32 %v1646, %v1646
    %v1960 = vmul.f32 %v1295, %v1295
    %v1961 = vmul.f32 %v1297, %v1297
    %v1962 = vmul.f32 %v1648, %v1648
    %v1963 = vmul.f32 %v1650, %v1650
    %v1964 = vmul.f32 %v1301, %v1301
    %v1965 = vmul.f32 %v1303, %v1303
    %v1966 = vmul.f32 %v1654, %v1654
    %v1967 = vmul.f32 %v1656, %v1656
    %v1968 = vmul.f32 %v1305, %v1305
    %v1969 = vmul.f32 %v1307, %v1307
    %v1970 = vmul.f32 %v1658, %v1658
    %v1971 = vmul.f32 %v1660, %v1660
    %v1972 = vmul.f32 %v1311, %v1311
    %v1973 = vmul.f32 %v1313, %v1313
    %v1974 = vmul.f32 %v1664, %v1664
    %v1975 = vmul.f32 %v1666, %v1666
    %v1976 = vmul.f32 %v1315, %v1315
    %v1977 = vmul.f32 %v1317, %v1317
    %v1978 = vmul.f32 %v1668, %v1668
    %v1979 = vmul.f32 %v1670, %v1670
    %v1980 = vmul.f32 %v1321, %v1321
    %v1981 = vmul.f32 %v1323, %v1323
    %v1982 = vmul.f32 %v1674, %v1674
    %v1983 = vmul.f32 %v1676, %v1676
    %v1984 = vmul.f32 %v1325, %v1325
    %v1985 = vmul.f32 %v1327, %v1327
    %v1986 = vmul.f32 %v1678, %v1678
    %v1987 = vmul.f32 %v1680, %v1680
    %v1988 = vmul.f32 %v1331, %v1331
    %v1989 = vmul.f32 %v1333, %v1333
    %v1990 = vmul.f32 %v1684, %v1684
    %v1991 = vmul.f32 %v1686, %v1686
    %v1992 = vmul.f32 %v1335, %v1335
    %v1993 = vmul.f32 %v1337, %v1337
    %v1994 = vmul.f32 %v1688, %v1688
    %v1995 = vmul.f32 %v1690, %v1690
    %v1996 = vmul.f32 %v1341, %v1341
    %v1997 = vmul.f32 %v1343, %v1343
    %v1998 = vmul.f32 %v1694, %v1694
    %v1999 = vmul.f32 %v1696, %v1696
    %v2000 = vmul.f32 %v1345, %v1345
    %v2001 = vmul.f32 %v1347, %v1347
    %v2002 = vmul.f32 %v1698, %v1698
    %v2003 = vmul.f32 %v1700, %v1700
    %v2004 = vmul.f32 %v1351, %v1351
    %v2005 = vmul.f32 %v1353, %v1353
    %v2006 = vmul.f32 %v1704, %v1704
    %v2007 = vmul.f32 %v1706, %v1706
    %v2008 = vmul.f32 %v1355, %v1355
    %v2009 = vmul.f32 %v1357, %v1357
    %v2010 = vmul.f32 %v1708, %v1708
    %v2011 = vmul.f32 %v1710, %v1710
    %v2012 = vmul.f32 %v1361, %v1361
    %v2013 = vmul.f32 %v1363, %v1363
    %v2014 = vmul.f32 %v1714, %v1714
    %v2015 = vmul.f32 %v1716, %v1716
    %v2016 = vmul.f32 %v1365, %v1365
    %v2017 = vmul.f32 %v1367, %v1367
    %v2018 = vmul.f32 %v1718, %v1718
    %v2019 = vmul.f32 %v1720, %v1720
    %v2020 = vmul.f32 %v1371, %v1371
    %v2021 = vmul.f32 %v1373, %v1373
    %v2022 = vmul.f32 %v1724, %v1724
    %v2023 = vmul.f32 %v1726, %v1726
    %v2024 = vmul.f32 %v1375, %v1375
    %v2025 = vmul.f32 %v1377, %v1377
    %v2026 = vmul.f32 %v1728, %v1728
    %v2027 = vmul.f32 %v1730, %v1730
    %v2028 = vmul.f32 %v1381, %v1381
    %v2029 = vmul.f32 %v1383, %v1383
    %v2030 = vmul.f32 %v1734, %v1734
    %v2031 = vmul.f32 %v1736, %v1736
    %v2032 = vmul.f32 %v1385, %v1385
    %v2033 = vmul.f32 %v1387, %v1387
    %v2034 = vmul.f32 %v1738, %v1738
    %v2035 = vmul.f32 %v1740, %v1740
    %v2036 = vmul.f32 %v1391, %v1391
    %v2037 = vmul.f32 %v1393, %v1393
    %v2038 = vmul.f32 %v1744, %v1744
    %v2039 = vmul.f32 %v1746, %v1746
    %v2040 = vmul.f32 %v1395, %v1395
    %v2041 = vmul.f32 %v1397, %v1397
    %v2042 = vmul.f32 %v1748, %v1748
    %v2043 = vmul.f32 %v1750, %v1750
    %v2044 = vmul.f32 %v1401, %v1401
    %v2045 = vmul.f32 %v1403, %v1403
    %v2046 = vmul.f32 %v1754, %v1754
    %v2047 = vmul.f32 %v1756, %v1756
    %v2048 = vmul.f32 %v1405, %v1405
    %v2049 = vmul.f32 %v1407, %v1407
    %v2050 = vmul.f32 %v1758, %v1758
    %v2051 = vmul.f32 %v1760, %v1760
    %v2052 = vmul.f32 %v1411, %v1411
    %v2053 = vmul.f32 %v1413, %v1413
    %v2054 = vmul.f32 %v1764, %v1764
    %v2055 = vmul.f32 %v1766, %v1766
    %v2056 = vmul.f32 %v1415, %v1415
    %v2057 = vmul.f32 %v1417, %v1417
    %v2058 = vmul.f32 %v1768, %v1768
    %v2059 = vmul.f32 %v1770, %v1770
    %v2060 = vmul.f32 %v1421, %v1421
    %v2061 = vmul.f32 %v1423, %v1423
    %v2062 = vmul.f32 %v1774, %v1774
    %v2063 = vmul.f32 %v1776, %v1776
    %v2064 = vmul.f32 %v1425, %v1425
    %v2065 = vmul.f32 %v1427, %v1427
    %v2066 = vmul.f32 %v1778, %v1778
    %v2067 = vmul.f32 %v1780, %v1780
    %v2068 = vmul.f32 %v1431, %v1431
    %v2069 = vmul.f32 %v1433, %v1433
    %v2070 = vmul.f32 %v1784, %v1784
    %v2071 = vmul.f32 %v1786, %v1786
    %v2072 = vmul.f32 %v1435, %v1435
    %v2073 = vmul.f32 %v1437, %v1437
    %v2074 = vmul.f32 %v1788, %v1788
    %v2075 = vmul.f32 %v1790, %v1790
    %v2076 = vmul.f32 %v1441, %v1441
    %v2077 = vmul.f32 %v1443, %v1443
    %v2078 = vmul.f32 %v1794, %v1794
    %v2079 = vmul.f32 %v1796, %v1796
    %v2080 = vmul.f32 %v1445, %v1445
    %v2081 = vmul.f32 %v1447, %v1447
    %v2082 = vmul.f32 %v1798, %v1798
    %v2083 = vmul.f32 %v1800, %v1800
    %v2084 = vmul.f32 %v1451, %v1451
    %v2085 = vmul.f32 %v1453, %v1453
    %v2086 = vmul.f32 %v1804, %v1804
    %v2087 = vmul.f32 %v1806, %v1806
    %v2088 = vmul.f32 %v1455, %v1455
    %v2089 = vmul.f32 %v1457, %v1457
    %v2090 = vmul.f32 %v1808, %v1808
    %v2091 = vmul.f32 %v1810, %v1810
    %v2092 = vmul.f32 %v1461, %v1461
    %v2093 = vmul.f32 %v1463, %v1463
    %v2094 = vmul.f32 %v1814, %v1814
    %v2095 = vmul.f32 %v1816, %v1816
    %v2096 = vmul.f32 %v1465, %v1465
    %v2097 = vmul.f32 %v1467, %v1467
    %v2098 = vmul.f32 %v1818, %v1818
    %v2099 = vmul.f32 %v1820, %v1820
    %v2100 = vmul.f32 %v1471, %v1471
    %v2101 = vmul.f32 %v1473, %v1473
    %v2102 = vmul.f32 %v1824, %v1824
    %v2103 = vmul.f32 %v1826, %v1826
    %v2104 = vmul.f32 %v1475, %v1475
    %v2105 = vmul.f32 %v1477, %v1477
    %v2106 = vmul.f32 %v1828, %v1828
    %v2107 = vmul.f32 %v1830, %v1830
    %v2108 = vmul.f32 %v1481, %v1481
    %v2109 = vmul.f32 %v1483, %v1483
    %v2110 = vmul.f32 %v1834, %v1834
    %v2111 = vmul.f32 %v1836, %v1836
    %v2112 = vmul.f32 %v1485, %v1485
    %v2113 = vmul.f32 %v1487, %v1487
    %v2114 = vmul.f32 %v1838, %v1838
    %v2115 = vmul.f32 %v1840, %v1840
    %v2116 = vmul.f32 %v1491, %v1491
    %v2117 = vmul.f32 %v1493, %v1493
    %v2118 = vmul.f32 %v1844, %v1844
    %v2119 = vmul.f32 %v1846, %v1846
    %v2120 = vmul.f32 %v1495, %v1495
    %v2121 = vmul.f32 %v1497, %v1497
    %v2122 = vmul.f32 %v1848, %v1848
    %v2123 = vmul.f32 %v1850, %v1850
    %v2124 = vmul.f32 %v1501, %v1501
    %v2125 = vmul.f32 %v1503, %v1503
    %v2126 = vmul.f32 %v1854, %v1854
    %v2127 = vmul.f32 %v1856, %v1856
    %v2128 = vmul.f32 %v1505, %v1505
    %v2129 = vmul.f32 %v1507, %v1507
    %v2130 = vmul.f32 %v1858, %v1858
    %v2131 = vmul.f32 %v1860, %v1860
    %v2132 = vmul.f32 %v1511, %v1511
    %v2133 = vmul.f32 %v1513, %v1513
    %v2134 = vmul.f32 %v1864, %v1864
    %v2135 = vmul.f32 %v1866, %v1866
    %v2136 = vmul.f32 %v1515, %v1515
    %v2137 = vmul.f32 %v1517, %v1517
    %v2138 = vmul.f32 %v1868, %v1868
    %v2139 = vmul.f32 %v1870, %v1870
    %v2140 = vmul.f32 %v1521, %v1521
    %v2141 = vmul.f32 %v1523, %v1523
    %v2142 = vmul.f32 %v1874, %v1874
    %v2143 = vmul.f32 %v1876, %v1876
    %v2144 = vmul.f32 %v1525, %v1525
    %v2145 = vmul.f32 %v1527, %v1527
    %v2146 = vmul.f32 %v1878, %v1878
    %v2147 = vmul.f32 %v1880, %v1880
    %v2148 = vmul.f32 %v1531, %v1531
    %v2149 = vmul.f32 %v1533, %v1533
    %v2150 = vmul.f32 %v1884, %v1884
    %v2151 = vmul.f32 %v1886, %v1886
    %v2152 = vmul.f32 %v1535, %v1535
    %v2153 = vmul.f32 %v1537, %v1537
    %v2154 = vmul.f32 %v1888, %v1888
    %v2155 = vmul.f32 %v1890, %v1890
    %v2156 = vmul.f32 %v1541, %v1541
    %v2157 = vmul.f32 %v1543, %v1543
    %v2158 = vmul.f32 %v1894, %v1894
    %v2159 = vmul.f32 %v1896, %v1896
    %v2160 = vmul.f32 %v1545, %v1545
    %v2161 = vmul.f32 %v1547, %v1547
    %v2162 = vmul.f32 %v1898, %v1898
    %v2163 = vmul.f32 %v1900, %v1900
    %v2164 = vmul.f32 %v1551, %v1551
    %v2165 = vmul.f32 %v1553, %v1553
    %v2166 = vmul.f32 %v1904, %v1904
    %v2167 = vmul.f32 %v1906, %v1906
    %v2168 = vmul.f32 %v1555, %v1555
    %v2169 = vmul.f32 %v1557, %v1557
    %v2170 = vmul.f32 %v1908, %v1908
    %v2171 = vmul.f32 %v1910, %v1910
    %v2172 = vmul.f32 %v1561, %v1561
    %v2173 = vmul.f32 %v1563, %v1563
    %v2174 = vmul.f32 %v1914, %v1914
    %v2175 = vmul.f32 %v1916, %v1916
    %v2176 = vmul.f32 %v1565, %v1565
    %v2177 = vmul.f32 %v1567, %v1567
    %v2178 = vmul.f32 %v1918, %v1918
    %v2179 = vmul.f32 %v1920, %v1920
    %v2180 = vmul.f32 %v1571, %v1571
    %v2181 = vmul.f32 %v1573, %v1573
    %v2182 = vmul.f32 %v1924, %v1924
    %v2183 = vmul.f32 %v1926, %v1926
    %v2184 = vmul.f32 %v1575, %v1575
    %v2185 = vmul.f32 %v1577, %v1577
    %v2186 = vmul.f32 %v1928, %v1928
    %v2187 = vmul.f32 %v1930, %v1930
    %v2188 = vmul.f32 %v1261, %v1932
    %v2189 = vmul.f32 %v1263, %v1933
    %v2190 = vmul.f32 %v1614, %v1934
    %v2191 = vmul.f32 %v1616, %v1935
    %v2192 = vmul.f32 %v1265, %v1936
    %v2193 = vmul.f32 %v1267, %v1937
    %v2194 = vmul.f32 %v1618, %v1938
    %v2195 = vmul.f32 %v1620, %v1939
    %v2196 = vmul.f32 %v1271, %v1940
    %v2197 = vmul.f32 %v1273, %v1941
    %v2198 = vmul.f32 %v1624, %v1942
    %v2199 = vmul.f32 %v1626, %v1943
    %v2200 = vmul.f32 %v1275, %v1944
    %v2201 = vmul.f32 %v1277, %v1945
    %v2202 = vmul.f32 %v1628, %v1946
    %v2203 = vmul.f32 %v1630, %v1947
    %v2204 = vmul.f32 %v1281, %v1948
    %v2205 = vmul.f32 %v1283, %v1949
    %v2206 = vmul.f32 %v1634, %v1950
    %v2207 = vmul.f32 %v1636, %v1951
    %v2208 = vmul.f32 %v1285, %v1952
    %v2209 = vmul.f32 %v1287, %v1953
    %v2210 = vmul.f32 %v1638, %v1954
    %v2211 = vmul.f32 %v1640, %v1955
    %v2212 = vmul.f32 %v1291, %v1956
    %v2213 = vmul.f32 %v1293, %v1957
    %v2214 = vmul.f32 %v1644, %v1958
    %v2215 = vmul.f32 %v1646, %v1959
    %v2216 = vmul.f32 %v1295, %v1960
    %v2217 = vmul.f32 %v1297, %v1961
    %v2218 = vmul.f32 %v1648, %v1962
    %v2219 = vmul.f32 %v1650, %v1963
    %v2220 = vmul.f32 %v1301, %v1964
    %v2221 = vmul.f32 %v1303, %v1965
    %v2222 = vmul.f32 %v1654, %v1966
    %v2223 = vmul.f32 %v1656, %v1967
    %v2224 = vmul.f32 %v1305, %v1968
    %v2225 = vmul.f32 %v1307, %v1969
    %v2226 = vmul.f32 %v1658, %v1970
    %v2227 = vmul.f32 %v1660, %v1971
    %v2228 = vmul.f32 %v1311, %v1972
    %v2229 = vmul.f32 %v1313, %v1973
    %v2230 = vmul.f32 %v1664, %v1974
    %v2231 = vmul.f32 %v1666, %v1975
    %v2232 = vmul.f32 %v1315, %v1976
    %v2233 = vmul.f32 %v1317, %v1977
    %v2234 = vmul.f32 %v1668, %v1978
    %v2235 = vmul.f32 %v1670, %v1979
    %v2236 = vmul.f32 %v1321, %v1980
    %v2237 = vmul.f32 %v1323, %v1981
    %v2238 = vmul.f32 %v1674, %v1982
    %v2239 = vmul.f32 %v1676, %v1983
    %v2240 = vmul.f32 %v1325, %v1984
    %v2241 = vmul.f32 %v1327, %v1985
    %v2242 = vmul.f32 %v1678, %v1986
    %v2243 = vmul.f32 %v1680, %v1987
    %v2244 = vmul.f32 %v1331, %v1988
    %v2245 = vmul.f32 %v1333, %v1989
    %v2246 = vmul.f32 %v1684, %v1990
    %v2247 = vmul.f32 %v1686, %v1991
    %v2248 = vmul.f32 %v1335, %v1992
    %v2249 = vmul.f32 %v1337, %v1993
    %v2250 = vmul.f32 %v1688, %v1994
    %v2251 = vmul.f32 %v1690, %v1995
    %v2252 = vmul.f32 %v1341, %v1996
    %v2253 = vmul.f32 %v1343, %v1997
    %v2254 = vmul.f32 %v1694, %v1998
    %v2255 = vmul.f32 %v1696, %v1999
    %v2256 = vmul.f32 %v1345, %v2000
    %v2257 = vmul.f32 %v1347, %v2001
    %v2258 = vmul.f32 %v1698, %v2002
    %v2259 = vmul.f32 %v1700, %v2003
    %v2260 = vmul.f32 %v1351, %v2004
    %v2261 = vmul.f32 %v1353, %v2005
    %v2262 = vmul.f32 %v1704, %v2006
    %v2263 = vmul.f32 %v1706, %v2007
    %v2264 = vmul.f32 %v1355, %v2008
    %v2265 = vmul.f32 %v1357, %v2009
    %v2266 = vmul.f32 %v1708, %v2010
    %v2267 = vmul.f32 %v1710, %v2011
    %v2268 = vmul.f32 %v1361, %v2012
    %v2269 = vmul.f32 %v1363, %v2013
    %v2270 = vmul.f32 %v1714, %v2014
    %v2271 = vmul.f32 %v1716, %v2015
    %v2272 = vmul.f32 %v1365, %v2016
    %v2273 = vmul.f32 %v1367, %v2017
    %v2274 = vmul.f32 %v1718, %v2018
    %v2275 = vmul.f32 %v1720, %v2019
    %v2276 = vmul.f32 %v1371, %v2020
    %v2277 = vmul.f32 %v1373, %v2021
    %v2278 = vmul.f32 %v1724, %v2022
    %v2279 = vmul.f32 %v1726, %v2023
    %v2280 = vmul.f32 %v1375, %v2024
    %v2281 = vmul.f32 %v1377, %v2025
    %v2282 = vmul.f32 %v1728, %v2026
    %v2283 = vmul.f32 %v1730, %v2027
    %v2284 = vmul.f32 %v1381, %v2028
    %v2285 = vmul.f32 %v1383, %v2029
    %v2286 = vmul.f32 %v1734, %v2030
    %v2287 = vmul.f32 %v1736, %v2031
    %v2288 = vmul.f32 %v1385, %v2032
    %v2289 = vmul.f32 %v1387, %v2033
    %v2290 = vmul.f32 %v1738, %v2034
    %v2291 = vmul.f32 %v1740, %v2035
    %v2292 = vmul.f32 %v1391, %v2036
    %v2293 = vmul.f32 %v1393, %v2037
    %v2294 = vmul.f32 %v1744, %v2038
    %v2295 = vmul.f32 %v1746, %v2039
    %v2296 = vmul.f32 %v1395, %v2040
    %v2297 = vmul.f32 %v1397, %v2041
    %v2298 = vmul.f32 %v1748, %v2042
    %v2299 = vmul.f32 %v1750, %v2043
    %v2300 = vmul.f32 %v1401, %v2044
    %v2301 = vmul.f32 %v1403, %v2045
    %v2302 = vmul.f32 %v1754, %v2046
    %v2303 = vmul.f32 %v1756, %v2047
    %v2304 = vmul.f32 %v1405, %v2048
    %v2305 = vmul.f32 %v1407, %v2049
    %v2306 = vmul.f32 %v1758, %v2050
    %v2307 = vmul.f32 %v1760, %v2051
    %v2308 = vmul.f32 %v1411, %v2052
    %v2309 = vmul.f32 %v1413, %v2053
    %v2310 = vmul.f32 %v1764, %v2054
    %v2311 = vmul.f32 %v1766, %v2055
    %v2312 = vmul.f32 %v1415, %v2056
    %v2313 = vmul.f32 %v1417, %v2057
    %v2314 = vmul.f32 %v1768, %v2058
    %v2315 = vmul.f32 %v1770, %v2059
    %v2316 = vmul.f32 %v1421, %v2060
    %v2317 = vmul.f32 %v1423, %v2061
    %v2318 = vmul.f32 %v1774, %v2062
    %v2319 = vmul.f32 %v1776, %v2063
    %v2320 = vmul.f32 %v1425, %v2064
    %v2321 = vmul.f32 %v1427, %v2065
    %v2322 = vmul.f32 %v1778, %v2066
    %v2323 = vmul.f32 %v1780, %v2067
    %v2324 = vmul.f32 %v1431, %v2068
    %v2325 = vmul.f32 %v1433, %v2069
    %v2326 = vmul.f32 %v1784, %v2070
    %v2327 = vmul.f32 %v1786, %v2071
    %v2328 = vmul.f32 %v1435, %v2072
    %v2329 = vmul.f32 %v1437, %v2073
    %v2330 = vmul.f32 %v1788, %v2074
    %v2331 = vmul.f32 %v1790, %v2075
    %v2332 = vmul.f32 %v1441, %v2076
    %v2333 = vmul.f32 %v1443, %v2077
    %v2334 = vmul.f32 %v1794, %v2078
    %v2335 = vmul.f32 %v1796, %v2079
    %v2336 = vmul.f32 %v1445, %v2080
    %v2337 = vmul.f32 %v1447, %v2081
    %v2338 = vmul.f32 %v1798, %v2082
    %v2339 = vmul.f32 %v1800, %v2083
    %v2340 = vmul.f32 %v1451, %v2084
    %v2341 = vmul.f32 %v1453, %v2085
    %v2342 = vmul.f32 %v1804, %v2086
    %v2343 = vmul.f32 %v1806, %v2087
    %v2344 = vmul.f32 %v1455, %v2088
    %v2345 = vmul.f32 %v1457, %v2089
    %v2346 = vmul.f32 %v1808, %v2090
    %v2347 = vmul.f32 %v1810, %v2091
    %v2348 = vmul.f32 %v1461, %v2092
    %v2349 = vmul.f32 %v1463, %v2093
    %v2350 = vmul.f32 %v1814, %v2094
    %v2351 = vmul.f32 %v1816, %v2095
    %v2352 = vmul.f32 %v1465, %v2096
    %v2353 = vmul.f32 %v1467, %v2097
    %v2354 = vmul.f32 %v1818, %v2098
    %v2355 = vmul.f32 %v1820, %v2099
    %v2356 = vmul.f32 %v1471, %v2100
    %v2357 = vmul.f32 %v1473, %v2101
    %v2358 = vmul.f32 %v1824, %v2102
    %v2359 = vmul.f32 %v1826, %v2103
    %v2360 = vmul.f32 %v1475, %v2104
    %v2361 = vmul.f32 %v1477, %v2105
    %v2362 = vmul.f32 %v1828, %v2106
    %v2363 = vmul.f32 %v1830, %v2107
    %v2364 = vmul.f32 %v1481, %v2108
    %v2365 = vmul.f32 %v1483, %v2109
    %v2366 = vmul.f32 %v1834, %v2110
    %v2367 = vmul.f32 %v1836, %v2111
    %v2368 = vmul.f32 %v1485, %v2112
    %v2369 = vmul.f32 %v1487, %v2113
    %v2370 = vmul.f32 %v1838, %v2114
    %v2371 = vmul.f32 %v1840, %v2115
    %v2372 = vmul.f32 %v1491, %v2116
    %v2373 = vmul.f32 %v1493, %v2117
    %v2374 = vmul.f32 %v1844, %v2118
    %v2375 = vmul.f32 %v1846, %v2119
    %v2376 = vmul.f32 %v1495, %v2120
    %v2377 = vmul.f32 %v1497, %v2121
    %v2378 = vmul.f32 %v1848, %v2122
    %v2379 = vmul.f32 %v1850, %v2123
    %v2380 = vmul.f32 %v1501, %v2124
    %v2381 = vmul.f32 %v1503, %v2125
    %v2382 = vmul.f32 %v1854, %v2126
    %v2383 = vmul.f32 %v1856, %v2127
    %v2384 = vmul.f32 %v1505, %v2128
    %v2385 = vmul.f32 %v1507, %v2129
    %v2386 = vmul.f32 %v1858, %v2130
    %v2387 = vmul.f32 %v1860, %v2131
    %v2388 = vmul.f32 %v1511, %v2132
    %v2389 = vmul.f32 %v1513, %v2133
    %v2390 = vmul.f32 %v1864, %v2134
    %v2391 = vmul.f32 %v1866, %v2135
    %v2392 = vmul.f32 %v1515, %v2136
    %v2393 = vmul.f32 %v1517, %v2137
    %v2394 = vmul.f32 %v1868, %v2138
    %v2395 = vmul.f32 %v1870, %v2139
    %v2396 = vmul.f32 %v1521, %v2140
    %v2397 = vmul.f32 %v1523, %v2141
    %v2398 = vmul.f32 %v1874, %v2142
    %v2399 = vmul.f32 %v1876, %v2143
    %v2400 = vmul.f32 %v1525, %v2144
    %v2401 = vmul.f32 %v1527, %v2145
    %v2402 = vmul.f32 %v1878, %v2146
    %v2403 = vmul.f32 %v1880, %v2147
    %v2404 = vmul.f32 %v1531, %v2148
    %v2405 = vmul.f32 %v1533, %v2149
    %v2406 = vmul.f32 %v1884, %v2150
    %v2407 = vmul.f32 %v1886, %v2151
    %v2408 = vmul.f32 %v1535, %v2152
    %v2409 = vmul.f32 %v1537, %v2153
    %v2410 = vmul.f32 %v1888, %v2154
    %v2411 = vmul.f32 %v1890, %v2155
    %v2412 = vmul.f32 %v1541, %v2156
    %v2413 = vmul.f32 %v1543, %v2157
    %v2414 = vmul.f32 %v1894, %v2158
    %v2415 = vmul.f32 %v1896, %v2159
    %v2416 = vmul.f32 %v1545, %v2160
    %v2417 = vmul.f32 %v1547, %v2161
    %v2418 = vmul.f32 %v1898, %v2162
    %v2419 = vmul.f32 %v1900, %v2163
    %v2420 = vmul.f32 %v1551, %v2164
    %v2421 = vmul.f32 %v1553, %v2165
    %v2422 = vmul.f32 %v1904, %v2166
    %v2423 = vmul.f32 %v1906, %v2167
    %v2424 = vmul.f32 %v1555, %v2168
    %v2425 = vmul.f32 %v1557, %v2169
    %v2426 = vmul.f32 %v1908, %v2170
    %v2427 = vmul.f32 %v1910, %v2171
    %v2428 = vmul.f32 %v1561, %v2172
    %v2429 = vmul.f32 %v1563, %v2173
    %v2430 = vmul.f32 %v1914, %v2174
    %v2431 = vmul.f32 %v1916, %v2175
    %v2432 = vmul.f32 %v1565, %v2176
    %v2433 = vmul.f32 %v1567, %v2177
    %v2434 = vmul.f32 %v1918, %v2178
    %v2435 = vmul.f32 %v1920, %v2179
    %v2436 = vmul.f32 %v1571, %v2180
    %v2437 = vmul.f32 %v1573, %v2181
    %v2438 = vmul.f32 %v1924, %v2182
    %v2439 = vmul.f32 %v1926, %v2183
    %v2440 = vmul.f32 %v1575, %v2184
    %v2441 = vmul.f32 %v1577, %v2185
    %v2442 = vmul.f32 %v1928, %v2186
    %v2443 = vmul.f32 %v1930, %v2187
    %v2444 = vmul.f32 %v2188, 0.044715
    %v2445 = vmul.f32 %v2189, 0.044715
    %v2446 = vmul.f32 %v2190, 0.044715
    %v2447 = vmul.f32 %v2191, 0.044715
    %v2448 = vmul.f32 %v2192, 0.044715
    %v2449 = vmul.f32 %v2193, 0.044715
    %v2450 = vmul.f32 %v2194, 0.044715
    %v2451 = vmul.f32 %v2195, 0.044715
    %v2452 = vmul.f32 %v2196, 0.044715
    %v2453 = vmul.f32 %v2197, 0.044715
    %v2454 = vmul.f32 %v2198, 0.044715
    %v2455 = vmul.f32 %v2199, 0.044715
    %v2456 = vmul.f32 %v2200, 0.044715
    %v2457 = vmul.f32 %v2201, 0.044715
    %v2458 = vmul.f32 %v2202, 0.044715
    %v2459 = vmul.f32 %v2203, 0.044715
    %v2460 = vmul.f32 %v2204, 0.044715
    %v2461 = vmul.f32 %v2205, 0.044715
    %v2462 = vmul.f32 %v2206, 0.044715
    %v2463 = vmul.f32 %v2207, 0.044715
    %v2464 = vmul.f32 %v2208, 0.044715
    %v2465 = vmul.f32 %v2209, 0.044715
    %v2466 = vmul.f32 %v2210, 0.044715
    %v2467 = vmul.f32 %v2211, 0.044715
    %v2468 = vmul.f32 %v2212, 0.044715
    %v2469 = vmul.f32 %v2213, 0.044715
    %v2470 = vmul.f32 %v2214, 0.044715
    %v2471 = vmul.f32 %v2215, 0.044715
    %v2472 = vmul.f32 %v2216, 0.044715
    %v2473 = vmul.f32 %v2217, 0.044715
    %v2474 = vmul.f32 %v2218, 0.044715
    %v2475 = vmul.f32 %v2219, 0.044715
    %v2476 = vmul.f32 %v2220, 0.044715
    %v2477 = vmul.f32 %v2221, 0.044715
    %v2478 = vmul.f32 %v2222, 0.044715
    %v2479 = vmul.f32 %v2223, 0.044715
    %v2480 = vmul.f32 %v2224, 0.044715
    %v2481 = vmul.f32 %v2225, 0.044715
    %v2482 = vmul.f32 %v2226, 0.044715
    %v2483 = vmul.f32 %v2227, 0.044715
    %v2484 = vmul.f32 %v2228, 0.044715
    %v2485 = vmul.f32 %v2229, 0.044715
    %v2486 = vmul.f32 %v2230, 0.044715
    %v2487 = vmul.f32 %v2231, 0.044715
    %v2488 = vmul.f32 %v2232, 0.044715
    %v2489 = vmul.f32 %v2233, 0.044715
    %v2490 = vmul.f32 %v2234, 0.044715
    %v2491 = vmul.f32 %v2235, 0.044715
    %v2492 = vmul.f32 %v2236, 0.044715
    %v2493 = vmul.f32 %v2237, 0.044715
    %v2494 = vmul.f32 %v2238, 0.044715
    %v2495 = vmul.f32 %v2239, 0.044715
    %v2496 = vmul.f32 %v2240, 0.044715
    %v2497 = vmul.f32 %v2241, 0.044715
    %v2498 = vmul.f32 %v2242, 0.044715
    %v2499 = vmul.f32 %v2243, 0.044715
    %v2500 = vmul.f32 %v2244, 0.044715
    %v2501 = vmul.f32 %v2245, 0.044715
    %v2502 = vmul.f32 %v2246, 0.044715
    %v2503 = vmul.f32 %v2247, 0.044715
    %v2504 = vmul.f32 %v2248, 0.044715
    %v2505 = vmul.f32 %v2249, 0.044715
    %v2506 = vmul.f32 %v2250, 0.044715
    %v2507 = vmul.f32 %v2251, 0.044715
    %v2508 = vmul.f32 %v2252, 0.044715
    %v2509 = vmul.f32 %v2253, 0.044715
    %v2510 = vmul.f32 %v2254, 0.044715
    %v2511 = vmul.f32 %v2255, 0.044715
    %v2512 = vmul.f32 %v2256, 0.044715
    %v2513 = vmul.f32 %v2257, 0.044715
    %v2514 = vmul.f32 %v2258, 0.044715
    %v2515 = vmul.f32 %v2259, 0.044715
    %v2516 = vmul.f32 %v2260, 0.044715
    %v2517 = vmul.f32 %v2261, 0.044715
    %v2518 = vmul.f32 %v2262, 0.044715
    %v2519 = vmul.f32 %v2263, 0.044715
    %v2520 = vmul.f32 %v2264, 0.044715
    %v2521 = vmul.f32 %v2265, 0.044715
    %v2522 = vmul.f32 %v2266, 0.044715
    %v2523 = vmul.f32 %v2267, 0.044715
    %v2524 = vmul.f32 %v2268, 0.044715
    %v2525 = vmul.f32 %v2269, 0.044715
    %v2526 = vmul.f32 %v2270, 0.044715
    %v2527 = vmul.f32 %v2271, 0.044715
    %v2528 = vmul.f32 %v2272, 0.044715
    %v2529 = vmul.f32 %v2273, 0.044715
    %v2530 = vmul.f32 %v2274, 0.044715
    %v2531 = vmul.f32 %v2275, 0.044715
    %v2532 = vmul.f32 %v2276, 0.044715
    %v2533 = vmul.f32 %v2277, 0.044715
    %v2534 = vmul.f32 %v2278, 0.044715
    %v2535 = vmul.f32 %v2279, 0.044715
    %v2536 = vmul.f32 %v2280, 0.044715
    %v2537 = vmul.f32 %v2281, 0.044715
    %v2538 = vmul.f32 %v2282, 0.044715
    %v2539 = vmul.f32 %v2283, 0.044715
    %v2540 = vmul.f32 %v2284, 0.044715
    %v2541 = vmul.f32 %v2285, 0.044715
    %v2542 = vmul.f32 %v2286, 0.044715
    %v2543 = vmul.f32 %v2287, 0.044715
    %v2544 = vmul.f32 %v2288, 0.044715
    %v2545 = vmul.f32 %v2289, 0.044715
    %v2546 = vmul.f32 %v2290, 0.044715
    %v2547 = vmul.f32 %v2291, 0.044715
    %v2548 = vmul.f32 %v2292, 0.044715
    %v2549 = vmul.f32 %v2293, 0.044715
    %v2550 = vmul.f32 %v2294, 0.044715
    %v2551 = vmul.f32 %v2295, 0.044715
    %v2552 = vmul.f32 %v2296, 0.044715
    %v2553 = vmul.f32 %v2297, 0.044715
    %v2554 = vmul.f32 %v2298, 0.044715
    %v2555 = vmul.f32 %v2299, 0.044715
    %v2556 = vmul.f32 %v2300, 0.044715
    %v2557 = vmul.f32 %v2301, 0.044715
    %v2558 = vmul.f32 %v2302, 0.044715
    %v2559 = vmul.f32 %v2303, 0.044715
    %v2560 = vmul.f32 %v2304, 0.044715
    %v2561 = vmul.f32 %v2305, 0.044715
    %v2562 = vmul.f32 %v2306, 0.044715
    %v2563 = vmul.f32 %v2307, 0.044715
    %v2564 = vmul.f32 %v2308, 0.044715
    %v2565 = vmul.f32 %v2309, 0.044715
    %v2566 = vmul.f32 %v2310, 0.044715
    %v2567 = vmul.f32 %v2311, 0.044715
    %v2568 = vmul.f32 %v2312, 0.044715
    %v2569 = vmul.f32 %v2313, 0.044715
    %v2570 = vmul.f32 %v2314, 0.044715
    %v2571 = vmul.f32 %v2315, 0.044715
    %v2572 = vmul.f32 %v2316, 0.044715
    %v2573 = vmul.f32 %v2317, 0.044715
    %v2574 = vmul.f32 %v2318, 0.044715
    %v2575 = vmul.f32 %v2319, 0.044715
    %v2576 = vmul.f32 %v2320, 0.044715
    %v2577 = vmul.f32 %v2321, 0.044715
    %v2578 = vmul.f32 %v2322, 0.044715
    %v2579 = vmul.f32 %v2323, 0.044715
    %v2580 = vmul.f32 %v2324, 0.044715
    %v2581 = vmul.f32 %v2325, 0.044715
    %v2582 = vmul.f32 %v2326, 0.044715
    %v2583 = vmul.f32 %v2327, 0.044715
    %v2584 = vmul.f32 %v2328, 0.044715
    %v2585 = vmul.f32 %v2329, 0.044715
    %v2586 = vmul.f32 %v2330, 0.044715
    %v2587 = vmul.f32 %v2331, 0.044715
    %v2588 = vmul.f32 %v2332, 0.044715
    %v2589 = vmul.f32 %v2333, 0.044715
    %v2590 = vmul.f32 %v2334, 0.044715
    %v2591 = vmul.f32 %v2335, 0.044715
    %v2592 = vmul.f32 %v2336, 0.044715
    %v2593 = vmul.f32 %v2337, 0.044715
    %v2594 = vmul.f32 %v2338, 0.044715
    %v2595 = vmul.f32 %v2339, 0.044715
    %v2596 = vmul.f32 %v2340, 0.044715
    %v2597 = vmul.f32 %v2341, 0.044715
    %v2598 = vmul.f32 %v2342, 0.044715
    %v2599 = vmul.f32 %v2343, 0.044715
    %v2600 = vmul.f32 %v2344, 0.044715
    %v2601 = vmul.f32 %v2345, 0.044715
    %v2602 = vmul.f32 %v2346, 0.044715
    %v2603 = vmul.f32 %v2347, 0.044715
    %v2604 = vmul.f32 %v2348, 0.044715
    %v2605 = vmul.f32 %v2349, 0.044715
    %v2606 = vmul.f32 %v2350, 0.044715
    %v2607 = vmul.f32 %v2351, 0.044715
    %v2608 = vmul.f32 %v2352, 0.044715
    %v2609 = vmul.f32 %v2353, 0.044715
    %v2610 = vmul.f32 %v2354, 0.044715
    %v2611 = vmul.f32 %v2355, 0.044715
    %v2612 = vmul.f32 %v2356, 0.044715
    %v2613 = vmul.f32 %v2357, 0.044715
    %v2614 = vmul.f32 %v2358, 0.044715
    %v2615 = vmul.f32 %v2359, 0.044715
    %v2616 = vmul.f32 %v2360, 0.044715
    %v2617 = vmul.f32 %v2361, 0.044715
    %v2618 = vmul.f32 %v2362, 0.044715
    %v2619 = vmul.f32 %v2363, 0.044715
    %v2620 = vmul.f32 %v2364, 0.044715
    %v2621 = vmul.f32 %v2365, 0.044715
    %v2622 = vmul.f32 %v2366, 0.044715
    %v2623 = vmul.f32 %v2367, 0.044715
    %v2624 = vmul.f32 %v2368, 0.044715
    %v2625 = vmul.f32 %v2369, 0.044715
    %v2626 = vmul.f32 %v2370, 0.044715
    %v2627 = vmul.f32 %v2371, 0.044715
    %v2628 = vmul.f32 %v2372, 0.044715
    %v2629 = vmul.f32 %v2373, 0.044715
    %v2630 = vmul.f32 %v2374, 0.044715
    %v2631 = vmul.f32 %v2375, 0.044715
    %v2632 = vmul.f32 %v2376, 0.044715
    %v2633 = vmul.f32 %v2377, 0.044715
    %v2634 = vmul.f32 %v2378, 0.044715
    %v2635 = vmul.f32 %v2379, 0.044715
    %v2636 = vmul.f32 %v2380, 0.044715
    %v2637 = vmul.f32 %v2381, 0.044715
    %v2638 = vmul.f32 %v2382, 0.044715
    %v2639 = vmul.f32 %v2383, 0.044715
    %v2640 = vmul.f32 %v2384, 0.044715
    %v2641 = vmul.f32 %v2385, 0.044715
    %v2642 = vmul.f32 %v2386, 0.044715
    %v2643 = vmul.f32 %v2387, 0.044715
    %v2644 = vmul.f32 %v2388, 0.044715
    %v2645 = vmul.f32 %v2389, 0.044715
    %v2646 = vmul.f32 %v2390, 0.044715
    %v2647 = vmul.f32 %v2391, 0.044715
    %v2648 = vmul.f32 %v2392, 0.044715
    %v2649 = vmul.f32 %v2393, 0.044715
    %v2650 = vmul.f32 %v2394, 0.044715
    %v2651 = vmul.f32 %v2395, 0.044715
    %v2652 = vmul.f32 %v2396, 0.044715
    %v2653 = vmul.f32 %v2397, 0.044715
    %v2654 = vmul.f32 %v2398, 0.044715
    %v2655 = vmul.f32 %v2399, 0.044715
    %v2656 = vmul.f32 %v2400, 0.044715
    %v2657 = vmul.f32 %v2401, 0.044715
    %v2658 = vmul.f32 %v2402, 0.044715
    %v2659 = vmul.f32 %v2403, 0.044715
    %v2660 = vmul.f32 %v2404, 0.044715
    %v2661 = vmul.f32 %v2405, 0.044715
    %v2662 = vmul.f32 %v2406, 0.044715
    %v2663 = vmul.f32 %v2407, 0.044715
    %v2664 = vmul.f32 %v2408, 0.044715
    %v2665 = vmul.f32 %v2409, 0.044715
    %v2666 = vmul.f32 %v2410, 0.044715
    %v2667 = vmul.f32 %v2411, 0.044715
    %v2668 = vmul.f32 %v2412, 0.044715
    %v2669 = vmul.f32 %v2413, 0.044715
    %v2670 = vmul.f32 %v2414, 0.044715
    %v2671 = vmul.f32 %v2415, 0.044715
    %v2672 = vmul.f32 %v2416, 0.044715
    %v2673 = vmul.f32 %v2417, 0.044715
    %v2674 = vmul.f32 %v2418, 0.044715
    %v2675 = vmul.f32 %v2419, 0.044715
    %v2676 = vmul.f32 %v2420, 0.044715
    %v2677 = vmul.f32 %v2421, 0.044715
    %v2678 = vmul.f32 %v2422, 0.044715
    %v2679 = vmul.f32 %v2423, 0.044715
    %v2680 = vmul.f32 %v2424, 0.044715
    %v2681 = vmul.f32 %v2425, 0.044715
    %v2682 = vmul.f32 %v2426, 0.044715
    %v2683 = vmul.f32 %v2427, 0.044715
    %v2684 = vmul.f32 %v2428, 0.044715
    %v2685 = vmul.f32 %v2429, 0.044715
    %v2686 = vmul.f32 %v2430, 0.044715
    %v2687 = vmul.f32 %v2431, 0.044715
    %v2688 = vmul.f32 %v2432, 0.044715
    %v2689 = vmul.f32 %v2433, 0.044715
    %v2690 = vmul.f32 %v2434, 0.044715
    %v2691 = vmul.f32 %v2435, 0.044715
    %v2692 = vmul.f32 %v2436, 0.044715
    %v2693 = vmul.f32 %v2437, 0.044715
    %v2694 = vmul.f32 %v2438, 0.044715
    %v2695 = vmul.f32 %v2439, 0.044715
    %v2696 = vmul.f32 %v2440, 0.044715
    %v2697 = vmul.f32 %v2441, 0.044715
    %v2698 = vmul.f32 %v2442, 0.044715
    %v2699 = vmul.f32 %v2443, 0.044715
    %v2700 = vadd.f32 %v1261, %v2444
    %v2701 = vadd.f32 %v1263, %v2445
    %v2702 = vadd.f32 %v1614, %v2446
    %v2703 = vadd.f32 %v1616, %v2447
    %v2704 = vadd.f32 %v1265, %v2448
    %v2705 = vadd.f32 %v1267, %v2449
    %v2706 = vadd.f32 %v1618, %v2450
    %v2707 = vadd.f32 %v1620, %v2451
    %v2708 = vadd.f32 %v1271, %v2452
    %v2709 = vadd.f32 %v1273, %v2453
    %v2710 = vadd.f32 %v1624, %v2454
    %v2711 = vadd.f32 %v1626, %v2455
    %v2712 = vadd.f32 %v1275, %v2456
    %v2713 = vadd.f32 %v1277, %v2457
    %v2714 = vadd.f32 %v1628, %v2458
    %v2715 = vadd.f32 %v1630, %v2459
    %v2716 = vadd.f32 %v1281, %v2460
    %v2717 = vadd.f32 %v1283, %v2461
    %v2718 = vadd.f32 %v1634, %v2462
    %v2719 = vadd.f32 %v1636, %v2463
    %v2720 = vadd.f32 %v1285, %v2464
    %v2721 = vadd.f32 %v1287, %v2465
    %v2722 = vadd.f32 %v1638, %v2466
    %v2723 = vadd.f32 %v1640, %v2467
    %v2724 = vadd.f32 %v1291, %v2468
    %v2725 = vadd.f32 %v1293, %v2469
    %v2726 = vadd.f32 %v1644, %v2470
    %v2727 = vadd.f32 %v1646, %v2471
    %v2728 = vadd.f32 %v1295, %v2472
    %v2729 = vadd.f32 %v1297, %v2473
    %v2730 = vadd.f32 %v1648, %v2474
    %v2731 = vadd.f32 %v1650, %v2475
    %v2732 = vadd.f32 %v1301, %v2476
    %v2733 = vadd.f32 %v1303, %v2477
    %v2734 = vadd.f32 %v1654, %v2478
    %v2735 = vadd.f32 %v1656, %v2479
    %v2736 = vadd.f32 %v1305, %v2480
    %v2737 = vadd.f32 %v1307, %v2481
    %v2738 = vadd.f32 %v1658, %v2482
    %v2739 = vadd.f32 %v1660, %v2483
    %v2740 = vadd.f32 %v1311, %v2484
    %v2741 = vadd.f32 %v1313, %v2485
    %v2742 = vadd.f32 %v1664, %v2486
    %v2743 = vadd.f32 %v1666, %v2487
    %v2744 = vadd.f32 %v1315, %v2488
    %v2745 = vadd.f32 %v1317, %v2489
    %v2746 = vadd.f32 %v1668, %v2490
    %v2747 = vadd.f32 %v1670, %v2491
    %v2748 = vadd.f32 %v1321, %v2492
    %v2749 = vadd.f32 %v1323, %v2493
    %v2750 = vadd.f32 %v1674, %v2494
    %v2751 = vadd.f32 %v1676, %v2495
    %v2752 = vadd.f32 %v1325, %v2496
    %v2753 = vadd.f32 %v1327, %v2497
    %v2754 = vadd.f32 %v1678, %v2498
    %v2755 = vadd.f32 %v1680, %v2499
    %v2756 = vadd.f32 %v1331, %v2500
    %v2757 = vadd.f32 %v1333, %v2501
    %v2758 = vadd.f32 %v1684, %v2502
    %v2759 = vadd.f32 %v1686, %v2503
    %v2760 = vadd.f32 %v1335, %v2504
    %v2761 = vadd.f32 %v1337, %v2505
    %v2762 = vadd.f32 %v1688, %v2506
    %v2763 = vadd.f32 %v1690, %v2507
    %v2764 = vadd.f32 %v1341, %v2508
    %v2765 = vadd.f32 %v1343, %v2509
    %v2766 = vadd.f32 %v1694, %v2510
    %v2767 = vadd.f32 %v1696, %v2511
    %v2768 = vadd.f32 %v1345, %v2512
    %v2769 = vadd.f32 %v1347, %v2513
    %v2770 = vadd.f32 %v1698, %v2514
    %v2771 = vadd.f32 %v1700, %v2515
    %v2772 = vadd.f32 %v1351, %v2516
    %v2773 = vadd.f32 %v1353, %v2517
    %v2774 = vadd.f32 %v1704, %v2518
    %v2775 = vadd.f32 %v1706, %v2519
    %v2776 = vadd.f32 %v1355, %v2520
    %v2777 = vadd.f32 %v1357, %v2521
    %v2778 = vadd.f32 %v1708, %v2522
    %v2779 = vadd.f32 %v1710, %v2523
    %v2780 = vadd.f32 %v1361, %v2524
    %v2781 = vadd.f32 %v1363, %v2525
    %v2782 = vadd.f32 %v1714, %v2526
    %v2783 = vadd.f32 %v1716, %v2527
    %v2784 = vadd.f32 %v1365, %v2528
    %v2785 = vadd.f32 %v1367, %v2529
    %v2786 = vadd.f32 %v1718, %v2530
    %v2787 = vadd.f32 %v1720, %v2531
    %v2788 = vadd.f32 %v1371, %v2532
    %v2789 = vadd.f32 %v1373, %v2533
    %v2790 = vadd.f32 %v1724, %v2534
    %v2791 = vadd.f32 %v1726, %v2535
    %v2792 = vadd.f32 %v1375, %v2536
    %v2793 = vadd.f32 %v1377, %v2537
    %v2794 = vadd.f32 %v1728, %v2538
    %v2795 = vadd.f32 %v1730, %v2539
    %v2796 = vadd.f32 %v1381, %v2540
    %v2797 = vadd.f32 %v1383, %v2541
    %v2798 = vadd.f32 %v1734, %v2542
    %v2799 = vadd.f32 %v1736, %v2543
    %v2800 = vadd.f32 %v1385, %v2544
    %v2801 = vadd.f32 %v1387, %v2545
    %v2802 = vadd.f32 %v1738, %v2546
    %v2803 = vadd.f32 %v1740, %v2547
    %v2804 = vadd.f32 %v1391, %v2548
    %v2805 = vadd.f32 %v1393, %v2549
    %v2806 = vadd.f32 %v1744, %v2550
    %v2807 = vadd.f32 %v1746, %v2551
    %v2808 = vadd.f32 %v1395, %v2552
    %v2809 = vadd.f32 %v1397, %v2553
    %v2810 = vadd.f32 %v1748, %v2554
    %v2811 = vadd.f32 %v1750, %v2555
    %v2812 = vadd.f32 %v1401, %v2556
    %v2813 = vadd.f32 %v1403, %v2557
    %v2814 = vadd.f32 %v1754, %v2558
    %v2815 = vadd.f32 %v1756, %v2559
    %v2816 = vadd.f32 %v1405, %v2560
    %v2817 = vadd.f32 %v1407, %v2561
    %v2818 = vadd.f32 %v1758, %v2562
    %v2819 = vadd.f32 %v1760, %v2563
    %v2820 = vadd.f32 %v1411, %v2564
    %v2821 = vadd.f32 %v1413, %v2565
    %v2822 = vadd.f32 %v1764, %v2566
    %v2823 = vadd.f32 %v1766, %v2567
    %v2824 = vadd.f32 %v1415, %v2568
    %v2825 = vadd.f32 %v1417, %v2569
    %v2826 = vadd.f32 %v1768, %v2570
    %v2827 = vadd.f32 %v1770, %v2571
    %v2828 = vadd.f32 %v1421, %v2572
    %v2829 = vadd.f32 %v1423, %v2573
    %v2830 = vadd.f32 %v1774, %v2574
    %v2831 = vadd.f32 %v1776, %v2575
    %v2832 = vadd.f32 %v1425, %v2576
    %v2833 = vadd.f32 %v1427, %v2577
    %v2834 = vadd.f32 %v1778, %v2578
    %v2835 = vadd.f32 %v1780, %v2579
    %v2836 = vadd.f32 %v1431, %v2580
    %v2837 = vadd.f32 %v1433, %v2581
    %v2838 = vadd.f32 %v1784, %v2582
    %v2839 = vadd.f32 %v1786, %v2583
    %v2840 = vadd.f32 %v1435, %v2584
    %v2841 = vadd.f32 %v1437, %v2585
    %v2842 = vadd.f32 %v1788, %v2586
    %v2843 = vadd.f32 %v1790, %v2587
    %v2844 = vadd.f32 %v1441, %v2588
    %v2845 = vadd.f32 %v1443, %v2589
    %v2846 = vadd.f32 %v1794, %v2590
    %v2847 = vadd.f32 %v1796, %v2591
    %v2848 = vadd.f32 %v1445, %v2592
    %v2849 = vadd.f32 %v1447, %v2593
    %v2850 = vadd.f32 %v1798, %v2594
    %v2851 = vadd.f32 %v1800, %v2595
    %v2852 = vadd.f32 %v1451, %v2596
    %v2853 = vadd.f32 %v1453, %v2597
    %v2854 = vadd.f32 %v1804, %v2598
    %v2855 = vadd.f32 %v1806, %v2599
    %v2856 = vadd.f32 %v1455, %v2600
    %v2857 = vadd.f32 %v1457, %v2601
    %v2858 = vadd.f32 %v1808, %v2602
    %v2859 = vadd.f32 %v1810, %v2603
    %v2860 = vadd.f32 %v1461, %v2604
    %v2861 = vadd.f32 %v1463, %v2605
    %v2862 = vadd.f32 %v1814, %v2606
    %v2863 = vadd.f32 %v1816, %v2607
    %v2864 = vadd.f32 %v1465, %v2608
    %v2865 = vadd.f32 %v1467, %v2609
    %v2866 = vadd.f32 %v1818, %v2610
    %v2867 = vadd.f32 %v1820, %v2611
    %v2868 = vadd.f32 %v1471, %v2612
    %v2869 = vadd.f32 %v1473, %v2613
    %v2870 = vadd.f32 %v1824, %v2614
    %v2871 = vadd.f32 %v1826, %v2615
    %v2872 = vadd.f32 %v1475, %v2616
    %v2873 = vadd.f32 %v1477, %v2617
    %v2874 = vadd.f32 %v1828, %v2618
    %v2875 = vadd.f32 %v1830, %v2619
    %v2876 = vadd.f32 %v1481, %v2620
    %v2877 = vadd.f32 %v1483, %v2621
    %v2878 = vadd.f32 %v1834, %v2622
    %v2879 = vadd.f32 %v1836, %v2623
    %v2880 = vadd.f32 %v1485, %v2624
    %v2881 = vadd.f32 %v1487, %v2625
    %v2882 = vadd.f32 %v1838, %v2626
    %v2883 = vadd.f32 %v1840, %v2627
    %v2884 = vadd.f32 %v1491, %v2628
    %v2885 = vadd.f32 %v1493, %v2629
    %v2886 = vadd.f32 %v1844, %v2630
    %v2887 = vadd.f32 %v1846, %v2631
    %v2888 = vadd.f32 %v1495, %v2632
    %v2889 = vadd.f32 %v1497, %v2633
    %v2890 = vadd.f32 %v1848, %v2634
    %v2891 = vadd.f32 %v1850, %v2635
    %v2892 = vadd.f32 %v1501, %v2636
    %v2893 = vadd.f32 %v1503, %v2637
    %v2894 = vadd.f32 %v1854, %v2638
    %v2895 = vadd.f32 %v1856, %v2639
    %v2896 = vadd.f32 %v1505, %v2640
    %v2897 = vadd.f32 %v1507, %v2641
    %v2898 = vadd.f32 %v1858, %v2642
    %v2899 = vadd.f32 %v1860, %v2643
    %v2900 = vadd.f32 %v1511, %v2644
    %v2901 = vadd.f32 %v1513, %v2645
    %v2902 = vadd.f32 %v1864, %v2646
    %v2903 = vadd.f32 %v1866, %v2647
    %v2904 = vadd.f32 %v1515, %v2648
    %v2905 = vadd.f32 %v1517, %v2649
    %v2906 = vadd.f32 %v1868, %v2650
    %v2907 = vadd.f32 %v1870, %v2651
    %v2908 = vadd.f32 %v1521, %v2652
    %v2909 = vadd.f32 %v1523, %v2653
    %v2910 = vadd.f32 %v1874, %v2654
    %v2911 = vadd.f32 %v1876, %v2655
    %v2912 = vadd.f32 %v1525, %v2656
    %v2913 = vadd.f32 %v1527, %v2657
    %v2914 = vadd.f32 %v1878, %v2658
    %v2915 = vadd.f32 %v1880, %v2659
    %v2916 = vadd.f32 %v1531, %v2660
    %v2917 = vadd.f32 %v1533, %v2661
    %v2918 = vadd.f32 %v1884, %v2662
    %v2919 = vadd.f32 %v1886, %v2663
    %v2920 = vadd.f32 %v1535, %v2664
    %v2921 = vadd.f32 %v1537, %v2665
    %v2922 = vadd.f32 %v1888, %v2666
    %v2923 = vadd.f32 %v1890, %v2667
    %v2924 = vadd.f32 %v1541, %v2668
    %v2925 = vadd.f32 %v1543, %v2669
    %v2926 = vadd.f32 %v1894, %v2670
    %v2927 = vadd.f32 %v1896, %v2671
    %v2928 = vadd.f32 %v1545, %v2672
    %v2929 = vadd.f32 %v1547, %v2673
    %v2930 = vadd.f32 %v1898, %v2674
    %v2931 = vadd.f32 %v1900, %v2675
    %v2932 = vadd.f32 %v1551, %v2676
    %v2933 = vadd.f32 %v1553, %v2677
    %v2934 = vadd.f32 %v1904, %v2678
    %v2935 = vadd.f32 %v1906, %v2679
    %v2936 = vadd.f32 %v1555, %v2680
    %v2937 = vadd.f32 %v1557, %v2681
    %v2938 = vadd.f32 %v1908, %v2682
    %v2939 = vadd.f32 %v1910, %v2683
    %v2940 = vadd.f32 %v1561, %v2684
    %v2941 = vadd.f32 %v1563, %v2685
    %v2942 = vadd.f32 %v1914, %v2686
    %v2943 = vadd.f32 %v1916, %v2687
    %v2944 = vadd.f32 %v1565, %v2688
    %v2945 = vadd.f32 %v1567, %v2689
    %v2946 = vadd.f32 %v1918, %v2690
    %v2947 = vadd.f32 %v1920, %v2691
    %v2948 = vadd.f32 %v1571, %v2692
    %v2949 = vadd.f32 %v1573, %v2693
    %v2950 = vadd.f32 %v1924, %v2694
    %v2951 = vadd.f32 %v1926, %v2695
    %v2952 = vadd.f32 %v1575, %v2696
    %v2953 = vadd.f32 %v1577, %v2697
    %v2954 = vadd.f32 %v1928, %v2698
    %v2955 = vadd.f32 %v1930, %v2699
    %v2956 = vmul.f32 %v2700, 0.7978846
    %v2957 = vmul.f32 %v2701, 0.7978846
    %v2958 = vmul.f32 %v2702, 0.7978846
    %v2959 = vmul.f32 %v2703, 0.7978846
    %v2960 = vmul.f32 %v2704, 0.7978846
    %v2961 = vmul.f32 %v2705, 0.7978846
    %v2962 = vmul.f32 %v2706, 0.7978846
    %v2963 = vmul.f32 %v2707, 0.7978846
    %v2964 = vmul.f32 %v2708, 0.7978846
    %v2965 = vmul.f32 %v2709, 0.7978846
    %v2966 = vmul.f32 %v2710, 0.7978846
    %v2967 = vmul.f32 %v2711, 0.7978846
    %v2968 = vmul.f32 %v2712, 0.7978846
    %v2969 = vmul.f32 %v2713, 0.7978846
    %v2970 = vmul.f32 %v2714, 0.7978846
    %v2971 = vmul.f32 %v2715, 0.7978846
    %v2972 = vmul.f32 %v2716, 0.7978846
    %v2973 = vmul.f32 %v2717, 0.7978846
    %v2974 = vmul.f32 %v2718, 0.7978846
    %v2975 = vmul.f32 %v2719, 0.7978846
    %v2976 = vmul.f32 %v2720, 0.7978846
    %v2977 = vmul.f32 %v2721, 0.7978846
    %v2978 = vmul.f32 %v2722, 0.7978846
    %v2979 = vmul.f32 %v2723, 0.7978846
    %v2980 = vmul.f32 %v2724, 0.7978846
    %v2981 = vmul.f32 %v2725, 0.7978846
    %v2982 = vmul.f32 %v2726, 0.7978846
    %v2983 = vmul.f32 %v2727, 0.7978846
    %v2984 = vmul.f32 %v2728, 0.7978846
    %v2985 = vmul.f32 %v2729, 0.7978846
    %v2986 = vmul.f32 %v2730, 0.7978846
    %v2987 = vmul.f32 %v2731, 0.7978846
    %v2988 = vmul.f32 %v2732, 0.7978846
    %v2989 = vmul.f32 %v2733, 0.7978846
    %v2990 = vmul.f32 %v2734, 0.7978846
    %v2991 = vmul.f32 %v2735, 0.7978846
    %v2992 = vmul.f32 %v2736, 0.7978846
    %v2993 = vmul.f32 %v2737, 0.7978846
    %v2994 = vmul.f32 %v2738, 0.7978846
    %v2995 = vmul.f32 %v2739, 0.7978846
    %v2996 = vmul.f32 %v2740, 0.7978846
    %v2997 = vmul.f32 %v2741, 0.7978846
    %v2998 = vmul.f32 %v2742, 0.7978846
    %v2999 = vmul.f32 %v2743, 0.7978846
    %v3000 = vmul.f32 %v2744, 0.7978846
    %v3001 = vmul.f32 %v2745, 0.7978846
    %v3002 = vmul.f32 %v2746, 0.7978846
    %v3003 = vmul.f32 %v2747, 0.7978846
    %v3004 = vmul.f32 %v2748, 0.7978846
    %v3005 = vmul.f32 %v2749, 0.7978846
    %v3006 = vmul.f32 %v2750, 0.7978846
    %v3007 = vmul.f32 %v2751, 0.7978846
    %v3008 = vmul.f32 %v2752, 0.7978846
    %v3009 = vmul.f32 %v2753, 0.7978846
    %v3010 = vmul.f32 %v2754, 0.7978846
    %v3011 = vmul.f32 %v2755, 0.7978846
    %v3012 = vmul.f32 %v2756, 0.7978846
    %v3013 = vmul.f32 %v2757, 0.7978846
    %v3014 = vmul.f32 %v2758, 0.7978846
    %v3015 = vmul.f32 %v2759, 0.7978846
    %v3016 = vmul.f32 %v2760, 0.7978846
    %v3017 = vmul.f32 %v2761, 0.7978846
    %v3018 = vmul.f32 %v2762, 0.7978846
    %v3019 = vmul.f32 %v2763, 0.7978846
    %v3020 = vmul.f32 %v2764, 0.7978846
    %v3021 = vmul.f32 %v2765, 0.7978846
    %v3022 = vmul.f32 %v2766, 0.7978846
    %v3023 = vmul.f32 %v2767, 0.7978846
    %v3024 = vmul.f32 %v2768, 0.7978846
    %v3025 = vmul.f32 %v2769, 0.7978846
    %v3026 = vmul.f32 %v2770, 0.7978846
    %v3027 = vmul.f32 %v2771, 0.7978846
    %v3028 = vmul.f32 %v2772, 0.7978846
    %v3029 = vmul.f32 %v2773, 0.7978846
    %v3030 = vmul.f32 %v2774, 0.7978846
    %v3031 = vmul.f32 %v2775, 0.7978846
    %v3032 = vmul.f32 %v2776, 0.7978846
    %v3033 = vmul.f32 %v2777, 0.7978846
    %v3034 = vmul.f32 %v2778, 0.7978846
    %v3035 = vmul.f32 %v2779, 0.7978846
    %v3036 = vmul.f32 %v2780, 0.7978846
    %v3037 = vmul.f32 %v2781, 0.7978846
    %v3038 = vmul.f32 %v2782, 0.7978846
    %v3039 = vmul.f32 %v2783, 0.7978846
    %v3040 = vmul.f32 %v2784, 0.7978846
    %v3041 = vmul.f32 %v2785, 0.7978846
    %v3042 = vmul.f32 %v2786, 0.7978846
    %v3043 = vmul.f32 %v2787, 0.7978846
    %v3044 = vmul.f32 %v2788, 0.7978846
    %v3045 = vmul.f32 %v2789, 0.7978846
    %v3046 = vmul.f32 %v2790, 0.7978846
    %v3047 = vmul.f32 %v2791, 0.7978846
    %v3048 = vmul.f32 %v2792, 0.7978846
    %v3049 = vmul.f32 %v2793, 0.7978846
    %v3050 = vmul.f32 %v2794, 0.7978846
    %v3051 = vmul.f32 %v2795, 0.7978846
    %v3052 = vmul.f32 %v2796, 0.7978846
    %v3053 = vmul.f32 %v2797, 0.7978846
    %v3054 = vmul.f32 %v2798, 0.7978846
    %v3055 = vmul.f32 %v2799, 0.7978846
    %v3056 = vmul.f32 %v2800, 0.7978846
    %v3057 = vmul.f32 %v2801, 0.7978846
    %v3058 = vmul.f32 %v2802, 0.7978846
    %v3059 = vmul.f32 %v2803, 0.7978846
    %v3060 = vmul.f32 %v2804, 0.7978846
    %v3061 = vmul.f32 %v2805, 0.7978846
    %v3062 = vmul.f32 %v2806, 0.7978846
    %v3063 = vmul.f32 %v2807, 0.7978846
    %v3064 = vmul.f32 %v2808, 0.7978846
    %v3065 = vmul.f32 %v2809, 0.7978846
    %v3066 = vmul.f32 %v2810, 0.7978846
    %v3067 = vmul.f32 %v2811, 0.7978846
    %v3068 = vmul.f32 %v2812, 0.7978846
    %v3069 = vmul.f32 %v2813, 0.7978846
    %v3070 = vmul.f32 %v2814, 0.7978846
    %v3071 = vmul.f32 %v2815, 0.7978846
    %v3072 = vmul.f32 %v2816, 0.7978846
    %v3073 = vmul.f32 %v2817, 0.7978846
    %v3074 = vmul.f32 %v2818, 0.7978846
    %v3075 = vmul.f32 %v2819, 0.7978846
    %v3076 = vmul.f32 %v2820, 0.7978846
    %v3077 = vmul.f32 %v2821, 0.7978846
    %v3078 = vmul.f32 %v2822, 0.7978846
    %v3079 = vmul.f32 %v2823, 0.7978846
    %v3080 = vmul.f32 %v2824, 0.7978846
    %v3081 = vmul.f32 %v2825, 0.7978846
    %v3082 = vmul.f32 %v2826, 0.7978846
    %v3083 = vmul.f32 %v2827, 0.7978846
    %v3084 = vmul.f32 %v2828, 0.7978846
    %v3085 = vmul.f32 %v2829, 0.7978846
    %v3086 = vmul.f32 %v2830, 0.7978846
    %v3087 = vmul.f32 %v2831, 0.7978846
    %v3088 = vmul.f32 %v2832, 0.7978846
    %v3089 = vmul.f32 %v2833, 0.7978846
    %v3090 = vmul.f32 %v2834, 0.7978846
    %v3091 = vmul.f32 %v2835, 0.7978846
    %v3092 = vmul.f32 %v2836, 0.7978846
    %v3093 = vmul.f32 %v2837, 0.7978846
    %v3094 = vmul.f32 %v2838, 0.7978846
    %v3095 = vmul.f32 %v2839, 0.7978846
    %v3096 = vmul.f32 %v2840, 0.7978846
    %v3097 = vmul.f32 %v2841, 0.7978846
    %v3098 = vmul.f32 %v2842, 0.7978846
    %v3099 = vmul.f32 %v2843, 0.7978846
    %v3100 = vmul.f32 %v2844, 0.7978846
    %v3101 = vmul.f32 %v2845, 0.7978846
    %v3102 = vmul.f32 %v2846, 0.7978846
    %v3103 = vmul.f32 %v2847, 0.7978846
    %v3104 = vmul.f32 %v2848, 0.7978846
    %v3105 = vmul.f32 %v2849, 0.7978846
    %v3106 = vmul.f32 %v2850, 0.7978846
    %v3107 = vmul.f32 %v2851, 0.7978846
    %v3108 = vmul.f32 %v2852, 0.7978846
    %v3109 = vmul.f32 %v2853, 0.7978846
    %v3110 = vmul.f32 %v2854, 0.7978846
    %v3111 = vmul.f32 %v2855, 0.7978846
    %v3112 = vmul.f32 %v2856, 0.7978846
    %v3113 = vmul.f32 %v2857, 0.7978846
    %v3114 = vmul.f32 %v2858, 0.7978846
    %v3115 = vmul.f32 %v2859, 0.7978846
    %v3116 = vmul.f32 %v2860, 0.7978846
    %v3117 = vmul.f32 %v2861, 0.7978846
    %v3118 = vmul.f32 %v2862, 0.7978846
    %v3119 = vmul.f32 %v2863, 0.7978846
    %v3120 = vmul.f32 %v2864, 0.7978846
    %v3121 = vmul.f32 %v2865, 0.7978846
    %v3122 = vmul.f32 %v2866, 0.7978846
    %v3123 = vmul.f32 %v2867, 0.7978846
    %v3124 = vmul.f32 %v2868, 0.7978846
    %v3125 = vmul.f32 %v2869, 0.7978846
    %v3126 = vmul.f32 %v2870, 0.7978846
    %v3127 = vmul.f32 %v2871, 0.7978846
    %v3128 = vmul.f32 %v2872, 0.7978846
    %v3129 = vmul.f32 %v2873, 0.7978846
    %v3130 = vmul.f32 %v2874, 0.7978846
    %v3131 = vmul.f32 %v2875, 0.7978846
    %v3132 = vmul.f32 %v2876, 0.7978846
    %v3133 = vmul.f32 %v2877, 0.7978846
    %v3134 = vmul.f32 %v2878, 0.7978846
    %v3135 = vmul.f32 %v2879, 0.7978846
    %v3136 = vmul.f32 %v2880, 0.7978846
    %v3137 = vmul.f32 %v2881, 0.7978846
    %v3138 = vmul.f32 %v2882, 0.7978846
    %v3139 = vmul.f32 %v2883, 0.7978846
    %v3140 = vmul.f32 %v2884, 0.7978846
    %v3141 = vmul.f32 %v2885, 0.7978846
    %v3142 = vmul.f32 %v2886, 0.7978846
    %v3143 = vmul.f32 %v2887, 0.7978846
    %v3144 = vmul.f32 %v2888, 0.7978846
    %v3145 = vmul.f32 %v2889, 0.7978846
    %v3146 = vmul.f32 %v2890, 0.7978846
    %v3147 = vmul.f32 %v2891, 0.7978846
    %v3148 = vmul.f32 %v2892, 0.7978846
    %v3149 = vmul.f32 %v2893, 0.7978846
    %v3150 = vmul.f32 %v2894, 0.7978846
    %v3151 = vmul.f32 %v2895, 0.7978846
    %v3152 = vmul.f32 %v2896, 0.7978846
    %v3153 = vmul.f32 %v2897, 0.7978846
    %v3154 = vmul.f32 %v2898, 0.7978846
    %v3155 = vmul.f32 %v2899, 0.7978846
    %v3156 = vmul.f32 %v2900, 0.7978846
    %v3157 = vmul.f32 %v2901, 0.7978846
    %v3158 = vmul.f32 %v2902, 0.7978846
    %v3159 = vmul.f32 %v2903, 0.7978846
    %v3160 = vmul.f32 %v2904, 0.7978846
    %v3161 = vmul.f32 %v2905, 0.7978846
    %v3162 = vmul.f32 %v2906, 0.7978846
    %v3163 = vmul.f32 %v2907, 0.7978846
    %v3164 = vmul.f32 %v2908, 0.7978846
    %v3165 = vmul.f32 %v2909, 0.7978846
    %v3166 = vmul.f32 %v2910, 0.7978846
    %v3167 = vmul.f32 %v2911, 0.7978846
    %v3168 = vmul.f32 %v2912, 0.7978846
    %v3169 = vmul.f32 %v2913, 0.7978846
    %v3170 = vmul.f32 %v2914, 0.7978846
    %v3171 = vmul.f32 %v2915, 0.7978846
    %v3172 = vmul.f32 %v2916, 0.7978846
    %v3173 = vmul.f32 %v2917, 0.7978846
    %v3174 = vmul.f32 %v2918, 0.7978846
    %v3175 = vmul.f32 %v2919, 0.7978846
    %v3176 = vmul.f32 %v2920, 0.7978846
    %v3177 = vmul.f32 %v2921, 0.7978846
    %v3178 = vmul.f32 %v2922, 0.7978846
    %v3179 = vmul.f32 %v2923, 0.7978846
    %v3180 = vmul.f32 %v2924, 0.7978846
    %v3181 = vmul.f32 %v2925, 0.7978846
    %v3182 = vmul.f32 %v2926, 0.7978846
    %v3183 = vmul.f32 %v2927, 0.7978846
    %v3184 = vmul.f32 %v2928, 0.7978846
    %v3185 = vmul.f32 %v2929, 0.7978846
    %v3186 = vmul.f32 %v2930, 0.7978846
    %v3187 = vmul.f32 %v2931, 0.7978846
    %v3188 = vmul.f32 %v2932, 0.7978846
    %v3189 = vmul.f32 %v2933, 0.7978846
    %v3190 = vmul.f32 %v2934, 0.7978846
    %v3191 = vmul.f32 %v2935, 0.7978846
    %v3192 = vmul.f32 %v2936, 0.7978846
    %v3193 = vmul.f32 %v2937, 0.7978846
    %v3194 = vmul.f32 %v2938, 0.7978846
    %v3195 = vmul.f32 %v2939, 0.7978846
    %v3196 = vmul.f32 %v2940, 0.7978846
    %v3197 = vmul.f32 %v2941, 0.7978846
    %v3198 = vmul.f32 %v2942, 0.7978846
    %v3199 = vmul.f32 %v2943, 0.7978846
    %v3200 = vmul.f32 %v2944, 0.7978846
    %v3201 = vmul.f32 %v2945, 0.7978846
    %v3202 = vmul.f32 %v2946, 0.7978846
    %v3203 = vmul.f32 %v2947, 0.7978846
    %v3204 = vmul.f32 %v2948, 0.7978846
    %v3205 = vmul.f32 %v2949, 0.7978846
    %v3206 = vmul.f32 %v2950, 0.7978846
    %v3207 = vmul.f32 %v2951, 0.7978846
    %v3208 = vmul.f32 %v2952, 0.7978846
    %v3209 = vmul.f32 %v2953, 0.7978846
    %v3210 = vmul.f32 %v2954, 0.7978846
    %v3211 = vmul.f32 %v2955, 0.7978846
    %v3212 = vtanh.pop %v2956
    %v3213 = vtanh.pop %v2957
    %v3214 = vtanh.pop %v2958
    %v3215 = vtanh.pop %v2959
    %v3216 = vtanh.pop %v2960
    %v3217 = vtanh.pop %v2961
    %v3218 = vtanh.pop %v2962
    %v3219 = vtanh.pop %v2963
    %v3220 = vtanh.pop %v2964
    %v3221 = vtanh.pop %v2965
    %v3222 = vtanh.pop %v2966
    %v3223 = vtanh.pop %v2967
    %v3224 = vtanh.pop %v2968
    %v3225 = vtanh.pop %v2969
    %v3226 = vtanh.pop %v2970
    %v3227 = vtanh.pop %v2971
    %v3228 = vtanh.pop %v2972
    %v3229 = vtanh.pop %v2973
    %v3230 = vtanh.pop %v2974
    %v3231 = vtanh.pop %v2975
    %v3232 = vtanh.pop %v2976
    %v3233 = vtanh.pop %v2977
    %v3234 = vtanh.pop %v2978
    %v3235 = vtanh.pop %v2979
    %v3236 = vtanh.pop %v2980
    %v3237 = vtanh.pop %v2981
    %v3238 = vtanh.pop %v2982
    %v3239 = vtanh.pop %v2983
    %v3240 = vtanh.pop %v2984
    %v3241 = vtanh.pop %v2985
    %v3242 = vtanh.pop %v2986
    %v3243 = vtanh.pop %v2987
    %v3244 = vtanh.pop %v2988
    %v3245 = vtanh.pop %v2989
    %v3246 = vtanh.pop %v2990
    %v3247 = vtanh.pop %v2991
    %v3248 = vtanh.pop %v2992
    %v3249 = vtanh.pop %v2993
    %v3250 = vtanh.pop %v2994
    %v3251 = vtanh.pop %v2995
    %v3252 = vtanh.pop %v2996
    %v3253 = vtanh.pop %v2997
    %v3254 = vtanh.pop %v2998
    %v3255 = vtanh.pop %v2999
    %v3256 = vtanh.pop %v3000
    %v3257 = vtanh.pop %v3001
    %v3258 = vtanh.pop %v3002
    %v3259 = vtanh.pop %v3003
    %v3260 = vtanh.pop %v3004
    %v3261 = vtanh.pop %v3005
    %v3262 = vtanh.pop %v3006
    %v3263 = vtanh.pop %v3007
    %v3264 = vtanh.pop %v3008
    %v3265 = vtanh.pop %v3009
    %v3266 = vtanh.pop %v3010
    %v3267 = vtanh.pop %v3011
    %v3268 = vtanh.pop %v3012
    %v3269 = vtanh.pop %v3013
    %v3270 = vtanh.pop %v3014
    %v3271 = vtanh.pop %v3015
    %v3272 = vtanh.pop %v3016
    %v3273 = vtanh.pop %v3017
    %v3274 = vtanh.pop %v3018
    %v3275 = vtanh.pop %v3019
    %v3276 = vtanh.pop %v3020
    %v3277 = vtanh.pop %v3021
    %v3278 = vtanh.pop %v3022
    %v3279 = vtanh.pop %v3023
    %v3280 = vtanh.pop %v3024
    %v3281 = vtanh.pop %v3025
    %v3282 = vtanh.pop %v3026
    %v3283 = vtanh.pop %v3027
    %v3284 = vtanh.pop %v3028
    %v3285 = vtanh.pop %v3029
    %v3286 = vtanh.pop %v3030
    %v3287 = vtanh.pop %v3031
    %v3288 = vtanh.pop %v3032
    %v3289 = vtanh.pop %v3033
    %v3290 = vtanh.pop %v3034
    %v3291 = vtanh.pop %v3035
    %v3292 = vtanh.pop %v3036
    %v3293 = vtanh.pop %v3037
    %v3294 = vtanh.pop %v3038
    %v3295 = vtanh.pop %v3039
    %v3296 = vtanh.pop %v3040
    %v3297 = vtanh.pop %v3041
    %v3298 = vtanh.pop %v3042
    %v3299 = vtanh.pop %v3043
    %v3300 = vtanh.pop %v3044
    %v3301 = vtanh.pop %v3045
    %v3302 = vtanh.pop %v3046
    %v3303 = vtanh.pop %v3047
    %v3304 = vtanh.pop %v3048
    %v3305 = vtanh.pop %v3049
    %v3306 = vtanh.pop %v3050
    %v3307 = vtanh.pop %v3051
    %v3308 = vtanh.pop %v3052
    %v3309 = vtanh.pop %v3053
    %v3310 = vtanh.pop %v3054
    %v3311 = vtanh.pop %v3055
    %v3312 = vtanh.pop %v3056
    %v3313 = vtanh.pop %v3057
    %v3314 = vtanh.pop %v3058
    %v3315 = vtanh.pop %v3059
    %v3316 = vtanh.pop %v3060
    %v3317 = vtanh.pop %v3061
    %v3318 = vtanh.pop %v3062
    %v3319 = vtanh.pop %v3063
    %v3320 = vtanh.pop %v3064
    %v3321 = vtanh.pop %v3065
    %v3322 = vtanh.pop %v3066
    %v3323 = vtanh.pop %v3067
    %v3324 = vtanh.pop %v3068
    %v3325 = vtanh.pop %v3069
    %v3326 = vtanh.pop %v3070
    %v3327 = vtanh.pop %v3071
    %v3328 = vtanh.pop %v3072
    %v3329 = vtanh.pop %v3073
    %v3330 = vtanh.pop %v3074
    %v3331 = vtanh.pop %v3075
    %v3332 = vtanh.pop %v3076
    %v3333 = vtanh.pop %v3077
    %v3334 = vtanh.pop %v3078
    %v3335 = vtanh.pop %v3079
    %v3336 = vtanh.pop %v3080
    %v3337 = vtanh.pop %v3081
    %v3338 = vtanh.pop %v3082
    %v3339 = vtanh.pop %v3083
    %v3340 = vtanh.pop %v3084
    %v3341 = vtanh.pop %v3085
    %v3342 = vtanh.pop %v3086
    %v3343 = vtanh.pop %v3087
    %v3344 = vtanh.pop %v3088
    %v3345 = vtanh.pop %v3089
    %v3346 = vtanh.pop %v3090
    %v3347 = vtanh.pop %v3091
    %v3348 = vtanh.pop %v3092
    %v3349 = vtanh.pop %v3093
    %v3350 = vtanh.pop %v3094
    %v3351 = vtanh.pop %v3095
    %v3352 = vtanh.pop %v3096
    %v3353 = vtanh.pop %v3097
    %v3354 = vtanh.pop %v3098
    %v3355 = vtanh.pop %v3099
    %v3356 = vtanh.pop %v3100
    %v3357 = vtanh.pop %v3101
    %v3358 = vtanh.pop %v3102
    %v3359 = vtanh.pop %v3103
    %v3360 = vtanh.pop %v3104
    %v3361 = vtanh.pop %v3105
    %v3362 = vtanh.pop %v3106
    %v3363 = vtanh.pop %v3107
    %v3364 = vtanh.pop %v3108
    %v3365 = vtanh.pop %v3109
    %v3366 = vtanh.pop %v3110
    %v3367 = vtanh.pop %v3111
    %v3368 = vtanh.pop %v3112
    %v3369 = vtanh.pop %v3113
    %v3370 = vtanh.pop %v3114
    %v3371 = vtanh.pop %v3115
    %v3372 = vtanh.pop %v3116
    %v3373 = vtanh.pop %v3117
    %v3374 = vtanh.pop %v3118
    %v3375 = vtanh.pop %v3119
    %v3376 = vtanh.pop %v3120
    %v3377 = vtanh.pop %v3121
    %v3378 = vtanh.pop %v3122
    %v3379 = vtanh.pop %v3123
    %v3380 = vtanh.pop %v3124
    %v3381 = vtanh.pop %v3125
    %v3382 = vtanh.pop %v3126
    %v3383 = vtanh.pop %v3127
    %v3384 = vtanh.pop %v3128
    %v3385 = vtanh.pop %v3129
    %v3386 = vtanh.pop %v3130
    %v3387 = vtanh.pop %v3131
    %v3388 = vtanh.pop %v3132
    %v3389 = vtanh.pop %v3133
    %v3390 = vtanh.pop %v3134
    %v3391 = vtanh.pop %v3135
    %v3392 = vtanh.pop %v3136
    %v3393 = vtanh.pop %v3137
    %v3394 = vtanh.pop %v3138
    %v3395 = vtanh.pop %v3139
    %v3396 = vtanh.pop %v3140
    %v3397 = vtanh.pop %v3141
    %v3398 = vtanh.pop %v3142
    %v3399 = vtanh.pop %v3143
    %v3400 = vtanh.pop %v3144
    %v3401 = vtanh.pop %v3145
    %v3402 = vtanh.pop %v3146
    %v3403 = vtanh.pop %v3147
    %v3404 = vtanh.pop %v3148
    %v3405 = vtanh.pop %v3149
    %v3406 = vtanh.pop %v3150
    %v3407 = vtanh.pop %v3151
    %v3408 = vtanh.pop %v3152
    %v3409 = vtanh.pop %v3153
    %v3410 = vtanh.pop %v3154
    %v3411 = vtanh.pop %v3155
    %v3412 = vtanh.pop %v3156
    %v3413 = vtanh.pop %v3157
    %v3414 = vtanh.pop %v3158
    %v3415 = vtanh.pop %v3159
    %v3416 = vtanh.pop %v3160
    %v3417 = vtanh.pop %v3161
    %v3418 = vtanh.pop %v3162
    %v3419 = vtanh.pop %v3163
    %v3420 = vtanh.pop %v3164
    %v3421 = vtanh.pop %v3165
    %v3422 = vtanh.pop %v3166
    %v3423 = vtanh.pop %v3167
    %v3424 = vtanh.pop %v3168
    %v3425 = vtanh.pop %v3169
    %v3426 = vtanh.pop %v3170
    %v3427 = vtanh.pop %v3171
    %v3428 = vtanh.pop %v3172
    %v3429 = vtanh.pop %v3173
    %v3430 = vtanh.pop %v3174
    %v3431 = vtanh.pop %v3175
    %v3432 = vtanh.pop %v3176
    %v3433 = vtanh.pop %v3177
    %v3434 = vtanh.pop %v3178
    %v3435 = vtanh.pop %v3179
    %v3436 = vtanh.pop %v3180
    %v3437 = vtanh.pop %v3181
    %v3438 = vtanh.pop %v3182
    %v3439 = vtanh.pop %v3183
    %v3440 = vtanh.pop %v3184
    %v3441 = vtanh.pop %v3185
    %v3442 = vtanh.pop %v3186
    %v3443 = vtanh.pop %v3187
    %v3444 = vtanh.pop %v3188
    %v3445 = vtanh.pop %v3189
    %v3446 = vtanh.pop %v3190
    %v3447 = vtanh.pop %v3191
    %v3448 = vtanh.pop %v3192
    %v3449 = vtanh.pop %v3193
    %v3450 = vtanh.pop %v3194
    %v3451 = vtanh.pop %v3195
    %v3452 = vtanh.pop %v3196
    %v3453 = vtanh.pop %v3197
    %v3454 = vtanh.pop %v3198
    %v3455 = vtanh.pop %v3199
    %v3456 = vtanh.pop %v3200
    %v3457 = vtanh.pop %v3201
    %v3458 = vtanh.pop %v3202
    %v3459 = vtanh.pop %v3203
    %v3460 = vtanh.pop %v3204
    %v3461 = vtanh.pop %v3205
    %v3462 = vtanh.pop %v3206
    %v3463 = vtanh.pop %v3207
    %v3464 = vtanh.pop %v3208
    %v3465 = vtanh.pop %v3209
    %v3466 = vtanh.pop %v3210
    %v3467 = vtanh.pop %v3211
    %v3468 = vadd.f32 %v3212, 1.0
    %v3469 = vadd.f32 %v3213, 1.0
    %v3470 = vadd.f32 %v3214, 1.0
    %v3471 = vadd.f32 %v3215, 1.0
    %v3472 = vadd.f32 %v3216, 1.0
    %v3473 = vadd.f32 %v3217, 1.0
    %v3474 = vadd.f32 %v3218, 1.0
    %v3475 = vadd.f32 %v3219, 1.0
    %v3476 = vadd.f32 %v3220, 1.0
    %v3477 = vadd.f32 %v3221, 1.0
    %v3478 = vadd.f32 %v3222, 1.0
    %v3479 = vadd.f32 %v3223, 1.0
    %v3480 = vadd.f32 %v3224, 1.0
    %v3481 = vadd.f32 %v3225, 1.0
    %v3482 = vadd.f32 %v3226, 1.0
    %v3483 = vadd.f32 %v3227, 1.0
    %v3484 = vadd.f32 %v3228, 1.0
    %v3485 = vadd.f32 %v3229, 1.0
    %v3486 = vadd.f32 %v3230, 1.0
    %v3487 = vadd.f32 %v3231, 1.0
    %v3488 = vadd.f32 %v3232, 1.0
    %v3489 = vadd.f32 %v3233, 1.0
    %v3490 = vadd.f32 %v3234, 1.0
    %v3491 = vadd.f32 %v3235, 1.0
    %v3492 = vadd.f32 %v3236, 1.0
    %v3493 = vadd.f32 %v3237, 1.0
    %v3494 = vadd.f32 %v3238, 1.0
    %v3495 = vadd.f32 %v3239, 1.0
    %v3496 = vadd.f32 %v3240, 1.0
    %v3497 = vadd.f32 %v3241, 1.0
    %v3498 = vadd.f32 %v3242, 1.0
    %v3499 = vadd.f32 %v3243, 1.0
    %v3500 = vadd.f32 %v3244, 1.0
    %v3501 = vadd.f32 %v3245, 1.0
    %v3502 = vadd.f32 %v3246, 1.0
    %v3503 = vadd.f32 %v3247, 1.0
    %v3504 = vadd.f32 %v3248, 1.0
    %v3505 = vadd.f32 %v3249, 1.0
    %v3506 = vadd.f32 %v3250, 1.0
    %v3507 = vadd.f32 %v3251, 1.0
    %v3508 = vadd.f32 %v3252, 1.0
    %v3509 = vadd.f32 %v3253, 1.0
    %v3510 = vadd.f32 %v3254, 1.0
    %v3511 = vadd.f32 %v3255, 1.0
    %v3512 = vadd.f32 %v3256, 1.0
    %v3513 = vadd.f32 %v3257, 1.0
    %v3514 = vadd.f32 %v3258, 1.0
    %v3515 = vadd.f32 %v3259, 1.0
    %v3516 = vadd.f32 %v3260, 1.0
    %v3517 = vadd.f32 %v3261, 1.0
    %v3518 = vadd.f32 %v3262, 1.0
    %v3519 = vadd.f32 %v3263, 1.0
    %v3520 = vadd.f32 %v3264, 1.0
    %v3521 = vadd.f32 %v3265, 1.0
    %v3522 = vadd.f32 %v3266, 1.0
    %v3523 = vadd.f32 %v3267, 1.0
    %v3524 = vadd.f32 %v3268, 1.0
    %v3525 = vadd.f32 %v3269, 1.0
    %v3526 = vadd.f32 %v3270, 1.0
    %v3527 = vadd.f32 %v3271, 1.0
    %v3528 = vadd.f32 %v3272, 1.0
    %v3529 = vadd.f32 %v3273, 1.0
    %v3530 = vadd.f32 %v3274, 1.0
    %v3531 = vadd.f32 %v3275, 1.0
    %v3532 = vadd.f32 %v3276, 1.0
    %v3533 = vadd.f32 %v3277, 1.0
    %v3534 = vadd.f32 %v3278, 1.0
    %v3535 = vadd.f32 %v3279, 1.0
    %v3536 = vadd.f32 %v3280, 1.0
    %v3537 = vadd.f32 %v3281, 1.0
    %v3538 = vadd.f32 %v3282, 1.0
    %v3539 = vadd.f32 %v3283, 1.0
    %v3540 = vadd.f32 %v3284, 1.0
    %v3541 = vadd.f32 %v3285, 1.0
    %v3542 = vadd.f32 %v3286, 1.0
    %v3543 = vadd.f32 %v3287, 1.0
    %v3544 = vadd.f32 %v3288, 1.0
    %v3545 = vadd.f32 %v3289, 1.0
    %v3546 = vadd.f32 %v3290, 1.0
    %v3547 = vadd.f32 %v3291, 1.0
    %v3548 = vadd.f32 %v3292, 1.0
    %v3549 = vadd.f32 %v3293, 1.0
    %v3550 = vadd.f32 %v3294, 1.0
    %v3551 = vadd.f32 %v3295, 1.0
    %v3552 = vadd.f32 %v3296, 1.0
    %v3553 = vadd.f32 %v3297, 1.0
    %v3554 = vadd.f32 %v3298, 1.0
    %v3555 = vadd.f32 %v3299, 1.0
    %v3556 = vadd.f32 %v3300, 1.0
    %v3557 = vadd.f32 %v3301, 1.0
    %v3558 = vadd.f32 %v3302, 1.0
    %v3559 = vadd.f32 %v3303, 1.0
    %v3560 = vadd.f32 %v3304, 1.0
    %v3561 = vadd.f32 %v3305, 1.0
    %v3562 = vadd.f32 %v3306, 1.0
    %v3563 = vadd.f32 %v3307, 1.0
    %v3564 = vadd.f32 %v3308, 1.0
    %v3565 = vadd.f32 %v3309, 1.0
    %v3566 = vadd.f32 %v3310, 1.0
    %v3567 = vadd.f32 %v3311, 1.0
    %v3568 = vadd.f32 %v3312, 1.0
    %v3569 = vadd.f32 %v3313, 1.0
    %v3570 = vadd.f32 %v3314, 1.0
    %v3571 = vadd.f32 %v3315, 1.0
    %v3572 = vadd.f32 %v3316, 1.0
    %v3573 = vadd.f32 %v3317, 1.0
    %v3574 = vadd.f32 %v3318, 1.0
    %v3575 = vadd.f32 %v3319, 1.0
    %v3576 = vadd.f32 %v3320, 1.0
    %v3577 = vadd.f32 %v3321, 1.0
    %v3578 = vadd.f32 %v3322, 1.0
    %v3579 = vadd.f32 %v3323, 1.0
    %v3580 = vadd.f32 %v3324, 1.0
    %v3581 = vadd.f32 %v3325, 1.0
    %v3582 = vadd.f32 %v3326, 1.0
    %v3583 = vadd.f32 %v3327, 1.0
    %v3584 = vadd.f32 %v3328, 1.0
    %v3585 = vadd.f32 %v3329, 1.0
    %v3586 = vadd.f32 %v3330, 1.0
    %v3587 = vadd.f32 %v3331, 1.0
    %v3588 = vadd.f32 %v3332, 1.0
    %v3589 = vadd.f32 %v3333, 1.0
    %v3590 = vadd.f32 %v3334, 1.0
    %v3591 = vadd.f32 %v3335, 1.0
    %v3592 = vadd.f32 %v3336, 1.0
    %v3593 = vadd.f32 %v3337, 1.0
    %v3594 = vadd.f32 %v3338, 1.0
    %v3595 = vadd.f32 %v3339, 1.0
    %v3596 = vadd.f32 %v3340, 1.0
    %v3597 = vadd.f32 %v3341, 1.0
    %v3598 = vadd.f32 %v3342, 1.0
    %v3599 = vadd.f32 %v3343, 1.0
    %v3600 = vadd.f32 %v3344, 1.0
    %v3601 = vadd.f32 %v3345, 1.0
    %v3602 = vadd.f32 %v3346, 1.0
    %v3603 = vadd.f32 %v3347, 1.0
    %v3604 = vadd.f32 %v3348, 1.0
    %v3605 = vadd.f32 %v3349, 1.0
    %v3606 = vadd.f32 %v3350, 1.0
    %v3607 = vadd.f32 %v3351, 1.0
    %v3608 = vadd.f32 %v3352, 1.0
    %v3609 = vadd.f32 %v3353, 1.0
    %v3610 = vadd.f32 %v3354, 1.0
    %v3611 = vadd.f32 %v3355, 1.0
    %v3612 = vadd.f32 %v3356, 1.0
    %v3613 = vadd.f32 %v3357, 1.0
    %v3614 = vadd.f32 %v3358, 1.0
    %v3615 = vadd.f32 %v3359, 1.0
    %v3616 = vadd.f32 %v3360, 1.0
    %v3617 = vadd.f32 %v3361, 1.0
    %v3618 = vadd.f32 %v3362, 1.0
    %v3619 = vadd.f32 %v3363, 1.0
    %v3620 = vadd.f32 %v3364, 1.0
    %v3621 = vadd.f32 %v3365, 1.0
    %v3622 = vadd.f32 %v3366, 1.0
    %v3623 = vadd.f32 %v3367, 1.0
    %v3624 = vadd.f32 %v3368, 1.0
    %v3625 = vadd.f32 %v3369, 1.0
    %v3626 = vadd.f32 %v3370, 1.0
    %v3627 = vadd.f32 %v3371, 1.0
    %v3628 = vadd.f32 %v3372, 1.0
    %v3629 = vadd.f32 %v3373, 1.0
    %v3630 = vadd.f32 %v3374, 1.0
    %v3631 = vadd.f32 %v3375, 1.0
    %v3632 = vadd.f32 %v3376, 1.0
    %v3633 = vadd.f32 %v3377, 1.0
    %v3634 = vadd.f32 %v3378, 1.0
    %v3635 = vadd.f32 %v3379, 1.0
    %v3636 = vadd.f32 %v3380, 1.0
    %v3637 = vadd.f32 %v3381, 1.0
    %v3638 = vadd.f32 %v3382, 1.0
    %v3639 = vadd.f32 %v3383, 1.0
    %v3640 = vadd.f32 %v3384, 1.0
    %v3641 = vadd.f32 %v3385, 1.0
    %v3642 = vadd.f32 %v3386, 1.0
    %v3643 = vadd.f32 %v3387, 1.0
    %v3644 = vadd.f32 %v3388, 1.0
    %v3645 = vadd.f32 %v3389, 1.0
    %v3646 = vadd.f32 %v3390, 1.0
    %v3647 = vadd.f32 %v3391, 1.0
    %v3648 = vadd.f32 %v3392, 1.0
    %v3649 = vadd.f32 %v3393, 1.0
    %v3650 = vadd.f32 %v3394, 1.0
    %v3651 = vadd.f32 %v3395, 1.0
    %v3652 = vadd.f32 %v3396, 1.0
    %v3653 = vadd.f32 %v3397, 1.0
    %v3654 = vadd.f32 %v3398, 1.0
    %v3655 = vadd.f32 %v3399, 1.0
    %v3656 = vadd.f32 %v3400, 1.0
    %v3657 = vadd.f32 %v3401, 1.0
    %v3658 = vadd.f32 %v3402, 1.0
    %v3659 = vadd.f32 %v3403, 1.0
    %v3660 = vadd.f32 %v3404, 1.0
    %v3661 = vadd.f32 %v3405, 1.0
    %v3662 = vadd.f32 %v3406, 1.0
    %v3663 = vadd.f32 %v3407, 1.0
    %v3664 = vadd.f32 %v3408, 1.0
    %v3665 = vadd.f32 %v3409, 1.0
    %v3666 = vadd.f32 %v3410, 1.0
    %v3667 = vadd.f32 %v3411, 1.0
    %v3668 = vadd.f32 %v3412, 1.0
    %v3669 = vadd.f32 %v3413, 1.0
    %v3670 = vadd.f32 %v3414, 1.0
    %v3671 = vadd.f32 %v3415, 1.0
    %v3672 = vadd.f32 %v3416, 1.0
    %v3673 = vadd.f32 %v3417, 1.0
    %v3674 = vadd.f32 %v3418, 1.0
    %v3675 = vadd.f32 %v3419, 1.0
    %v3676 = vadd.f32 %v3420, 1.0
    %v3677 = vadd.f32 %v3421, 1.0
    %v3678 = vadd.f32 %v3422, 1.0
    %v3679 = vadd.f32 %v3423, 1.0
    %v3680 = vadd.f32 %v3424, 1.0
    %v3681 = vadd.f32 %v3425, 1.0
    %v3682 = vadd.f32 %v3426, 1.0
    %v3683 = vadd.f32 %v3427, 1.0
    %v3684 = vadd.f32 %v3428, 1.0
    %v3685 = vadd.f32 %v3429, 1.0
    %v3686 = vadd.f32 %v3430, 1.0
    %v3687 = vadd.f32 %v3431, 1.0
    %v3688 = vadd.f32 %v3432, 1.0
    %v3689 = vadd.f32 %v3433, 1.0
    %v3690 = vadd.f32 %v3434, 1.0
    %v3691 = vadd.f32 %v3435, 1.0
    %v3692 = vadd.f32 %v3436, 1.0
    %v3693 = vadd.f32 %v3437, 1.0
    %v3694 = vadd.f32 %v3438, 1.0
    %v3695 = vadd.f32 %v3439, 1.0
    %v3696 = vadd.f32 %v3440, 1.0
    %v3697 = vadd.f32 %v3441, 1.0
    %v3698 = vadd.f32 %v3442, 1.0
    %v3699 = vadd.f32 %v3443, 1.0
    %v3700 = vadd.f32 %v3444, 1.0
    %v3701 = vadd.f32 %v3445, 1.0
    %v3702 = vadd.f32 %v3446, 1.0
    %v3703 = vadd.f32 %v3447, 1.0
    %v3704 = vadd.f32 %v3448, 1.0
    %v3705 = vadd.f32 %v3449, 1.0
    %v3706 = vadd.f32 %v3450, 1.0
    %v3707 = vadd.f32 %v3451, 1.0
    %v3708 = vadd.f32 %v3452, 1.0
    %v3709 = vadd.f32 %v3453, 1.0
    %v3710 = vadd.f32 %v3454, 1.0
    %v3711 = vadd.f32 %v3455, 1.0
    %v3712 = vadd.f32 %v3456, 1.0
    %v3713 = vadd.f32 %v3457, 1.0
    %v3714 = vadd.f32 %v3458, 1.0
    %v3715 = vadd.f32 %v3459, 1.0
    %v3716 = vadd.f32 %v3460, 1.0
    %v3717 = vadd.f32 %v3461, 1.0
    %v3718 = vadd.f32 %v3462, 1.0
    %v3719 = vadd.f32 %v3463, 1.0
    %v3720 = vadd.f32 %v3464, 1.0
    %v3721 = vadd.f32 %v3465, 1.0
    %v3722 = vadd.f32 %v3466, 1.0
    %v3723 = vadd.f32 %v3467, 1.0
    %v3724 = vmul.f32 %v3468, 0.5
    %v3725 = vmul.f32 %v3469, 0.5
    %v3726 = vmul.f32 %v3470, 0.5
    %v3727 = vmul.f32 %v3471, 0.5
    %v3728 = vmul.f32 %v3472, 0.5
    %v3729 = vmul.f32 %v3473, 0.5
    %v3730 = vmul.f32 %v3474, 0.5
    %v3731 = vmul.f32 %v3475, 0.5
    %v3732 = vmul.f32 %v3476, 0.5
    %v3733 = vmul.f32 %v3477, 0.5
    %v3734 = vmul.f32 %v3478, 0.5
    %v3735 = vmul.f32 %v3479, 0.5
    %v3736 = vmul.f32 %v3480, 0.5
    %v3737 = vmul.f32 %v3481, 0.5
    %v3738 = vmul.f32 %v3482, 0.5
    %v3739 = vmul.f32 %v3483, 0.5
    %v3740 = vmul.f32 %v3484, 0.5
    %v3741 = vmul.f32 %v3485, 0.5
    %v3742 = vmul.f32 %v3486, 0.5
    %v3743 = vmul.f32 %v3487, 0.5
    %v3744 = vmul.f32 %v3488, 0.5
    %v3745 = vmul.f32 %v3489, 0.5
    %v3746 = vmul.f32 %v3490, 0.5
    %v3747 = vmul.f32 %v3491, 0.5
    %v3748 = vmul.f32 %v3492, 0.5
    %v3749 = vmul.f32 %v3493, 0.5
    %v3750 = vmul.f32 %v3494, 0.5
    %v3751 = vmul.f32 %v3495, 0.5
    %v3752 = vmul.f32 %v3496, 0.5
    %v3753 = vmul.f32 %v3497, 0.5
    %v3754 = vmul.f32 %v3498, 0.5
    %v3755 = vmul.f32 %v3499, 0.5
    %v3756 = vmul.f32 %v3500, 0.5
    %v3757 = vmul.f32 %v3501, 0.5
    %v3758 = vmul.f32 %v3502, 0.5
    %v3759 = vmul.f32 %v3503, 0.5
    %v3760 = vmul.f32 %v3504, 0.5
    %v3761 = vmul.f32 %v3505, 0.5
    %v3762 = vmul.f32 %v3506, 0.5
    %v3763 = vmul.f32 %v3507, 0.5
    %v3764 = vmul.f32 %v3508, 0.5
    %v3765 = vmul.f32 %v3509, 0.5
    %v3766 = vmul.f32 %v3510, 0.5
    %v3767 = vmul.f32 %v3511, 0.5
    %v3768 = vmul.f32 %v3512, 0.5
    %v3769 = vmul.f32 %v3513, 0.5
    %v3770 = vmul.f32 %v3514, 0.5
    %v3771 = vmul.f32 %v3515, 0.5
    %v3772 = vmul.f32 %v3516, 0.5
    %v3773 = vmul.f32 %v3517, 0.5
    %v3774 = vmul.f32 %v3518, 0.5
    %v3775 = vmul.f32 %v3519, 0.5
    %v3776 = vmul.f32 %v3520, 0.5
    %v3777 = vmul.f32 %v3521, 0.5
    %v3778 = vmul.f32 %v3522, 0.5
    %v3779 = vmul.f32 %v3523, 0.5
    %v3780 = vmul.f32 %v3524, 0.5
    %v3781 = vmul.f32 %v3525, 0.5
    %v3782 = vmul.f32 %v3526, 0.5
    %v3783 = vmul.f32 %v3527, 0.5
    %v3784 = vmul.f32 %v3528, 0.5
    %v3785 = vmul.f32 %v3529, 0.5
    %v3786 = vmul.f32 %v3530, 0.5
    %v3787 = vmul.f32 %v3531, 0.5
    %v3788 = vmul.f32 %v3532, 0.5
    %v3789 = vmul.f32 %v3533, 0.5
    %v3790 = vmul.f32 %v3534, 0.5
    %v3791 = vmul.f32 %v3535, 0.5
    %v3792 = vmul.f32 %v3536, 0.5
    %v3793 = vmul.f32 %v3537, 0.5
    %v3794 = vmul.f32 %v3538, 0.5
    %v3795 = vmul.f32 %v3539, 0.5
    %v3796 = vmul.f32 %v3540, 0.5
    %v3797 = vmul.f32 %v3541, 0.5
    %v3798 = vmul.f32 %v3542, 0.5
    %v3799 = vmul.f32 %v3543, 0.5
    %v3800 = vmul.f32 %v3544, 0.5
    %v3801 = vmul.f32 %v3545, 0.5
    %v3802 = vmul.f32 %v3546, 0.5
    %v3803 = vmul.f32 %v3547, 0.5
    %v3804 = vmul.f32 %v3548, 0.5
    %v3805 = vmul.f32 %v3549, 0.5
    %v3806 = vmul.f32 %v3550, 0.5
    %v3807 = vmul.f32 %v3551, 0.5
    %v3808 = vmul.f32 %v3552, 0.5
    %v3809 = vmul.f32 %v3553, 0.5
    %v3810 = vmul.f32 %v3554, 0.5
    %v3811 = vmul.f32 %v3555, 0.5
    %v3812 = vmul.f32 %v3556, 0.5
    %v3813 = vmul.f32 %v3557, 0.5
    %v3814 = vmul.f32 %v3558, 0.5
    %v3815 = vmul.f32 %v3559, 0.5
    %v3816 = vmul.f32 %v3560, 0.5
    %v3817 = vmul.f32 %v3561, 0.5
    %v3818 = vmul.f32 %v3562, 0.5
    %v3819 = vmul.f32 %v3563, 0.5
    %v3820 = vmul.f32 %v3564, 0.5
    %v3821 = vmul.f32 %v3565, 0.5
    %v3822 = vmul.f32 %v3566, 0.5
    %v3823 = vmul.f32 %v3567, 0.5
    %v3824 = vmul.f32 %v3568, 0.5
    %v3825 = vmul.f32 %v3569, 0.5
    %v3826 = vmul.f32 %v3570, 0.5
    %v3827 = vmul.f32 %v3571, 0.5
    %v3828 = vmul.f32 %v3572, 0.5
    %v3829 = vmul.f32 %v3573, 0.5
    %v3830 = vmul.f32 %v3574, 0.5
    %v3831 = vmul.f32 %v3575, 0.5
    %v3832 = vmul.f32 %v3576, 0.5
    %v3833 = vmul.f32 %v3577, 0.5
    %v3834 = vmul.f32 %v3578, 0.5
    %v3835 = vmul.f32 %v3579, 0.5
    %v3836 = vmul.f32 %v3580, 0.5
    %v3837 = vmul.f32 %v3581, 0.5
    %v3838 = vmul.f32 %v3582, 0.5
    %v3839 = vmul.f32 %v3583, 0.5
    %v3840 = vmul.f32 %v3584, 0.5
    %v3841 = vmul.f32 %v3585, 0.5
    %v3842 = vmul.f32 %v3586, 0.5
    %v3843 = vmul.f32 %v3587, 0.5
    %v3844 = vmul.f32 %v3588, 0.5
    %v3845 = vmul.f32 %v3589, 0.5
    %v3846 = vmul.f32 %v3590, 0.5
    %v3847 = vmul.f32 %v3591, 0.5
    %v3848 = vmul.f32 %v3592, 0.5
    %v3849 = vmul.f32 %v3593, 0.5
    %v3850 = vmul.f32 %v3594, 0.5
    %v3851 = vmul.f32 %v3595, 0.5
    %v3852 = vmul.f32 %v3596, 0.5
    %v3853 = vmul.f32 %v3597, 0.5
    %v3854 = vmul.f32 %v3598, 0.5
    %v3855 = vmul.f32 %v3599, 0.5
    %v3856 = vmul.f32 %v3600, 0.5
    %v3857 = vmul.f32 %v3601, 0.5
    %v3858 = vmul.f32 %v3602, 0.5
    %v3859 = vmul.f32 %v3603, 0.5
    %v3860 = vmul.f32 %v3604, 0.5
    %v3861 = vmul.f32 %v3605, 0.5
    %v3862 = vmul.f32 %v3606, 0.5
    %v3863 = vmul.f32 %v3607, 0.5
    %v3864 = vmul.f32 %v3608, 0.5
    %v3865 = vmul.f32 %v3609, 0.5
    %v3866 = vmul.f32 %v3610, 0.5
    %v3867 = vmul.f32 %v3611, 0.5
    %v3868 = vmul.f32 %v3612, 0.5
    %v3869 = vmul.f32 %v3613, 0.5
    %v3870 = vmul.f32 %v3614, 0.5
    %v3871 = vmul.f32 %v3615, 0.5
    %v3872 = vmul.f32 %v3616, 0.5
    %v3873 = vmul.f32 %v3617, 0.5
    %v3874 = vmul.f32 %v3618, 0.5
    %v3875 = vmul.f32 %v3619, 0.5
    %v3876 = vmul.f32 %v3620, 0.5
    %v3877 = vmul.f32 %v3621, 0.5
    %v3878 = vmul.f32 %v3622, 0.5
    %v3879 = vmul.f32 %v3623, 0.5
    %v3880 = vmul.f32 %v3624, 0.5
    %v3881 = vmul.f32 %v3625, 0.5
    %v3882 = vmul.f32 %v3626, 0.5
    %v3883 = vmul.f32 %v3627, 0.5
    %v3884 = vmul.f32 %v3628, 0.5
    %v3885 = vmul.f32 %v3629, 0.5
    %v3886 = vmul.f32 %v3630, 0.5
    %v3887 = vmul.f32 %v3631, 0.5
    %v3888 = vmul.f32 %v3632, 0.5
    %v3889 = vmul.f32 %v3633, 0.5
    %v3890 = vmul.f32 %v3634, 0.5
    %v3891 = vmul.f32 %v3635, 0.5
    %v3892 = vmul.f32 %v3636, 0.5
    %v3893 = vmul.f32 %v3637, 0.5
    %v3894 = vmul.f32 %v3638, 0.5
    %v3895 = vmul.f32 %v3639, 0.5
    %v3896 = vmul.f32 %v3640, 0.5
    %v3897 = vmul.f32 %v3641, 0.5
    %v3898 = vmul.f32 %v3642, 0.5
    %v3899 = vmul.f32 %v3643, 0.5
    %v3900 = vmul.f32 %v3644, 0.5
    %v3901 = vmul.f32 %v3645, 0.5
    %v3902 = vmul.f32 %v3646, 0.5
    %v3903 = vmul.f32 %v3647, 0.5
    %v3904 = vmul.f32 %v3648, 0.5
    %v3905 = vmul.f32 %v3649, 0.5
    %v3906 = vmul.f32 %v3650, 0.5
    %v3907 = vmul.f32 %v3651, 0.5
    %v3908 = vmul.f32 %v3652, 0.5
    %v3909 = vmul.f32 %v3653, 0.5
    %v3910 = vmul.f32 %v3654, 0.5
    %v3911 = vmul.f32 %v3655, 0.5
    %v3912 = vmul.f32 %v3656, 0.5
    %v3913 = vmul.f32 %v3657, 0.5
    %v3914 = vmul.f32 %v3658, 0.5
    %v3915 = vmul.f32 %v3659, 0.5
    %v3916 = vmul.f32 %v3660, 0.5
    %v3917 = vmul.f32 %v3661, 0.5
    %v3918 = vmul.f32 %v3662, 0.5
    %v3919 = vmul.f32 %v3663, 0.5
    %v3920 = vmul.f32 %v3664, 0.5
    %v3921 = vmul.f32 %v3665, 0.5
    %v3922 = vmul.f32 %v3666, 0.5
    %v3923 = vmul.f32 %v3667, 0.5
    %v3924 = vmul.f32 %v3668, 0.5
    %v3925 = vmul.f32 %v3669, 0.5
    %v3926 = vmul.f32 %v3670, 0.5
    %v3927 = vmul.f32 %v3671, 0.5
    %v3928 = vmul.f32 %v3672, 0.5
    %v3929 = vmul.f32 %v3673, 0.5
    %v3930 = vmul.f32 %v3674, 0.5
    %v3931 = vmul.f32 %v3675, 0.5
    %v3932 = vmul.f32 %v3676, 0.5
    %v3933 = vmul.f32 %v3677, 0.5
    %v3934 = vmul.f32 %v3678, 0.5
    %v3935 = vmul.f32 %v3679, 0.5
    %v3936 = vmul.f32 %v3680, 0.5
    %v3937 = vmul.f32 %v3681, 0.5
    %v3938 = vmul.f32 %v3682, 0.5
    %v3939 = vmul.f32 %v3683, 0.5
    %v3940 = vmul.f32 %v3684, 0.5
    %v3941 = vmul.f32 %v3685, 0.5
    %v3942 = vmul.f32 %v3686, 0.5
    %v3943 = vmul.f32 %v3687, 0.5
    %v3944 = vmul.f32 %v3688, 0.5
    %v3945 = vmul.f32 %v3689, 0.5
    %v3946 = vmul.f32 %v3690, 0.5
    %v3947 = vmul.f32 %v3691, 0.5
    %v3948 = vmul.f32 %v3692, 0.5
    %v3949 = vmul.f32 %v3693, 0.5
    %v3950 = vmul.f32 %v3694, 0.5
    %v3951 = vmul.f32 %v3695, 0.5
    %v3952 = vmul.f32 %v3696, 0.5
    %v3953 = vmul.f32 %v3697, 0.5
    %v3954 = vmul.f32 %v3698, 0.5
    %v3955 = vmul.f32 %v3699, 0.5
    %v3956 = vmul.f32 %v3700, 0.5
    %v3957 = vmul.f32 %v3701, 0.5
    %v3958 = vmul.f32 %v3702, 0.5
    %v3959 = vmul.f32 %v3703, 0.5
    %v3960 = vmul.f32 %v3704, 0.5
    %v3961 = vmul.f32 %v3705, 0.5
    %v3962 = vmul.f32 %v3706, 0.5
    %v3963 = vmul.f32 %v3707, 0.5
    %v3964 = vmul.f32 %v3708, 0.5
    %v3965 = vmul.f32 %v3709, 0.5
    %v3966 = vmul.f32 %v3710, 0.5
    %v3967 = vmul.f32 %v3711, 0.5
    %v3968 = vmul.f32 %v3712, 0.5
    %v3969 = vmul.f32 %v3713, 0.5
    %v3970 = vmul.f32 %v3714, 0.5
    %v3971 = vmul.f32 %v3715, 0.5
    %v3972 = vmul.f32 %v3716, 0.5
    %v3973 = vmul.f32 %v3717, 0.5
    %v3974 = vmul.f32 %v3718, 0.5
    %v3975 = vmul.f32 %v3719, 0.5
    %v3976 = vmul.f32 %v3720, 0.5
    %v3977 = vmul.f32 %v3721, 0.5
    %v3978 = vmul.f32 %v3722, 0.5
    %v3979 = vmul.f32 %v3723, 0.5
    %v3980 = vmul.f32 %v1261, %v3724
    %v3981 = vmul.f32 %v1263, %v3725
    %v3982 = vmul.f32 %v1614, %v3726
    %v3983 = vmul.f32 %v1616, %v3727
    %v3984 = vmul.f32 %v1265, %v3728
    %v3985 = vmul.f32 %v1267, %v3729
    %v3986 = vmul.f32 %v1618, %v3730
    %v3987 = vmul.f32 %v1620, %v3731
    %v3988 = vmul.f32 %v1271, %v3732
    %v3989 = vmul.f32 %v1273, %v3733
    %v3990 = vmul.f32 %v1624, %v3734
    %v3991 = vmul.f32 %v1626, %v3735
    %v3992 = vmul.f32 %v1275, %v3736
    %v3993 = vmul.f32 %v1277, %v3737
    %v3994 = vmul.f32 %v1628, %v3738
    %v3995 = vmul.f32 %v1630, %v3739
    %v3996 = vmul.f32 %v1281, %v3740
    %v3997 = vmul.f32 %v1283, %v3741
    %v3998 = vmul.f32 %v1634, %v3742
    %v3999 = vmul.f32 %v1636, %v3743
    %v4000 = vmul.f32 %v1285, %v3744
    %v4001 = vmul.f32 %v1287, %v3745
    %v4002 = vmul.f32 %v1638, %v3746
    %v4003 = vmul.f32 %v1640, %v3747
    %v4004 = vmul.f32 %v1291, %v3748
    %v4005 = vmul.f32 %v1293, %v3749
    %v4006 = vmul.f32 %v1644, %v3750
    %v4007 = vmul.f32 %v1646, %v3751
    %v4008 = vmul.f32 %v1295, %v3752
    %v4009 = vmul.f32 %v1297, %v3753
    %v4010 = vmul.f32 %v1648, %v3754
    %v4011 = vmul.f32 %v1650, %v3755
    %v4012 = vmul.f32 %v1301, %v3756
    %v4013 = vmul.f32 %v1303, %v3757
    %v4014 = vmul.f32 %v1654, %v3758
    %v4015 = vmul.f32 %v1656, %v3759
    %v4016 = vmul.f32 %v1305, %v3760
    %v4017 = vmul.f32 %v1307, %v3761
    %v4018 = vmul.f32 %v1658, %v3762
    %v4019 = vmul.f32 %v1660, %v3763
    %v4020 = vmul.f32 %v1311, %v3764
    %v4021 = vmul.f32 %v1313, %v3765
    %v4022 = vmul.f32 %v1664, %v3766
    %v4023 = vmul.f32 %v1666, %v3767
    %v4024 = vmul.f32 %v1315, %v3768
    %v4025 = vmul.f32 %v1317, %v3769
    %v4026 = vmul.f32 %v1668, %v3770
    %v4027 = vmul.f32 %v1670, %v3771
    %v4028 = vmul.f32 %v1321, %v3772
    %v4029 = vmul.f32 %v1323, %v3773
    %v4030 = vmul.f32 %v1674, %v3774
    %v4031 = vmul.f32 %v1676, %v3775
    %v4032 = vmul.f32 %v1325, %v3776
    %v4033 = vmul.f32 %v1327, %v3777
    %v4034 = vmul.f32 %v1678, %v3778
    %v4035 = vmul.f32 %v1680, %v3779
    %v4036 = vmul.f32 %v1331, %v3780
    %v4037 = vmul.f32 %v1333, %v3781
    %v4038 = vmul.f32 %v1684, %v3782
    %v4039 = vmul.f32 %v1686, %v3783
    %v4040 = vmul.f32 %v1335, %v3784
    %v4041 = vmul.f32 %v1337, %v3785
    %v4042 = vmul.f32 %v1688, %v3786
    %v4043 = vmul.f32 %v1690, %v3787
    %v4044 = vmul.f32 %v1341, %v3788
    %v4045 = vmul.f32 %v1343, %v3789
    %v4046 = vmul.f32 %v1694, %v3790
    %v4047 = vmul.f32 %v1696, %v3791
    %v4048 = vmul.f32 %v1345, %v3792
    %v4049 = vmul.f32 %v1347, %v3793
    %v4050 = vmul.f32 %v1698, %v3794
    %v4051 = vmul.f32 %v1700, %v3795
    %v4052 = vmul.f32 %v1351, %v3796
    %v4053 = vmul.f32 %v1353, %v3797
    %v4054 = vmul.f32 %v1704, %v3798
    %v4055 = vmul.f32 %v1706, %v3799
    %v4056 = vmul.f32 %v1355, %v3800
    %v4057 = vmul.f32 %v1357, %v3801
    %v4058 = vmul.f32 %v1708, %v3802
    %v4059 = vmul.f32 %v1710, %v3803
    %v4060 = vmul.f32 %v1361, %v3804
    %v4061 = vmul.f32 %v1363, %v3805
    %v4062 = vmul.f32 %v1714, %v3806
    %v4063 = vmul.f32 %v1716, %v3807
    %v4064 = vmul.f32 %v1365, %v3808
    %v4065 = vmul.f32 %v1367, %v3809
    %v4066 = vmul.f32 %v1718, %v3810
    %v4067 = vmul.f32 %v1720, %v3811
    %v4068 = vmul.f32 %v1371, %v3812
    %v4069 = vmul.f32 %v1373, %v3813
    %v4070 = vmul.f32 %v1724, %v3814
    %v4071 = vmul.f32 %v1726, %v3815
    %v4072 = vmul.f32 %v1375, %v3816
    %v4073 = vmul.f32 %v1377, %v3817
    %v4074 = vmul.f32 %v1728, %v3818
    %v4075 = vmul.f32 %v1730, %v3819
    %v4076 = vmul.f32 %v1381, %v3820
    %v4077 = vmul.f32 %v1383, %v3821
    %v4078 = vmul.f32 %v1734, %v3822
    %v4079 = vmul.f32 %v1736, %v3823
    %v4080 = vmul.f32 %v1385, %v3824
    %v4081 = vmul.f32 %v1387, %v3825
    %v4082 = vmul.f32 %v1738, %v3826
    %v4083 = vmul.f32 %v1740, %v3827
    %v4084 = vmul.f32 %v1391, %v3828
    %v4085 = vmul.f32 %v1393, %v3829
    %v4086 = vmul.f32 %v1744, %v3830
    %v4087 = vmul.f32 %v1746, %v3831
    %v4088 = vmul.f32 %v1395, %v3832
    %v4089 = vmul.f32 %v1397, %v3833
    %v4090 = vmul.f32 %v1748, %v3834
    %v4091 = vmul.f32 %v1750, %v3835
    %v4092 = vmul.f32 %v1401, %v3836
    %v4093 = vmul.f32 %v1403, %v3837
    %v4094 = vmul.f32 %v1754, %v3838
    %v4095 = vmul.f32 %v1756, %v3839
    %v4096 = vmul.f32 %v1405, %v3840
    %v4097 = vmul.f32 %v1407, %v3841
    %v4098 = vmul.f32 %v1758, %v3842
    %v4099 = vmul.f32 %v1760, %v3843
    %v4100 = vmul.f32 %v1411, %v3844
    %v4101 = vmul.f32 %v1413, %v3845
    %v4102 = vmul.f32 %v1764, %v3846
    %v4103 = vmul.f32 %v1766, %v3847
    %v4104 = vmul.f32 %v1415, %v3848
    %v4105 = vmul.f32 %v1417, %v3849
    %v4106 = vmul.f32 %v1768, %v3850
    %v4107 = vmul.f32 %v1770, %v3851
    %v4108 = vmul.f32 %v1421, %v3852
    %v4109 = vmul.f32 %v1423, %v3853
    %v4110 = vmul.f32 %v1774, %v3854
    %v4111 = vmul.f32 %v1776, %v3855
    %v4112 = vmul.f32 %v1425, %v3856
    %v4113 = vmul.f32 %v1427, %v3857
    %v4114 = vmul.f32 %v1778, %v3858
    %v4115 = vmul.f32 %v1780, %v3859
    %v4116 = vmul.f32 %v1431, %v3860
    %v4117 = vmul.f32 %v1433, %v3861
    %v4118 = vmul.f32 %v1784, %v3862
    %v4119 = vmul.f32 %v1786, %v3863
    %v4120 = vmul.f32 %v1435, %v3864
    %v4121 = vmul.f32 %v1437, %v3865
    %v4122 = vmul.f32 %v1788, %v3866
    %v4123 = vmul.f32 %v1790, %v3867
    %v4124 = vmul.f32 %v1441, %v3868
    %v4125 = vmul.f32 %v1443, %v3869
    %v4126 = vmul.f32 %v1794, %v3870
    %v4127 = vmul.f32 %v1796, %v3871
    %v4128 = vmul.f32 %v1445, %v3872
    %v4129 = vmul.f32 %v1447, %v3873
    %v4130 = vmul.f32 %v1798, %v3874
    %v4131 = vmul.f32 %v1800, %v3875
    %v4132 = vmul.f32 %v1451, %v3876
    %v4133 = vmul.f32 %v1453, %v3877
    %v4134 = vmul.f32 %v1804, %v3878
    %v4135 = vmul.f32 %v1806, %v3879
    %v4136 = vmul.f32 %v1455, %v3880
    %v4137 = vmul.f32 %v1457, %v3881
    %v4138 = vmul.f32 %v1808, %v3882
    %v4139 = vmul.f32 %v1810, %v3883
    %v4140 = vmul.f32 %v1461, %v3884
    %v4141 = vmul.f32 %v1463, %v3885
    %v4142 = vmul.f32 %v1814, %v3886
    %v4143 = vmul.f32 %v1816, %v3887
    %v4144 = vmul.f32 %v1465, %v3888
    %v4145 = vmul.f32 %v1467, %v3889
    %v4146 = vmul.f32 %v1818, %v3890
    %v4147 = vmul.f32 %v1820, %v3891
    %v4148 = vmul.f32 %v1471, %v3892
    %v4149 = vmul.f32 %v1473, %v3893
    %v4150 = vmul.f32 %v1824, %v3894
    %v4151 = vmul.f32 %v1826, %v3895
    %v4152 = vmul.f32 %v1475, %v3896
    %v4153 = vmul.f32 %v1477, %v3897
    %v4154 = vmul.f32 %v1828, %v3898
    %v4155 = vmul.f32 %v1830, %v3899
    %v4156 = vmul.f32 %v1481, %v3900
    %v4157 = vmul.f32 %v1483, %v3901
    %v4158 = vmul.f32 %v1834, %v3902
    %v4159 = vmul.f32 %v1836, %v3903
    %v4160 = vmul.f32 %v1485, %v3904
    %v4161 = vmul.f32 %v1487, %v3905
    %v4162 = vmul.f32 %v1838, %v3906
    %v4163 = vmul.f32 %v1840, %v3907
    %v4164 = vmul.f32 %v1491, %v3908
    %v4165 = vmul.f32 %v1493, %v3909
    %v4166 = vmul.f32 %v1844, %v3910
    %v4167 = vmul.f32 %v1846, %v3911
    %v4168 = vmul.f32 %v1495, %v3912
    %v4169 = vmul.f32 %v1497, %v3913
    %v4170 = vmul.f32 %v1848, %v3914
    %v4171 = vmul.f32 %v1850, %v3915
    %v4172 = vmul.f32 %v1501, %v3916
    %v4173 = vmul.f32 %v1503, %v3917
    %v4174 = vmul.f32 %v1854, %v3918
    %v4175 = vmul.f32 %v1856, %v3919
    %v4176 = vmul.f32 %v1505, %v3920
    %v4177 = vmul.f32 %v1507, %v3921
    %v4178 = vmul.f32 %v1858, %v3922
    %v4179 = vmul.f32 %v1860, %v3923
    %v4180 = vmul.f32 %v1511, %v3924
    %v4181 = vmul.f32 %v1513, %v3925
    %v4182 = vmul.f32 %v1864, %v3926
    %v4183 = vmul.f32 %v1866, %v3927
    %v4184 = vmul.f32 %v1515, %v3928
    %v4185 = vmul.f32 %v1517, %v3929
    %v4186 = vmul.f32 %v1868, %v3930
    %v4187 = vmul.f32 %v1870, %v3931
    %v4188 = vmul.f32 %v1521, %v3932
    %v4189 = vmul.f32 %v1523, %v3933
    %v4190 = vmul.f32 %v1874, %v3934
    %v4191 = vmul.f32 %v1876, %v3935
    %v4192 = vmul.f32 %v1525, %v3936
    %v4193 = vmul.f32 %v1527, %v3937
    %v4194 = vmul.f32 %v1878, %v3938
    %v4195 = vmul.f32 %v1880, %v3939
    %v4196 = vmul.f32 %v1531, %v3940
    %v4197 = vmul.f32 %v1533, %v3941
    %v4198 = vmul.f32 %v1884, %v3942
    %v4199 = vmul.f32 %v1886, %v3943
    %v4200 = vmul.f32 %v1535, %v3944
    %v4201 = vmul.f32 %v1537, %v3945
    %v4202 = vmul.f32 %v1888, %v3946
    %v4203 = vmul.f32 %v1890, %v3947
    %v4204 = vmul.f32 %v1541, %v3948
    %v4205 = vmul.f32 %v1543, %v3949
    %v4206 = vmul.f32 %v1894, %v3950
    %v4207 = vmul.f32 %v1896, %v3951
    %v4208 = vmul.f32 %v1545, %v3952
    %v4209 = vmul.f32 %v1547, %v3953
    %v4210 = vmul.f32 %v1898, %v3954
    %v4211 = vmul.f32 %v1900, %v3955
    %v4212 = vmul.f32 %v1551, %v3956
    %v4213 = vmul.f32 %v1553, %v3957
    %v4214 = vmul.f32 %v1904, %v3958
    %v4215 = vmul.f32 %v1906, %v3959
    %v4216 = vmul.f32 %v1555, %v3960
    %v4217 = vmul.f32 %v1557, %v3961
    %v4218 = vmul.f32 %v1908, %v3962
    %v4219 = vmul.f32 %v1910, %v3963
    %v4220 = vmul.f32 %v1561, %v3964
    %v4221 = vmul.f32 %v1563, %v3965
    %v4222 = vmul.f32 %v1914, %v3966
    %v4223 = vmul.f32 %v1916, %v3967
    %v4224 = vmul.f32 %v1565, %v3968
    %v4225 = vmul.f32 %v1567, %v3969
    %v4226 = vmul.f32 %v1918, %v3970
    %v4227 = vmul.f32 %v1920, %v3971
    %v4228 = vmul.f32 %v1571, %v3972
    %v4229 = vmul.f32 %v1573, %v3973
    %v4230 = vmul.f32 %v1924, %v3974
    %v4231 = vmul.f32 %v1926, %v3975
    %v4232 = vmul.f32 %v1575, %v3976
    %v4233 = vmul.f32 %v1577, %v3977
    %v4234 = vmul.f32 %v1928, %v3978
    %v4235 = vmul.f32 %v1930, %v3979
    %v4236 = vpack.c.bf16 %v3984, %v3980
    %v4237 = vpack.c.bf16 %v3985, %v3981
    %v4238 = vpack.c.bf16 %v3986, %v3982
    %v4239 = vpack.c.bf16 %v3987, %v3983
    %v4240 = vpack.c.bf16 %v3992, %v3988
    %v4241 = vpack.c.bf16 %v3993, %v3989
    %v4242 = vpack.c.bf16 %v3994, %v3990
    %v4243 = vpack.c.bf16 %v3995, %v3991
    %v4244 = vpack.c.bf16 %v4000, %v3996
    %v4245 = vpack.c.bf16 %v4001, %v3997
    %v4246 = vpack.c.bf16 %v4002, %v3998
    %v4247 = vpack.c.bf16 %v4003, %v3999
    %v4248 = vpack.c.bf16 %v4008, %v4004
    %v4249 = vpack.c.bf16 %v4009, %v4005
    %v4250 = vpack.c.bf16 %v4010, %v4006
    %v4251 = vpack.c.bf16 %v4011, %v4007
    %v4252 = vpack.c.bf16 %v4016, %v4012
    %v4253 = vpack.c.bf16 %v4017, %v4013
    %v4254 = vpack.c.bf16 %v4018, %v4014
    %v4255 = vpack.c.bf16 %v4019, %v4015
    %v4256 = vpack.c.bf16 %v4024, %v4020
    %v4257 = vpack.c.bf16 %v4025, %v4021
    %v4258 = vpack.c.bf16 %v4026, %v4022
    %v4259 = vpack.c.bf16 %v4027, %v4023
    %v4260 = vpack.c.bf16 %v4032, %v4028
    %v4261 = vpack.c.bf16 %v4033, %v4029
    %v4262 = vpack.c.bf16 %v4034, %v4030
    %v4263 = vpack.c.bf16 %v4035, %v4031
    %v4264 = vpack.c.bf16 %v4040, %v4036
    %v4265 = vpack.c.bf16 %v4041, %v4037
    %v4266 = vpack.c.bf16 %v4042, %v4038
    %v4267 = vpack.c.bf16 %v4043, %v4039
    %v4268 = vpack.c.bf16 %v4048, %v4044
    %v4269 = vpack.c.bf16 %v4049, %v4045
    %v4270 = vpack.c.bf16 %v4050, %v4046
    %v4271 = vpack.c.bf16 %v4051, %v4047
    %v4272 = vpack.c.bf16 %v4056, %v4052
    %v4273 = vpack.c.bf16 %v4057, %v4053
    %v4274 = vpack.c.bf16 %v4058, %v4054
    %v4275 = vpack.c.bf16 %v4059, %v4055
    %v4276 = vpack.c.bf16 %v4064, %v4060
    %v4277 = vpack.c.bf16 %v4065, %v4061
    %v4278 = vpack.c.bf16 %v4066, %v4062
    %v4279 = vpack.c.bf16 %v4067, %v4063
    %v4280 = vpack.c.bf16 %v4072, %v4068
    %v4281 = vpack.c.bf16 %v4073, %v4069
    %v4282 = vpack.c.bf16 %v4074, %v4070
    %v4283 = vpack.c.bf16 %v4075, %v4071
    %v4284 = vpack.c.bf16 %v4080, %v4076
    %v4285 = vpack.c.bf16 %v4081, %v4077
    %v4286 = vpack.c.bf16 %v4082, %v4078
    %v4287 = vpack.c.bf16 %v4083, %v4079
    %v4288 = vpack.c.bf16 %v4088, %v4084
    %v4289 = vpack.c.bf16 %v4089, %v4085
    %v4290 = vpack.c.bf16 %v4090, %v4086
    %v4291 = vpack.c.bf16 %v4091, %v4087
    %v4292 = vpack.c.bf16 %v4096, %v4092
    %v4293 = vpack.c.bf16 %v4097, %v4093
    %v4294 = vpack.c.bf16 %v4098, %v4094
    %v4295 = vpack.c.bf16 %v4099, %v4095
    %v4296 = vpack.c.bf16 %v4104, %v4100
    %v4297 = vpack.c.bf16 %v4105, %v4101
    %v4298 = vpack.c.bf16 %v4106, %v4102
    %v4299 = vpack.c.bf16 %v4107, %v4103
    %v4300 = vpack.c.bf16 %v4112, %v4108
    %v4301 = vpack.c.bf16 %v4113, %v4109
    %v4302 = vpack.c.bf16 %v4114, %v4110
    %v4303 = vpack.c.bf16 %v4115, %v4111
    %v4304 = vpack.c.bf16 %v4120, %v4116
    %v4305 = vpack.c.bf16 %v4121, %v4117
    %v4306 = vpack.c.bf16 %v4122, %v4118
    %v4307 = vpack.c.bf16 %v4123, %v4119
    %v4308 = vpack.c.bf16 %v4128, %v4124
    %v4309 = vpack.c.bf16 %v4129, %v4125
    %v4310 = vpack.c.bf16 %v4130, %v4126
    %v4311 = vpack.c.bf16 %v4131, %v4127
    %v4312 = vpack.c.bf16 %v4136, %v4132
    %v4313 = vpack.c.bf16 %v4137, %v4133
    %v4314 = vpack.c.bf16 %v4138, %v4134
    %v4315 = vpack.c.bf16 %v4139, %v4135
    %v4316 = vpack.c.bf16 %v4144, %v4140
    %v4317 = vpack.c.bf16 %v4145, %v4141
    %v4318 = vpack.c.bf16 %v4146, %v4142
    %v4319 = vpack.c.bf16 %v4147, %v4143
    %v4320 = vpack.c.bf16 %v4152, %v4148
    %v4321 = vpack.c.bf16 %v4153, %v4149
    %v4322 = vpack.c.bf16 %v4154, %v4150
    %v4323 = vpack.c.bf16 %v4155, %v4151
    %v4324 = vpack.c.bf16 %v4160, %v4156
    %v4325 = vpack.c.bf16 %v4161, %v4157
    %v4326 = vpack.c.bf16 %v4162, %v4158
    %v4327 = vpack.c.bf16 %v4163, %v4159
    %v4328 = vpack.c.bf16 %v4168, %v4164
    %v4329 = vpack.c.bf16 %v4169, %v4165
    %v4330 = vpack.c.bf16 %v4170, %v4166
    %v4331 = vpack.c.bf16 %v4171, %v4167
    %v4332 = vpack.c.bf16 %v4176, %v4172
    %v4333 = vpack.c.bf16 %v4177, %v4173
    %v4334 = vpack.c.bf16 %v4178, %v4174
    %v4335 = vpack.c.bf16 %v4179, %v4175
    %v4336 = vpack.c.bf16 %v4184, %v4180
    %v4337 = vpack.c.bf16 %v4185, %v4181
    %v4338 = vpack.c.bf16 %v4186, %v4182
    %v4339 = vpack.c.bf16 %v4187, %v4183
    %v4340 = vpack.c.bf16 %v4192, %v4188
    %v4341 = vpack.c.bf16 %v4193, %v4189
    %v4342 = vpack.c.bf16 %v4194, %v4190
    %v4343 = vpack.c.bf16 %v4195, %v4191
    %v4344 = vpack.c.bf16 %v4200, %v4196
    %v4345 = vpack.c.bf16 %v4201, %v4197
    %v4346 = vpack.c.bf16 %v4202, %v4198
    %v4347 = vpack.c.bf16 %v4203, %v4199
    %v4348 = vpack.c.bf16 %v4208, %v4204
    %v4349 = vpack.c.bf16 %v4209, %v4205
    %v4350 = vpack.c.bf16 %v4210, %v4206
    %v4351 = vpack.c.bf16 %v4211, %v4207
    %v4352 = vpack.c.bf16 %v4216, %v4212
    %v4353 = vpack.c.bf16 %v4217, %v4213
    %v4354 = vpack.c.bf16 %v4218, %v4214
    %v4355 = vpack.c.bf16 %v4219, %v4215
    %v4356 = vpack.c.bf16 %v4224, %v4220
    %v4357 = vpack.c.bf16 %v4225, %v4221
    %v4358 = vpack.c.bf16 %v4226, %v4222
    %v4359 = vpack.c.bf16 %v4227, %v4223
    %v4360 = vpack.c.bf16 %v4232, %v4228
    %v4361 = vpack.c.bf16 %v4233, %v4229
    %v4362 = vpack.c.bf16 %v4234, %v4230
    %v4363 = vpack.c.bf16 %v4235, %v4231
    %v4364 = vld [vmem:[#allocation7] sm:$0xf]
    %v4365 = vld [vmem:[#allocation7 + $0x4] sm:$0xf]
    %v4366 = vld [vmem:[#allocation7 + $0x8] sm:$0xf]
    %v4367 = vld [vmem:[#allocation7 + $0xc] sm:$0xf]
    %v4368 = vld [vmem:[#allocation7 + $0x10] sm:$0xf]
    %v4369 = vld [vmem:[#allocation7 + $0x14] sm:$0xf]
    %v4370 = vld [vmem:[#allocation7 + $0x18] sm:$0xf]
    %v4371 = vld [vmem:[#allocation7 + $0x1c] sm:$0xf]
    %v4372 = vld [vmem:[#allocation7 + $0x20] sm:$0xf]
    %v4373 = vld [vmem:[#allocation7 + $0x24] sm:$0xf]
    %v4374 = vld [vmem:[#allocation7 + $0x28] sm:$0xf]
    %v4375 = vld [vmem:[#allocation7 + $0x2c] sm:$0xf]
    %v4376 = vld [vmem:[#allocation7 + $0x30] sm:$0xf]
    %v4377 = vld [vmem:[#allocation7 + $0x34] sm:$0xf]
    %v4378 = vld [vmem:[#allocation7 + $0x38] sm:$0xf]
    %v4379 = vld [vmem:[#allocation7 + $0x3c] sm:$0xf]
    %v4380 = vld [vmem:[#allocation7 + $0x40] sm:$0xf]
    %v4381 = vld [vmem:[#allocation7 + $0x44] sm:$0xf]
    %v4382 = vld [vmem:[#allocation7 + $0x48] sm:$0xf]
    %v4383 = vld [vmem:[#allocation7 + $0x4c] sm:$0xf]
    %v4384 = vld [vmem:[#allocation7 + $0x50] sm:$0xf]
    %v4385 = vld [vmem:[#allocation7 + $0x54] sm:$0xf]
    %v4386 = vld [vmem:[#allocation7 + $0x58] sm:$0xf]
    %v4387 = vld [vmem:[#allocation7 + $0x5c] sm:$0xf]
    %v4388 = vld [vmem:[#allocation7 + $0x60] sm:$0xf]
    %v4389 = vld [vmem:[#allocation7 + $0x64] sm:$0xf]
    %v4390 = vld [vmem:[#allocation7 + $0x68] sm:$0xf]
    %v4391 = vld [vmem:[#allocation7 + $0x6c] sm:$0xf]
    %v4392 = vld [vmem:[#allocation7 + $0x70] sm:$0xf]
    %v4393 = vld [vmem:[#allocation7 + $0x74] sm:$0xf]
    %v4394 = vld [vmem:[#allocation7 + $0x78] sm:$0xf]
    %v4395 = vld [vmem:[#allocation7 + $0x7c] sm:$0xf]
    %v4396 = vld [vmem:[#allocation7 + $0x80] sm:$0xf]
    %v4397 = vld [vmem:[#allocation7 + $0x84] sm:$0xf]
    %v4398 = vld [vmem:[#allocation7 + $0x88] sm:$0xf]
    %v4399 = vld [vmem:[#allocation7 + $0x8c] sm:$0xf]
    %v4400 = vld [vmem:[#allocation7 + $0x90] sm:$0xf]
    %v4401 = vld [vmem:[#allocation7 + $0x94] sm:$0xf]
    %v4402 = vld [vmem:[#allocation7 + $0x98] sm:$0xf]
    %v4403 = vld [vmem:[#allocation7 + $0x9c] sm:$0xf]
    %v4404 = vld [vmem:[#allocation7 + $0xa0] sm:$0xf]
    %v4405 = vld [vmem:[#allocation7 + $0xa4] sm:$0xf]
    %v4406 = vld [vmem:[#allocation7 + $0xa8] sm:$0xf]
    %v4407 = vld [vmem:[#allocation7 + $0xac] sm:$0xf]
    %v4408 = vld [vmem:[#allocation7 + $0xb0] sm:$0xf]
    %v4409 = vld [vmem:[#allocation7 + $0xb4] sm:$0xf]
    %v4410 = vld [vmem:[#allocation7 + $0xb8] sm:$0xf]
    %v4411 = vld [vmem:[#allocation7 + $0xbc] sm:$0xf]
    %v4412 = vld [vmem:[#allocation7 + $0xc0] sm:$0xf]
    %v4413 = vld [vmem:[#allocation7 + $0xc4] sm:$0xf]
    %v4414 = vld [vmem:[#allocation7 + $0xc8] sm:$0xf]
    %v4415 = vld [vmem:[#allocation7 + $0xcc] sm:$0xf]
    %v4416 = vld [vmem:[#allocation7 + $0xd0] sm:$0xf]
    %v4417 = vld [vmem:[#allocation7 + $0xd4] sm:$0xf]
    %v4418 = vld [vmem:[#allocation7 + $0xd8] sm:$0xf]
    %v4419 = vld [vmem:[#allocation7 + $0xdc] sm:$0xf]
    %v4420 = vld [vmem:[#allocation7 + $0xe0] sm:$0xf]
    %v4421 = vld [vmem:[#allocation7 + $0xe4] sm:$0xf]
    %v4422 = vld [vmem:[#allocation7 + $0xe8] sm:$0xf]
    %v4423 = vld [vmem:[#allocation7 + $0xec] sm:$0xf]
    %v4424 = vld [vmem:[#allocation7 + $0xf0] sm:$0xf]
    %v4425 = vld [vmem:[#allocation7 + $0xf4] sm:$0xf]
    %v4426 = vld [vmem:[#allocation7 + $0xf8] sm:$0xf]
    %v4427 = vld [vmem:[#allocation7 + $0xfc] sm:$0xf]
    %v4492 = vunpack.c.l.b16 %v4364
    %v4493 = vunpack.c.l.b16 %v4365
    %v4494 = vunpack.c.l.b16 %v4366
    %v4495 = vunpack.c.l.b16 %v4367
    %v4496 = vunpack.c.l.b16 %v4368
    %v4497 = vunpack.c.l.b16 %v4369
    %v4498 = vunpack.c.l.b16 %v4370
    %v4499 = vunpack.c.l.b16 %v4371
    %v4500 = vunpack.c.l.b16 %v4372
    %v4501 = vunpack.c.l.b16 %v4373
    %v4502 = vunpack.c.l.b16 %v4374
    %v4503 = vunpack.c.l.b16 %v4375
    %v4504 = vunpack.c.l.b16 %v4376
    %v4505 = vunpack.c.l.b16 %v4377
    %v4506 = vunpack.c.l.b16 %v4378
    %v4507 = vunpack.c.l.b16 %v4379
    %v4508 = vunpack.c.l.b16 %v4380
    %v4509 = vunpack.c.l.b16 %v4381
    %v4510 = vunpack.c.l.b16 %v4382
    %v4511 = vunpack.c.l.b16 %v4383
    %v4512 = vunpack.c.l.b16 %v4384
    %v4513 = vunpack.c.l.b16 %v4385
    %v4514 = vunpack.c.l.b16 %v4386
    %v4515 = vunpack.c.l.b16 %v4387
    %v4516 = vunpack.c.l.b16 %v4388
    %v4517 = vunpack.c.l.b16 %v4389
    %v4518 = vunpack.c.l.b16 %v4390
    %v4519 = vunpack.c.l.b16 %v4391
    %v4520 = vunpack.c.l.b16 %v4392
    %v4521 = vunpack.c.l.b16 %v4393
    %v4522 = vunpack.c.l.b16 %v4394
    %v4523 = vunpack.c.l.b16 %v4395
    %v4524 = vunpack.c.l.b16 %v4396
    %v4525 = vunpack.c.l.b16 %v4397
    %v4526 = vunpack.c.l.b16 %v4398
    %v4527 = vunpack.c.l.b16 %v4399
    %v4528 = vunpack.c.l.b16 %v4400
    %v4529 = vunpack.c.l.b16 %v4401
    %v4530 = vunpack.c.l.b16 %v4402
    %v4531 = vunpack.c.l.b16 %v4403
    %v4532 = vunpack.c.l.b16 %v4404
    %v4533 = vunpack.c.l.b16 %v4405
    %v4534 = vunpack.c.l.b16 %v4406
    %v4535 = vunpack.c.l.b16 %v4407
    %v4536 = vunpack.c.l.b16 %v4408
    %v4537 = vunpack.c.l.b16 %v4409
    %v4538 = vunpack.c.l.b16 %v4410
    %v4539 = vunpack.c.l.b16 %v4411
    %v4540 = vunpack.c.l.b16 %v4412
    %v4541 = vunpack.c.l.b16 %v4413
    %v4542 = vunpack.c.l.b16 %v4414
    %v4543 = vunpack.c.l.b16 %v4415
    %v4544 = vunpack.c.l.b16 %v4416
    %v4545 = vunpack.c.l.b16 %v4417
    %v4546 = vunpack.c.l.b16 %v4418
    %v4547 = vunpack.c.l.b16 %v4419
    %v4548 = vunpack.c.l.b16 %v4420
    %v4549 = vunpack.c.l.b16 %v4421
    %v4550 = vunpack.c.l.b16 %v4422
    %v4551 = vunpack.c.l.b16 %v4423
    %v4552 = vunpack.c.l.b16 %v4424
    %v4553 = vunpack.c.l.b16 %v4425
    %v4554 = vunpack.c.l.b16 %v4426
    %v4555 = vunpack.c.l.b16 %v4427
    %v4556 = vpack.c.b16 %v4493, %v4492
    %v4557 = vpack.c.b16 %v4495, %v4494
    %v4558 = vpack.c.b16 %v4497, %v4496
    %v4559 = vpack.c.b16 %v4499, %v4498
    %v4560 = vpack.c.b16 %v4501, %v4500
    %v4561 = vpack.c.b16 %v4503, %v4502
    %v4562 = vpack.c.b16 %v4505, %v4504
    %v4563 = vpack.c.b16 %v4507, %v4506
    %v4564 = vpack.c.b16 %v4509, %v4508
    %v4565 = vpack.c.b16 %v4511, %v4510
    %v4566 = vpack.c.b16 %v4513, %v4512
    %v4567 = vpack.c.b16 %v4515, %v4514
    %v4568 = vpack.c.b16 %v4517, %v4516
    %v4569 = vpack.c.b16 %v4519, %v4518
    %v4570 = vpack.c.b16 %v4521, %v4520
    %v4571 = vpack.c.b16 %v4523, %v4522
    %v4572 = vpack.c.b16 %v4525, %v4524
    %v4573 = vpack.c.b16 %v4527, %v4526
    %v4574 = vpack.c.b16 %v4529, %v4528
    %v4575 = vpack.c.b16 %v4531, %v4530
    %v4576 = vpack.c.b16 %v4533, %v4532
    %v4577 = vpack.c.b16 %v4535, %v4534
    %v4578 = vpack.c.b16 %v4537, %v4536
    %v4579 = vpack.c.b16 %v4539, %v4538
    %v4580 = vpack.c.b16 %v4541, %v4540
    %v4581 = vpack.c.b16 %v4543, %v4542
    %v4582 = vpack.c.b16 %v4545, %v4544
    %v4583 = vpack.c.b16 %v4547, %v4546
    %v4584 = vpack.c.b16 %v4549, %v4548
    %v4585 = vpack.c.b16 %v4551, %v4550
    %v4586 = vpack.c.b16 %v4553, %v4552
    %v4587 = vpack.c.b16 %v4555, %v4554
    %4620 = vmatprep.subr.bf16.mxu0 0
    %4621 = vmatpush1.bf16.msra.mxu0 %v4563
    %4622 = vmatprep.subr.bf16.mxu0 0
    %4623 = vmatpush1.bf16.msra.mxu0 %v4562
    %4624 = vmatprep.subr.bf16.mxu0 0
    %4625 = vmatpush1.bf16.msra.mxu0 %v4561
    %4626 = vmatprep.subr.bf16.mxu0 0
    %4627 = vmatpush1.bf16.msra.mxu0 %v4560
    %4628 = vmatprep.subr.bf16.mxu0 0
    %4629 = vmatpush1.bf16.msra.mxu0 %v4559
    %4630 = vmatprep.subr.bf16.mxu0 0
    %4631 = vmatpush1.bf16.msra.mxu0 %v4558
    %4632 = vmatprep.subr.bf16.mxu0 0
    %4633 = vmatpush1.bf16.msra.mxu0 %v4557
    %4634 = vmatprep.subr.bf16.mxu0 0
    %4635 = vmatpush1.bf16.msra.mxu0 %v4556
    %4636 = vmatprep.subr.bf16.mxu0 0
    %4637 = vmatpush2.bf16.msra.mxu0 %v4571
    %4638 = vmatprep.subr.bf16.mxu0 0
    %4639 = vmatpush2.bf16.msra.mxu0 %v4570
    %4640 = vmatprep.subr.bf16.mxu0 0
    %4641 = vmatpush2.bf16.msra.mxu0 %v4569
    %4642 = vmatprep.subr.bf16.mxu0 0
    %4643 = vmatpush2.bf16.msra.mxu0 %v4568
    %4644 = vmatprep.subr.bf16.mxu0 0
    %4645 = vmatpush2.bf16.msra.mxu0 %v4567
    %4646 = vmatprep.subr.bf16.mxu0 0
    %4647 = vmatpush2.bf16.msra.mxu0 %v4566
    %4648 = vmatprep.subr.bf16.mxu0 0
    %4649 = vmatpush2.bf16.msra.mxu0 %v4565
    %4650 = vmatprep.subr.bf16.mxu0 0
    %4651 = vmatpush2.bf16.msra.mxu0 %v4564
    %4652 = vmatprep.mubr.bf16.mxu0 %v4237
    %4653 = vmatmul.mubr.bf16.gmra.mxu0 %v4236
    %v4654 = vpop.f32.mrf.mxu0
    %v4655 = vadd.f32 0.0, %v4654
    %v4656 = vpop.f32.mrf.mxu0
    %v4657 = vpop.f32.mrf.mxu0
    %v4658 = vadd.f32 0.0, %v4657
    %v4659 = vpop.f32.mrf.mxu0
    %4660 = vmatprep.mubr.bf16.mxu0 %v4241
    %4661 = vmatmul.mubr.bf16.gmra.mxu0 %v4240
    %v4662 = vpop.f32.mrf.mxu0
    %v4663 = vadd.f32 0.0, %v4662
    %v4664 = vpop.f32.mrf.mxu0
    %v4665 = vpop.f32.mrf.mxu0
    %v4666 = vadd.f32 0.0, %v4665
    %v4667 = vpop.f32.mrf.mxu0
    %4668 = vmatprep.mubr.bf16.mxu0 %v4245
    %4669 = vmatmul.mubr.bf16.gmra.mxu0 %v4244
    %v4670 = vpop.f32.mrf.mxu0
    %v4671 = vadd.f32 0.0, %v4670
    %v4672 = vpop.f32.mrf.mxu0
    %v4673 = vpop.f32.mrf.mxu0
    %v4674 = vadd.f32 0.0, %v4673
    %v4675 = vpop.f32.mrf.mxu0
    %4676 = vmatprep.mubr.bf16.mxu0 %v4249
    %4677 = vmatmul.mubr.bf16.gmra.mxu0 %v4248
    %v4678 = vpop.f32.mrf.mxu0
    %v4679 = vadd.f32 0.0, %v4678
    %v4680 = vpop.f32.mrf.mxu0
    %v4681 = vpop.f32.mrf.mxu0
    %v4682 = vadd.f32 0.0, %v4681
    %v4683 = vpop.f32.mrf.mxu0
    %4684 = vmatprep.mubr.bf16.mxu0 %v4253
    %4685 = vmatmul.mubr.bf16.gmra.mxu0 %v4252
    %v4686 = vpop.f32.mrf.mxu0
    %v4687 = vadd.f32 0.0, %v4686
    %v4688 = vpop.f32.mrf.mxu0
    %v4689 = vpop.f32.mrf.mxu0
    %v4690 = vadd.f32 0.0, %v4689
    %v4691 = vpop.f32.mrf.mxu0
    %4692 = vmatprep.mubr.bf16.mxu0 %v4257
    %4693 = vmatmul.mubr.bf16.gmra.mxu0 %v4256
    %v4694 = vpop.f32.mrf.mxu0
    %v4695 = vadd.f32 0.0, %v4694
    %v4696 = vpop.f32.mrf.mxu0
    %v4697 = vpop.f32.mrf.mxu0
    %v4698 = vadd.f32 0.0, %v4697
    %v4699 = vpop.f32.mrf.mxu0
    %4700 = vmatprep.mubr.bf16.mxu0 %v4261
    %4701 = vmatmul.mubr.bf16.gmra.mxu0 %v4260
    %v4702 = vpop.f32.mrf.mxu0
    %v4703 = vadd.f32 0.0, %v4702
    %v4704 = vpop.f32.mrf.mxu0
    %v4705 = vpop.f32.mrf.mxu0
    %v4706 = vadd.f32 0.0, %v4705
    %v4707 = vpop.f32.mrf.mxu0
    %4708 = vmatprep.mubr.bf16.mxu0 %v4265
    %4709 = vmatmul.mubr.bf16.gmra.mxu0 %v4264
    %v4710 = vpop.f32.mrf.mxu0
    %v4711 = vadd.f32 0.0, %v4710
    %v4712 = vpop.f32.mrf.mxu0
    %v4713 = vpop.f32.mrf.mxu0
    %v4714 = vadd.f32 0.0, %v4713
    %v4715 = vpop.f32.mrf.mxu0
    %4716 = vmatprep.mubr.bf16.mxu0 %v4269
    %4717 = vmatmul.mubr.bf16.gmra.mxu0 %v4268
    %v4718 = vpop.f32.mrf.mxu0
    %v4719 = vadd.f32 0.0, %v4718
    %v4720 = vpop.f32.mrf.mxu0
    %v4721 = vpop.f32.mrf.mxu0
    %v4722 = vadd.f32 0.0, %v4721
    %v4723 = vpop.f32.mrf.mxu0
    %4724 = vmatprep.mubr.bf16.mxu0 %v4273
    %4725 = vmatmul.mubr.bf16.gmra.mxu0 %v4272
    %v4726 = vpop.f32.mrf.mxu0
    %v4727 = vadd.f32 0.0, %v4726
    %v4728 = vpop.f32.mrf.mxu0
    %v4729 = vpop.f32.mrf.mxu0
    %v4730 = vadd.f32 0.0, %v4729
    %v4731 = vpop.f32.mrf.mxu0
    %4732 = vmatprep.mubr.bf16.mxu0 %v4277
    %4733 = vmatmul.mubr.bf16.gmra.mxu0 %v4276
    %v4734 = vpop.f32.mrf.mxu0
    %v4735 = vadd.f32 0.0, %v4734
    %v4736 = vpop.f32.mrf.mxu0
    %v4737 = vpop.f32.mrf.mxu0
    %v4738 = vadd.f32 0.0, %v4737
    %v4739 = vpop.f32.mrf.mxu0
    %4740 = vmatprep.mubr.bf16.mxu0 %v4281
    %4741 = vmatmul.mubr.bf16.gmra.mxu0 %v4280
    %v4742 = vpop.f32.mrf.mxu0
    %v4743 = vadd.f32 0.0, %v4742
    %v4744 = vpop.f32.mrf.mxu0
    %v4745 = vpop.f32.mrf.mxu0
    %v4746 = vadd.f32 0.0, %v4745
    %v4747 = vpop.f32.mrf.mxu0
    %4748 = vmatprep.mubr.bf16.mxu0 %v4285
    %4749 = vmatmul.mubr.bf16.gmra.mxu0 %v4284
    %v4750 = vpop.f32.mrf.mxu0
    %v4751 = vadd.f32 0.0, %v4750
    %v4752 = vpop.f32.mrf.mxu0
    %v4753 = vpop.f32.mrf.mxu0
    %v4754 = vadd.f32 0.0, %v4753
    %v4755 = vpop.f32.mrf.mxu0
    %4756 = vmatprep.mubr.bf16.mxu0 %v4289
    %4757 = vmatmul.mubr.bf16.gmra.mxu0 %v4288
    %v4758 = vpop.f32.mrf.mxu0
    %v4759 = vadd.f32 0.0, %v4758
    %v4760 = vpop.f32.mrf.mxu0
    %v4761 = vpop.f32.mrf.mxu0
    %v4762 = vadd.f32 0.0, %v4761
    %v4763 = vpop.f32.mrf.mxu0
    %4764 = vmatprep.mubr.bf16.mxu0 %v4293
    %4765 = vmatmul.mubr.bf16.gmra.mxu0 %v4292
    %v4766 = vpop.f32.mrf.mxu0
    %v4767 = vadd.f32 0.0, %v4766
    %v4768 = vpop.f32.mrf.mxu0
    %v4769 = vpop.f32.mrf.mxu0
    %v4770 = vadd.f32 0.0, %v4769
    %v4771 = vpop.f32.mrf.mxu0
    %4772 = vmatprep.mubr.bf16.mxu0 %v4297
    %4773 = vmatmul.mubr.bf16.gmra.mxu0 %v4296
    %v4774 = vpop.f32.mrf.mxu0
    %v4775 = vadd.f32 0.0, %v4774
    %v4776 = vpop.f32.mrf.mxu0
    %v4777 = vpop.f32.mrf.mxu0
    %v4778 = vadd.f32 0.0, %v4777
    %v4779 = vpop.f32.mrf.mxu0
    %4780 = vmatprep.mubr.bf16.mxu0 %v4301
    %4781 = vmatmul.mubr.bf16.gmra.mxu0 %v4300
    %v4782 = vpop.f32.mrf.mxu0
    %v4783 = vadd.f32 0.0, %v4782
    %v4784 = vpop.f32.mrf.mxu0
    %v4785 = vpop.f32.mrf.mxu0
    %v4786 = vadd.f32 0.0, %v4785
    %v4787 = vpop.f32.mrf.mxu0
    %4788 = vmatprep.mubr.bf16.mxu0 %v4305
    %4789 = vmatmul.mubr.bf16.gmra.mxu0 %v4304
    %v4790 = vpop.f32.mrf.mxu0
    %v4791 = vadd.f32 0.0, %v4790
    %v4792 = vpop.f32.mrf.mxu0
    %v4793 = vpop.f32.mrf.mxu0
    %v4794 = vadd.f32 0.0, %v4793
    %v4795 = vpop.f32.mrf.mxu0
    %4796 = vmatprep.mubr.bf16.mxu0 %v4309
    %4797 = vmatmul.mubr.bf16.gmra.mxu0 %v4308
    %v4798 = vpop.f32.mrf.mxu0
    %v4799 = vadd.f32 0.0, %v4798
    %v4800 = vpop.f32.mrf.mxu0
    %v4801 = vpop.f32.mrf.mxu0
    %v4802 = vadd.f32 0.0, %v4801
    %v4803 = vpop.f32.mrf.mxu0
    %4804 = vmatprep.mubr.bf16.mxu0 %v4313
    %4805 = vmatmul.mubr.bf16.gmra.mxu0 %v4312
    %v4806 = vpop.f32.mrf.mxu0
    %v4807 = vadd.f32 0.0, %v4806
    %v4808 = vpop.f32.mrf.mxu0
    %v4809 = vpop.f32.mrf.mxu0
    %v4810 = vadd.f32 0.0, %v4809
    %v4811 = vpop.f32.mrf.mxu0
    %4812 = vmatprep.mubr.bf16.mxu0 %v4317
    %4813 = vmatmul.mubr.bf16.gmra.mxu0 %v4316
    %v4814 = vpop.f32.mrf.mxu0
    %v4815 = vadd.f32 0.0, %v4814
    %v4816 = vpop.f32.mrf.mxu0
    %v4817 = vpop.f32.mrf.mxu0
    %v4818 = vadd.f32 0.0, %v4817
    %v4819 = vpop.f32.mrf.mxu0
    %4820 = vmatprep.mubr.bf16.mxu0 %v4321
    %4821 = vmatmul.mubr.bf16.gmra.mxu0 %v4320
    %v4822 = vpop.f32.mrf.mxu0
    %v4823 = vadd.f32 0.0, %v4822
    %v4824 = vpop.f32.mrf.mxu0
    %v4825 = vpop.f32.mrf.mxu0
    %v4826 = vadd.f32 0.0, %v4825
    %v4827 = vpop.f32.mrf.mxu0
    %4828 = vmatprep.mubr.bf16.mxu0 %v4325
    %4829 = vmatmul.mubr.bf16.gmra.mxu0 %v4324
    %v4830 = vpop.f32.mrf.mxu0
    %v4831 = vadd.f32 0.0, %v4830
    %v4832 = vpop.f32.mrf.mxu0
    %v4833 = vpop.f32.mrf.mxu0
    %v4834 = vadd.f32 0.0, %v4833
    %v4835 = vpop.f32.mrf.mxu0
    %4836 = vmatprep.mubr.bf16.mxu0 %v4329
    %4837 = vmatmul.mubr.bf16.gmra.mxu0 %v4328
    %v4838 = vpop.f32.mrf.mxu0
    %v4839 = vadd.f32 0.0, %v4838
    %v4840 = vpop.f32.mrf.mxu0
    %v4841 = vpop.f32.mrf.mxu0
    %v4842 = vadd.f32 0.0, %v4841
    %v4843 = vpop.f32.mrf.mxu0
    %4844 = vmatprep.mubr.bf16.mxu0 %v4333
    %4845 = vmatmul.mubr.bf16.gmra.mxu0 %v4332
    %v4846 = vpop.f32.mrf.mxu0
    %v4847 = vadd.f32 0.0, %v4846
    %v4848 = vpop.f32.mrf.mxu0
    %v4849 = vpop.f32.mrf.mxu0
    %v4850 = vadd.f32 0.0, %v4849
    %v4851 = vpop.f32.mrf.mxu0
    %4852 = vmatprep.mubr.bf16.mxu0 %v4337
    %4853 = vmatmul.mubr.bf16.gmra.mxu0 %v4336
    %v4854 = vpop.f32.mrf.mxu0
    %v4855 = vadd.f32 0.0, %v4854
    %v4856 = vpop.f32.mrf.mxu0
    %v4857 = vpop.f32.mrf.mxu0
    %v4858 = vadd.f32 0.0, %v4857
    %v4859 = vpop.f32.mrf.mxu0
    %4860 = vmatprep.mubr.bf16.mxu0 %v4341
    %4861 = vmatmul.mubr.bf16.gmra.mxu0 %v4340
    %v4862 = vpop.f32.mrf.mxu0
    %v4863 = vadd.f32 0.0, %v4862
    %v4864 = vpop.f32.mrf.mxu0
    %v4865 = vpop.f32.mrf.mxu0
    %v4866 = vadd.f32 0.0, %v4865
    %v4867 = vpop.f32.mrf.mxu0
    %4868 = vmatprep.mubr.bf16.mxu0 %v4345
    %4869 = vmatmul.mubr.bf16.gmra.mxu0 %v4344
    %v4870 = vpop.f32.mrf.mxu0
    %v4871 = vadd.f32 0.0, %v4870
    %v4872 = vpop.f32.mrf.mxu0
    %v4873 = vpop.f32.mrf.mxu0
    %v4874 = vadd.f32 0.0, %v4873
    %v4875 = vpop.f32.mrf.mxu0
    %4876 = vmatprep.mubr.bf16.mxu0 %v4349
    %4877 = vmatmul.mubr.bf16.gmra.mxu0 %v4348
    %v4878 = vpop.f32.mrf.mxu0
    %v4879 = vadd.f32 0.0, %v4878
    %v4880 = vpop.f32.mrf.mxu0
    %v4881 = vpop.f32.mrf.mxu0
    %v4882 = vadd.f32 0.0, %v4881
    %v4883 = vpop.f32.mrf.mxu0
    %4884 = vmatprep.mubr.bf16.mxu0 %v4353
    %4885 = vmatmul.mubr.bf16.gmra.mxu0 %v4352
    %v4886 = vpop.f32.mrf.mxu0
    %v4887 = vadd.f32 0.0, %v4886
    %v4888 = vpop.f32.mrf.mxu0
    %v4889 = vpop.f32.mrf.mxu0
    %v4890 = vadd.f32 0.0, %v4889
    %v4891 = vpop.f32.mrf.mxu0
    %4892 = vmatprep.mubr.bf16.mxu0 %v4357
    %4893 = vmatmul.mubr.bf16.gmra.mxu0 %v4356
    %v4894 = vpop.f32.mrf.mxu0
    %v4895 = vadd.f32 0.0, %v4894
    %v4896 = vpop.f32.mrf.mxu0
    %v4897 = vpop.f32.mrf.mxu0
    %v4898 = vadd.f32 0.0, %v4897
    %v4899 = vpop.f32.mrf.mxu0
    %4900 = vmatprep.mubr.bf16.mxu0 %v4361
    %4901 = vmatmul.mubr.bf16.gmra.mxu0 %v4360
    %v4902 = vpop.f32.mrf.mxu0
    %v4903 = vadd.f32 0.0, %v4902
    %v4904 = vpop.f32.mrf.mxu0
    %v4905 = vpop.f32.mrf.mxu0
    %v4906 = vadd.f32 0.0, %v4905
    %v4907 = vpop.f32.mrf.mxu0
    %4908 = vdwg.mxu0
    %4909 = vmatprep.subr.bf16.mxu0 0
    %4910 = vmatpush1.bf16.msra.mxu0 %v4579
    %4911 = vmatprep.subr.bf16.mxu0 0
    %4912 = vmatpush1.bf16.msra.mxu0 %v4578
    %4913 = vmatprep.subr.bf16.mxu0 0
    %4914 = vmatpush1.bf16.msra.mxu0 %v4577
    %4915 = vmatprep.subr.bf16.mxu0 0
    %4916 = vmatpush1.bf16.msra.mxu0 %v4576
    %4917 = vmatprep.subr.bf16.mxu0 0
    %4918 = vmatpush1.bf16.msra.mxu0 %v4575
    %4919 = vmatprep.subr.bf16.mxu0 0
    %4920 = vmatpush1.bf16.msra.mxu0 %v4574
    %4921 = vmatprep.subr.bf16.mxu0 0
    %4922 = vmatpush1.bf16.msra.mxu0 %v4573
    %4923 = vmatprep.subr.bf16.mxu0 0
    %4924 = vmatpush1.bf16.msra.mxu0 %v4572
    %4925 = vmatprep.subr.bf16.mxu0 0
    %4926 = vmatpush2.bf16.msra.mxu0 %v4587
    %4927 = vmatprep.subr.bf16.mxu0 0
    %4928 = vmatpush2.bf16.msra.mxu0 %v4586
    %4929 = vmatprep.subr.bf16.mxu0 0
    %4930 = vmatpush2.bf16.msra.mxu0 %v4585
    %4931 = vmatprep.subr.bf16.mxu0 0
    %4932 = vmatpush2.bf16.msra.mxu0 %v4584
    %4933 = vmatprep.subr.bf16.mxu0 0
    %4934 = vmatpush2.bf16.msra.mxu0 %v4583
    %4935 = vmatprep.subr.bf16.mxu0 0
    %4936 = vmatpush2.bf16.msra.mxu0 %v4582
    %4937 = vmatprep.subr.bf16.mxu0 0
    %4938 = vmatpush2.bf16.msra.mxu0 %v4581
    %4939 = vmatprep.subr.bf16.mxu0 0
    %4940 = vmatpush2.bf16.msra.mxu0 %v4580
    %4941 = vmatprep.mubr.bf16.mxu0 %v4239
    %4942 = vmatmul.mubr.bf16.gmra.mxu0 %v4238
    %v4943 = vpop.f32.mrf.mxu0
    %v4944 = vadd.f32 %v4655, %v4943
    %v4945 = vpop.f32.mrf.mxu0
    %v4946 = vpop.f32.mrf.mxu0
    %v4947 = vadd.f32 %v4658, %v4946
    %v4948 = vpop.f32.mrf.mxu0
    %4949 = vmatprep.mubr.bf16.mxu0 %v4243
    %4950 = vmatmul.mubr.bf16.gmra.mxu0 %v4242
    %v4951 = vpop.f32.mrf.mxu0
    %v4952 = vadd.f32 %v4663, %v4951
    %v4953 = vpop.f32.mrf.mxu0
    %v4954 = vpop.f32.mrf.mxu0
    %v4955 = vadd.f32 %v4666, %v4954
    %v4956 = vpop.f32.mrf.mxu0
    %4957 = vmatprep.mubr.bf16.mxu0 %v4247
    %4958 = vmatmul.mubr.bf16.gmra.mxu0 %v4246
    %v4959 = vpop.f32.mrf.mxu0
    %v4960 = vadd.f32 %v4671, %v4959
    %v4961 = vpop.f32.mrf.mxu0
    %v4962 = vpop.f32.mrf.mxu0
    %v4963 = vadd.f32 %v4674, %v4962
    %v4964 = vpop.f32.mrf.mxu0
    %4965 = vmatprep.mubr.bf16.mxu0 %v4251
    %4966 = vmatmul.mubr.bf16.gmra.mxu0 %v4250
    %v4967 = vpop.f32.mrf.mxu0
    %v4968 = vadd.f32 %v4679, %v4967
    %v4969 = vpop.f32.mrf.mxu0
    %v4970 = vpop.f32.mrf.mxu0
    %v4971 = vadd.f32 %v4682, %v4970
    %v4972 = vpop.f32.mrf.mxu0
    %4973 = vmatprep.mubr.bf16.mxu0 %v4255
    %4974 = vmatmul.mubr.bf16.gmra.mxu0 %v4254
    %v4975 = vpop.f32.mrf.mxu0
    %v4976 = vadd.f32 %v4687, %v4975
    %v4977 = vpop.f32.mrf.mxu0
    %v4978 = vpop.f32.mrf.mxu0
    %v4979 = vadd.f32 %v4690, %v4978
    %v4980 = vpop.f32.mrf.mxu0
    %4981 = vmatprep.mubr.bf16.mxu0 %v4259
    %4982 = vmatmul.mubr.bf16.gmra.mxu0 %v4258
    %v4983 = vpop.f32.mrf.mxu0
    %v4984 = vadd.f32 %v4695, %v4983
    %v4985 = vpop.f32.mrf.mxu0
    %v4986 = vpop.f32.mrf.mxu0
    %v4987 = vadd.f32 %v4698, %v4986
    %v4988 = vpop.f32.mrf.mxu0
    %4989 = vmatprep.mubr.bf16.mxu0 %v4263
    %4990 = vmatmul.mubr.bf16.gmra.mxu0 %v4262
    %v4991 = vpop.f32.mrf.mxu0
    %v4992 = vadd.f32 %v4703, %v4991
    %v4993 = vpop.f32.mrf.mxu0
    %v4994 = vpop.f32.mrf.mxu0
    %v4995 = vadd.f32 %v4706, %v4994
    %v4996 = vpop.f32.mrf.mxu0
    %4997 = vmatprep.mubr.bf16.mxu0 %v4267
    %4998 = vmatmul.mubr.bf16.gmra.mxu0 %v4266
    %v4999 = vpop.f32.mrf.mxu0
    %v5000 = vadd.f32 %v4711, %v4999
    %v5001 = vpop.f32.mrf.mxu0
    %v5002 = vpop.f32.mrf.mxu0
    %v5003 = vadd.f32 %v4714, %v5002
    %v5004 = vpop.f32.mrf.mxu0
    %5005 = vmatprep.mubr.bf16.mxu0 %v4271
    %5006 = vmatmul.mubr.bf16.gmra.mxu0 %v4270
    %v5007 = vpop.f32.mrf.mxu0
    %v5008 = vadd.f32 %v4719, %v5007
    %v5009 = vpop.f32.mrf.mxu0
    %v5010 = vpop.f32.mrf.mxu0
    %v5011 = vadd.f32 %v4722, %v5010
    %v5012 = vpop.f32.mrf.mxu0
    %5013 = vmatprep.mubr.bf16.mxu0 %v4275
    %5014 = vmatmul.mubr.bf16.gmra.mxu0 %v4274
    %v5015 = vpop.f32.mrf.mxu0
    %v5016 = vadd.f32 %v4727, %v5015
    %v5017 = vpop.f32.mrf.mxu0
    %v5018 = vpop.f32.mrf.mxu0
    %v5019 = vadd.f32 %v4730, %v5018
    %v5020 = vpop.f32.mrf.mxu0
    %5021 = vmatprep.mubr.bf16.mxu0 %v4279
    %5022 = vmatmul.mubr.bf16.gmra.mxu0 %v4278
    %v5023 = vpop.f32.mrf.mxu0
    %v5024 = vadd.f32 %v4735, %v5023
    %v5025 = vpop.f32.mrf.mxu0
    %v5026 = vpop.f32.mrf.mxu0
    %v5027 = vadd.f32 %v4738, %v5026
    %v5028 = vpop.f32.mrf.mxu0
    %5029 = vmatprep.mubr.bf16.mxu0 %v4283
    %5030 = vmatmul.mubr.bf16.gmra.mxu0 %v4282
    %v5031 = vpop.f32.mrf.mxu0
    %v5032 = vadd.f32 %v4743, %v5031
    %v5033 = vpop.f32.mrf.mxu0
    %v5034 = vpop.f32.mrf.mxu0
    %v5035 = vadd.f32 %v4746, %v5034
    %v5036 = vpop.f32.mrf.mxu0
    %5037 = vmatprep.mubr.bf16.mxu0 %v4287
    %5038 = vmatmul.mubr.bf16.gmra.mxu0 %v4286
    %v5039 = vpop.f32.mrf.mxu0
    %v5040 = vadd.f32 %v4751, %v5039
    %v5041 = vpop.f32.mrf.mxu0
    %v5042 = vpop.f32.mrf.mxu0
    %v5043 = vadd.f32 %v4754, %v5042
    %v5044 = vpop.f32.mrf.mxu0
    %5045 = vmatprep.mubr.bf16.mxu0 %v4291
    %5046 = vmatmul.mubr.bf16.gmra.mxu0 %v4290
    %v5047 = vpop.f32.mrf.mxu0
    %v5048 = vadd.f32 %v4759, %v5047
    %v5049 = vpop.f32.mrf.mxu0
    %v5050 = vpop.f32.mrf.mxu0
    %v5051 = vadd.f32 %v4762, %v5050
    %v5052 = vpop.f32.mrf.mxu0
    %5053 = vmatprep.mubr.bf16.mxu0 %v4295
    %5054 = vmatmul.mubr.bf16.gmra.mxu0 %v4294
    %v5055 = vpop.f32.mrf.mxu0
    %v5056 = vadd.f32 %v4767, %v5055
    %v5057 = vpop.f32.mrf.mxu0
    %v5058 = vpop.f32.mrf.mxu0
    %v5059 = vadd.f32 %v4770, %v5058
    %v5060 = vpop.f32.mrf.mxu0
    %5061 = vmatprep.mubr.bf16.mxu0 %v4299
    %5062 = vmatmul.mubr.bf16.gmra.mxu0 %v4298
    %v5063 = vpop.f32.mrf.mxu0
    %v5064 = vadd.f32 %v4775, %v5063
    %v5065 = vpop.f32.mrf.mxu0
    %v5066 = vpop.f32.mrf.mxu0
    %v5067 = vadd.f32 %v4778, %v5066
    %v5068 = vpop.f32.mrf.mxu0
    %5069 = vmatprep.mubr.bf16.mxu0 %v4303
    %5070 = vmatmul.mubr.bf16.gmra.mxu0 %v4302
    %v5071 = vpop.f32.mrf.mxu0
    %v5072 = vadd.f32 %v4783, %v5071
    %v5073 = vpop.f32.mrf.mxu0
    %v5074 = vpop.f32.mrf.mxu0
    %v5075 = vadd.f32 %v4786, %v5074
    %v5076 = vpop.f32.mrf.mxu0
    %5077 = vmatprep.mubr.bf16.mxu0 %v4307
    %5078 = vmatmul.mubr.bf16.gmra.mxu0 %v4306
    %v5079 = vpop.f32.mrf.mxu0
    %v5080 = vadd.f32 %v4791, %v5079
    %v5081 = vpop.f32.mrf.mxu0
    %v5082 = vpop.f32.mrf.mxu0
    %v5083 = vadd.f32 %v4794, %v5082
    %v5084 = vpop.f32.mrf.mxu0
    %5085 = vmatprep.mubr.bf16.mxu0 %v4311
    %5086 = vmatmul.mubr.bf16.gmra.mxu0 %v4310
    %v5087 = vpop.f32.mrf.mxu0
    %v5088 = vadd.f32 %v4799, %v5087
    %v5089 = vpop.f32.mrf.mxu0
    %v5090 = vpop.f32.mrf.mxu0
    %v5091 = vadd.f32 %v4802, %v5090
    %v5092 = vpop.f32.mrf.mxu0
    %5093 = vmatprep.mubr.bf16.mxu0 %v4315
    %5094 = vmatmul.mubr.bf16.gmra.mxu0 %v4314
    %v5095 = vpop.f32.mrf.mxu0
    %v5096 = vadd.f32 %v4807, %v5095
    %v5097 = vpop.f32.mrf.mxu0
    %v5098 = vpop.f32.mrf.mxu0
    %v5099 = vadd.f32 %v4810, %v5098
    %v5100 = vpop.f32.mrf.mxu0
    %5101 = vmatprep.mubr.bf16.mxu0 %v4319
    %5102 = vmatmul.mubr.bf16.gmra.mxu0 %v4318
    %v5103 = vpop.f32.mrf.mxu0
    %v5104 = vadd.f32 %v4815, %v5103
    %v5105 = vpop.f32.mrf.mxu0
    %v5106 = vpop.f32.mrf.mxu0
    %v5107 = vadd.f32 %v4818, %v5106
    %v5108 = vpop.f32.mrf.mxu0
    %5109 = vmatprep.mubr.bf16.mxu0 %v4323
    %5110 = vmatmul.mubr.bf16.gmra.mxu0 %v4322
    %v5111 = vpop.f32.mrf.mxu0
    %v5112 = vadd.f32 %v4823, %v5111
    %v5113 = vpop.f32.mrf.mxu0
    %v5114 = vpop.f32.mrf.mxu0
    %v5115 = vadd.f32 %v4826, %v5114
    %v5116 = vpop.f32.mrf.mxu0
    %5117 = vmatprep.mubr.bf16.mxu0 %v4327
    %5118 = vmatmul.mubr.bf16.gmra.mxu0 %v4326
    %v5119 = vpop.f32.mrf.mxu0
    %v5120 = vadd.f32 %v4831, %v5119
    %v5121 = vpop.f32.mrf.mxu0
    %v5122 = vpop.f32.mrf.mxu0
    %v5123 = vadd.f32 %v4834, %v5122
    %v5124 = vpop.f32.mrf.mxu0
    %5125 = vmatprep.mubr.bf16.mxu0 %v4331
    %5126 = vmatmul.mubr.bf16.gmra.mxu0 %v4330
    %v5127 = vpop.f32.mrf.mxu0
    %v5128 = vadd.f32 %v4839, %v5127
    %v5129 = vpop.f32.mrf.mxu0
    %v5130 = vpop.f32.mrf.mxu0
    %v5131 = vadd.f32 %v4842, %v5130
    %v5132 = vpop.f32.mrf.mxu0
    %5133 = vmatprep.mubr.bf16.mxu0 %v4335
    %5134 = vmatmul.mubr.bf16.gmra.mxu0 %v4334
    %v5135 = vpop.f32.mrf.mxu0
    %v5136 = vadd.f32 %v4847, %v5135
    %v5137 = vpop.f32.mrf.mxu0
    %v5138 = vpop.f32.mrf.mxu0
    %v5139 = vadd.f32 %v4850, %v5138
    %v5140 = vpop.f32.mrf.mxu0
    %5141 = vmatprep.mubr.bf16.mxu0 %v4339
    %5142 = vmatmul.mubr.bf16.gmra.mxu0 %v4338
    %v5143 = vpop.f32.mrf.mxu0
    %v5144 = vadd.f32 %v4855, %v5143
    %v5145 = vpop.f32.mrf.mxu0
    %v5146 = vpop.f32.mrf.mxu0
    %v5147 = vadd.f32 %v4858, %v5146
    %v5148 = vpop.f32.mrf.mxu0
    %5149 = vmatprep.mubr.bf16.mxu0 %v4343
    %5150 = vmatmul.mubr.bf16.gmra.mxu0 %v4342
    %v5151 = vpop.f32.mrf.mxu0
    %v5152 = vadd.f32 %v4863, %v5151
    %v5153 = vpop.f32.mrf.mxu0
    %v5154 = vpop.f32.mrf.mxu0
    %v5155 = vadd.f32 %v4866, %v5154
    %v5156 = vpop.f32.mrf.mxu0
    %5157 = vmatprep.mubr.bf16.mxu0 %v4347
    %5158 = vmatmul.mubr.bf16.gmra.mxu0 %v4346
    %v5159 = vpop.f32.mrf.mxu0
    %v5160 = vadd.f32 %v4871, %v5159
    %v5161 = vpop.f32.mrf.mxu0
    %v5162 = vpop.f32.mrf.mxu0
    %v5163 = vadd.f32 %v4874, %v5162
    %v5164 = vpop.f32.mrf.mxu0
    %5165 = vmatprep.mubr.bf16.mxu0 %v4351
    %5166 = vmatmul.mubr.bf16.gmra.mxu0 %v4350
    %v5167 = vpop.f32.mrf.mxu0
    %v5168 = vadd.f32 %v4879, %v5167
    %v5169 = vpop.f32.mrf.mxu0
    %v5170 = vpop.f32.mrf.mxu0
    %v5171 = vadd.f32 %v4882, %v5170
    %v5172 = vpop.f32.mrf.mxu0
    %5173 = vmatprep.mubr.bf16.mxu0 %v4355
    %5174 = vmatmul.mubr.bf16.gmra.mxu0 %v4354
    %v5175 = vpop.f32.mrf.mxu0
    %v5176 = vadd.f32 %v4887, %v5175
    %v5177 = vpop.f32.mrf.mxu0
    %v5178 = vpop.f32.mrf.mxu0
    %v5179 = vadd.f32 %v4890, %v5178
    %v5180 = vpop.f32.mrf.mxu0
    %5181 = vmatprep.mubr.bf16.mxu0 %v4359
    %5182 = vmatmul.mubr.bf16.gmra.mxu0 %v4358
    %v5183 = vpop.f32.mrf.mxu0
    %v5184 = vadd.f32 %v4895, %v5183
    %v5185 = vpop.f32.mrf.mxu0
    %v5186 = vpop.f32.mrf.mxu0
    %v5187 = vadd.f32 %v4898, %v5186
    %v5188 = vpop.f32.mrf.mxu0
    %5189 = vmatprep.mubr.bf16.mxu0 %v4363
    %5190 = vmatmul.mubr.bf16.gmra.mxu0 %v4362
    %v5191 = vpop.f32.mrf.mxu0
    %v5192 = vadd.f32 %v4903, %v5191
    %v5193 = vpop.f32.mrf.mxu0
    %v5194 = vpop.f32.mrf.mxu0
    %v5195 = vadd.f32 %v4906, %v5194
    %v5196 = vpop.f32.mrf.mxu0
    %5197 = vdwg.mxu0
    %v5198 = vadd.f32 %v69, %v4944
    %v5199 = vadd.f32 %v70, %v4947
    %v5200 = vadd.f32 %v71, %v4952
    %v5201 = vadd.f32 %v72, %v4955
    %v5202 = vadd.f32 %v73, %v4960
    %v5203 = vadd.f32 %v74, %v4963
    %v5204 = vadd.f32 %v75, %v4968
    %v5205 = vadd.f32 %v76, %v4971
    %v5206 = vadd.f32 %v77, %v4976
    %v5207 = vadd.f32 %v78, %v4979
    %v5208 = vadd.f32 %v79, %v4984
    %v5209 = vadd.f32 %v80, %v4987
    %v5210 = vadd.f32 %v81, %v4992
    %v5211 = vadd.f32 %v82, %v4995
    %v5212 = vadd.f32 %v83, %v5000
    %v5213 = vadd.f32 %v84, %v5003
    %v5214 = vadd.f32 %v85, %v5008
    %v5215 = vadd.f32 %v86, %v5011
    %v5216 = vadd.f32 %v87, %v5016
    %v5217 = vadd.f32 %v88, %v5019
    %v5218 = vadd.f32 %v89, %v5024
    %v5219 = vadd.f32 %v90, %v5027
    %v5220 = vadd.f32 %v91, %v5032
    %v5221 = vadd.f32 %v92, %v5035
    %v5222 = vadd.f32 %v93, %v5040
    %v5223 = vadd.f32 %v94, %v5043
    %v5224 = vadd.f32 %v95, %v5048
    %v5225 = vadd.f32 %v96, %v5051
    %v5226 = vadd.f32 %v97, %v5056
    %v5227 = vadd.f32 %v98, %v5059
    %v5228 = vadd.f32 %v99, %v5064
    %v5229 = vadd.f32 %v100, %v5067
    %v5230 = vadd.f32 %v101, %v5072
    %v5231 = vadd.f32 %v102, %v5075
    %v5232 = vadd.f32 %v103, %v5080
    %v5233 = vadd.f32 %v104, %v5083
    %v5234 = vadd.f32 %v105, %v5088
    %v5235 = vadd.f32 %v106, %v5091
    %v5236 = vadd.f32 %v107, %v5096
    %v5237 = vadd.f32 %v108, %v5099
    %v5238 = vadd.f32 %v109, %v5104
    %v5239 = vadd.f32 %v110, %v5107
    %v5240 = vadd.f32 %v111, %v5112
    %v5241 = vadd.f32 %v112, %v5115
    %v5242 = vadd.f32 %v113, %v5120
    %v5243 = vadd.f32 %v114, %v5123
    %v5244 = vadd.f32 %v115, %v5128
    %v5245 = vadd.f32 %v116, %v5131
    %v5246 = vadd.f32 %v117, %v5136
    %v5247 = vadd.f32 %v118, %v5139
    %v5248 = vadd.f32 %v119, %v5144
    %v5249 = vadd.f32 %v120, %v5147
    %v5250 = vadd.f32 %v121, %v5152
    %v5251 = vadd.f32 %v122, %v5155
    %v5252 = vadd.f32 %v123, %v5160
    %v5253 = vadd.f32 %v124, %v5163
    %v5254 = vadd.f32 %v125, %v5168
    %v5255 = vadd.f32 %v126, %v5171
    %v5256 = vadd.f32 %v127, %v5176
    %v5257 = vadd.f32 %v128, %v5179
    %v5258 = vadd.f32 %v129, %v5184
    %v5259 = vadd.f32 %v130, %v5187
    %v5260 = vadd.f32 %v131, %v5192
    %v5261 = vadd.f32 %v132, %v5195
    %v5262 = vld [vmem:[%s6] sm:$0x1]
    %v5264 = vlaneseq
    %v5265 = vshrl.u32 %v5264, 7
    %v5266 = vsub.s32 0, %v5265
    %v5267 = vrot.slane %v5262, %v5266
    %v5269 = vadd.f32 %v5198, %v5267
    %v5270 = vadd.f32 %v5199, %v5267
    %v5271 = vadd.f32 %v5200, %v5267
    %v5272 = vadd.f32 %v5201, %v5267
    %v5273 = vadd.f32 %v5202, %v5267
    %v5274 = vadd.f32 %v5203, %v5267
    %v5275 = vadd.f32 %v5204, %v5267
    %v5276 = vadd.f32 %v5205, %v5267
    %v5277 = vadd.f32 %v5206, %v5267
    %v5278 = vadd.f32 %v5207, %v5267
    %v5279 = vadd.f32 %v5208, %v5267
    %v5280 = vadd.f32 %v5209, %v5267
    %v5281 = vadd.f32 %v5210, %v5267
    %v5282 = vadd.f32 %v5211, %v5267
    %v5283 = vadd.f32 %v5212, %v5267
    %v5284 = vadd.f32 %v5213, %v5267
    %v5285 = vadd.f32 %v5214, %v5267
    %v5286 = vadd.f32 %v5215, %v5267
    %v5287 = vadd.f32 %v5216, %v5267
    %v5288 = vadd.f32 %v5217, %v5267
    %v5289 = vadd.f32 %v5218, %v5267
    %v5290 = vadd.f32 %v5219, %v5267
    %v5291 = vadd.f32 %v5220, %v5267
    %v5292 = vadd.f32 %v5221, %v5267
    %v5293 = vadd.f32 %v5222, %v5267
    %v5294 = vadd.f32 %v5223, %v5267
    %v5295 = vadd.f32 %v5224, %v5267
    %v5296 = vadd.f32 %v5225, %v5267
    %v5297 = vadd.f32 %v5226, %v5267
    %v5298 = vadd.f32 %v5227, %v5267
    %v5299 = vadd.f32 %v5228, %v5267
    %v5300 = vadd.f32 %v5229, %v5267
    %v5301 = vadd.f32 %v5230, %v5267
    %v5302 = vadd.f32 %v5231, %v5267
    %v5303 = vadd.f32 %v5232, %v5267
    %v5304 = vadd.f32 %v5233, %v5267
    %v5305 = vadd.f32 %v5234, %v5267
    %v5306 = vadd.f32 %v5235, %v5267
    %v5307 = vadd.f32 %v5236, %v5267
    %v5308 = vadd.f32 %v5237, %v5267
    %v5309 = vadd.f32 %v5238, %v5267
    %v5310 = vadd.f32 %v5239, %v5267
    %v5311 = vadd.f32 %v5240, %v5267
    %v5312 = vadd.f32 %v5241, %v5267
    %v5313 = vadd.f32 %v5242, %v5267
    %v5314 = vadd.f32 %v5243, %v5267
    %v5315 = vadd.f32 %v5244, %v5267
    %v5316 = vadd.f32 %v5245, %v5267
    %v5317 = vadd.f32 %v5246, %v5267
    %v5318 = vadd.f32 %v5247, %v5267
    %v5319 = vadd.f32 %v5248, %v5267
    %v5320 = vadd.f32 %v5249, %v5267
    %v5321 = vadd.f32 %v5250, %v5267
    %v5322 = vadd.f32 %v5251, %v5267
    %v5323 = vadd.f32 %v5252, %v5267
    %v5324 = vadd.f32 %v5253, %v5267
    %v5325 = vadd.f32 %v5254, %v5267
    %v5326 = vadd.f32 %v5255, %v5267
    %v5327 = vadd.f32 %v5256, %v5267
    %v5328 = vadd.f32 %v5257, %v5267
    %v5329 = vadd.f32 %v5258, %v5267
    %v5330 = vadd.f32 %v5259, %v5267
    %v5331 = vadd.f32 %v5260, %v5267
    %v5332 = vadd.f32 %v5261, %v5267
    %5333 = vst [vmem:[#allocation8] sm:$0xff] %v5269
    %5334 = vst [vmem:[#allocation8 + $0x8] sm:$0xff] %v5270
    %5335 = vst [vmem:[#allocation8 + $0x10] sm:$0xff] %v5271
    %5336 = vst [vmem:[#allocation8 + $0x18] sm:$0xff] %v5272
    %5337 = vst [vmem:[#allocation8 + $0x20] sm:$0xff] %v5273
    %5338 = vst [vmem:[#allocation8 + $0x28] sm:$0xff] %v5274
    %5339 = vst [vmem:[#allocation8 + $0x30] sm:$0xff] %v5275
    %5340 = vst [vmem:[#allocation8 + $0x38] sm:$0xff] %v5276
    %5341 = vst [vmem:[#allocation8 + $0x40] sm:$0xff] %v5277
    %5342 = vst [vmem:[#allocation8 + $0x48] sm:$0xff] %v5278
    %5343 = vst [vmem:[#allocation8 + $0x50] sm:$0xff] %v5279
    %5344 = vst [vmem:[#allocation8 + $0x58] sm:$0xff] %v5280
    %5345 = vst [vmem:[#allocation8 + $0x60] sm:$0xff] %v5281
    %5346 = vst [vmem:[#allocation8 + $0x68] sm:$0xff] %v5282
    %5347 = vst [vmem:[#allocation8 + $0x70] sm:$0xff] %v5283
    %5348 = vst [vmem:[#allocation8 + $0x78] sm:$0xff] %v5284
    %5349 = vst [vmem:[#allocation8 + $0x80] sm:$0xff] %v5285
    %5350 = vst [vmem:[#allocation8 + $0x88] sm:$0xff] %v5286
    %5351 = vst [vmem:[#allocation8 + $0x90] sm:$0xff] %v5287
    %5352 = vst [vmem:[#allocation8 + $0x98] sm:$0xff] %v5288
    %5353 = vst [vmem:[#allocation8 + $0xa0] sm:$0xff] %v5289
    %5354 = vst [vmem:[#allocation8 + $0xa8] sm:$0xff] %v5290
    %5355 = vst [vmem:[#allocation8 + $0xb0] sm:$0xff] %v5291
    %5356 = vst [vmem:[#allocation8 + $0xb8] sm:$0xff] %v5292
    %5357 = vst [vmem:[#allocation8 + $0xc0] sm:$0xff] %v5293
    %5358 = vst [vmem:[#allocation8 + $0xc8] sm:$0xff] %v5294
    %5359 = vst [vmem:[#allocation8 + $0xd0] sm:$0xff] %v5295
    %5360 = vst [vmem:[#allocation8 + $0xd8] sm:$0xff] %v5296
    %5361 = vst [vmem:[#allocation8 + $0xe0] sm:$0xff] %v5297
    %5362 = vst [vmem:[#allocation8 + $0xe8] sm:$0xff] %v5298
    %5363 = vst [vmem:[#allocation8 + $0xf0] sm:$0xff] %v5299
    %5364 = vst [vmem:[#allocation8 + $0xf8] sm:$0xff] %v5300
    %5365 = vst [vmem:[#allocation8 + $0x100] sm:$0xff] %v5301
    %5366 = vst [vmem:[#allocation8 + $0x108] sm:$0xff] %v5302
    %5367 = vst [vmem:[#allocation8 + $0x110] sm:$0xff] %v5303
    %5368 = vst [vmem:[#allocation8 + $0x118] sm:$0xff] %v5304
    %5369 = vst [vmem:[#allocation8 + $0x120] sm:$0xff] %v5305
    %5370 = vst [vmem:[#allocation8 + $0x128] sm:$0xff] %v5306
    %5371 = vst [vmem:[#allocation8 + $0x130] sm:$0xff] %v5307
    %5372 = vst [vmem:[#allocation8 + $0x138] sm:$0xff] %v5308
    %5373 = vst [vmem:[#allocation8 + $0x140] sm:$0xff] %v5309
    %5374 = vst [vmem:[#allocation8 + $0x148] sm:$0xff] %v5310
    %5375 = vst [vmem:[#allocation8 + $0x150] sm:$0xff] %v5311
    %5376 = vst [vmem:[#allocation8 + $0x158] sm:$0xff] %v5312
    %5377 = vst [vmem:[#allocation8 + $0x160] sm:$0xff] %v5313
    %5378 = vst [vmem:[#allocation8 + $0x168] sm:$0xff] %v5314
    %5379 = vst [vmem:[#allocation8 + $0x170] sm:$0xff] %v5315
    %5380 = vst [vmem:[#allocation8 + $0x178] sm:$0xff] %v5316
    %5381 = vst [vmem:[#allocation8 + $0x180] sm:$0xff] %v5317
    %5382 = vst [vmem:[#allocation8 + $0x188] sm:$0xff] %v5318
    %5383 = vst [vmem:[#allocation8 + $0x190] sm:$0xff] %v5319
    %5384 = vst [vmem:[#allocation8 + $0x198] sm:$0xff] %v5320
    %5385 = vst [vmem:[#allocation8 + $0x1a0] sm:$0xff] %v5321
    %5386 = vst [vmem:[#allocation8 + $0x1a8] sm:$0xff] %v5322
    %5387 = vst [vmem:[#allocation8 + $0x1b0] sm:$0xff] %v5323
    %5388 = vst [vmem:[#allocation8 + $0x1b8] sm:$0xff] %v5324
    %5389 = vst [vmem:[#allocation8 + $0x1c0] sm:$0xff] %v5325
    %5390 = vst [vmem:[#allocation8 + $0x1c8] sm:$0xff] %v5326
    %5391 = vst [vmem:[#allocation8 + $0x1d0] sm:$0xff] %v5327
    %5392 = vst [vmem:[#allocation8 + $0x1d8] sm:$0xff] %v5328
    %5393 = vst [vmem:[#allocation8 + $0x1e0] sm:$0xff] %v5329
    %5394 = vst [vmem:[#allocation8 + $0x1e8] sm:$0xff] %v5330
    %5395 = vst [vmem:[#allocation8 + $0x1f0] sm:$0xff] %v5331
    %5396 = vst [vmem:[#allocation8 + $0x1f8] sm:$0xff] %v5332
    // Predicated region
    $region42: #{tpu_custom_call.1} parent=1 // pred_check
      _
    $region43: #{tpu_custom_call.1} parent=1 // pred_check_branch
      %5398 = sbr.rel (0) target = $region45
    $region44: #{tpu_custom_call.1} parent=1 // pred_region
      %s5400 = ssub.s32 8192, 8192
      %5401 = vsyncadd [#allocation4], %s5400
      %s5402 = sshll.u32 [#allocation8], 4
      %s5403 = int_to_ptr.vmem [resolvable:$true] %s5402
      %5408 = dma.vmem_to_hbm [thread:$0]  %s5403, 8192, %s7, [#allocation4], 128, 128, 8
    $region45: #{tpu_custom_call.1} parent=1 // pred_fallthru
      _
    // Predicated region
    $region46: #{tpu_custom_call.1} parent=1 // pred_check
      _
    $region47: #{tpu_custom_call.1} parent=1 // pred_check_branch
      %5410 = sbr.rel (0) target = $region49
    $region48: #{tpu_custom_call.1} parent=1 // pred_region
      %5411 = dma.done [#allocation4], 8192
    $region49: #{tpu_custom_call.1} parent=1 // pred_fallthru
      _
    %5412 = vsyncpa [#allocation3], 1
    %5413 = vsyncpa [#allocation6], 1
    %5414 = vsyncpa [#allocation4], 1

</llo_original>
